<compile_context>
chip_gen: v7x
topology: tpu7x:2x2x1
jax: 0.10.0
libtpu: 0.0.40
codegen_flags: <defaults>
</compile_context>

<pallas_src>
import math
import numpy as np

import jax
import jax.numpy as jnp
from jax.experimental import pallas as pl
from jax.experimental.pallas import tpu as pltpu

# ----------------------------- configuration --------------------------------
B, T, D = 2, 16, 32                 # batch, time, encoder_dim
NUM_HEADS = 4
D_HEAD = D // NUM_HEADS
FF_EXPANSION = 4                    # feed_forward_expansion_factor
DFF = D * FF_EXPANSION
CONV_EXPANSION = 2                  # conv_expansion_factor
CONV_KERNEL = 7                     # conv_kernel_size (odd, like default 31)
PAD = (CONV_KERNEL - 1) // 2
LN_EPS = 1e-5
BN_EPS = 1e-5
SQRT_DIM = math.sqrt(D)             # RelativeMultiHeadAttention divides by sqrt(d_model)

BT = B * T                          # rows processed per kernel invocation
HBT = NUM_HEADS * BT                # attention-score column count (head, batch, time)

assert T & (T - 1) == 0 and B & (B - 1) == 0 and D_HEAD & (D_HEAD - 1) == 0
ROLL_STAGES = (1, 2, 4, 8)          # log2(T) masked-roll stages

# ------------------------- packed-slab row offsets ---------------------------
# wA  [96, 128]  : D->128 weight matrices (and head-masked positional RHS)
WA_FF1_W1, WA_FF2_W1, WA_PE_EXP = 0, 32, 64
# wB  [256, 32]  : 128->D weight matrices
WB_FF1_W2, WB_FF2_W2 = 0, 128
# wC  [352, 128] : DxD weight matrices (leading 32 lanes) + SegOnes [128,128]
WC_WQ, WC_WK, WC_WV, WC_WOUT = 0, 32, 64, 96
WC_PW1A, WC_PW1B, WC_PW2, WC_SEG = 128, 160, 192, 224
# mr  [352, 32]  : head row-mask for K/V replication + masked depthwise taps
MR_HEADMASK, MR_DW = 0, 128
# sm  [224, 128] : score-path masks (rel-shift bands, batch mask, stage masks)
SM_BAND_LE, SM_BAND_GE2, SM_BATCH, SM_STAGE = 0, 32, 64, 96
# vecs [24, 128] : all (1, width) gains / biases, one per row (leading lanes)
(V_FF1_LN_G, V_FF1_LN_B, V_FF1_B1, V_FF1_B2,
 V_ATT_LN_G, V_ATT_LN_B, V_BK, V_BV, V_QU, V_QV, V_BOUT,
 V_CV_LN_G, V_CV_LN_B, V_PW1A_B, V_PW1B_B, V_BN_SCALE, V_BN_SHIFT, V_PW2_B,
 V_FF2_LN_G, V_FF2_LN_B, V_FF2_B1, V_FF2_B2, V_FIN_LN_G, V_FIN_LN_B) = range(24)


# ------------------------------- the kernel ----------------------------------
def conformer_kernel(x_ref, wA_ref, wB_ref, wC_ref, mr_ref, sm_ref, vec_ref, o_ref):
    f32 = jnp.float32
    dnT = (((1,), (1,)), ((), ()))          # contract last dims (A @ B^T on MXU)

    def vec(row, width=D):                  # one packed bias/gain row
        return vec_ref[row:row + 1, 0:width]

    def layer_norm(x, g_row, b_row):
        mu = jnp.mean(x, axis=-1, keepdims=True)
        var = jnp.mean((x - mu) ** 2, axis=-1, keepdims=True)
        return (x - mu) * jax.lax.rsqrt(var + LN_EPS) * vec(g_row) + vec(b_row)

    def swish(x):
        return x * jax.nn.sigmoid(x)

    def feed_forward(x, g_row, b_row, w1_off, b1_row, w2_off, b2_row):
        h = layer_norm(x, g_row, b_row)
        h = jnp.dot(h, wA_ref[w1_off:w1_off + D, :],
                    preferred_element_type=f32) + vec(b1_row, DFF)
        h = swish(h)
        return jnp.dot(h, wB_ref[w2_off:w2_off + DFF, 0:D],
                       preferred_element_type=f32) + vec(b2_row)

    x = x_ref[...]                                              # [BT, D]

    # ---- feed-forward module #1 (half-step residual) ----
    x = x + 0.5 * feed_forward(x, V_FF1_LN_G, V_FF1_LN_B,
                               WA_FF1_W1, V_FF1_B1, WB_FF1_W2, V_FF1_B2)

    # ---- relative-position multi-head self-attention ----
    # Lane-dense layout: score row r = (batch, time) query, column
    # c = (head, batch', time') key, c = head*BT + batch'*T + time'.
    h = layer_norm(x, V_ATT_LN_G, V_ATT_LN_B)
    q = jnp.dot(h, wC_ref[WC_WQ:WC_WQ + D, 0:D], preferred_element_type=f32)
    k = jnp.dot(h, wC_ref[WC_WK:WC_WK + D, 0:D], preferred_element_type=f32) + vec(V_BK)
    v = jnp.dot(h, wC_ref[WC_WV:WC_WV + D, 0:D], preferred_element_type=f32) + vec(V_BV)

    head_mask = mr_ref[MR_HEADMASK:MR_HEADMASK + HBT, 0:D]       # [HBT, D]
    k_rep = jnp.concatenate([k] * NUM_HEADS, axis=0) * head_mask # [HBT, D]
    v_exp = jnp.concatenate([v] * NUM_HEADS, axis=0) * head_mask # [HBT, D]

    # q-bias is pre-folded into the u/v rows (V_QU, V_QV).
    content = jax.lax.dot_general(q + vec(V_QU), k_rep, dnT,
                                  preferred_element_type=f32)    # [BT, HBT]
    pos = jnp.dot(q + vec(V_QV), wA_ref[WA_PE_EXP:WA_PE_EXP + D, :],
                  preferred_element_type=f32)                    # [BT, HBT]

    # Transformer-XL relative shift (exact, O(T^2)): row (b,i) of `pos` is
    # rolled by (i+1) within each 16-lane time period.  Each log2(T) stage
    # uses two constant lane rolls; the second (shift s-32 mod 128) repairs
    # the columns where a plain 128-lane circular roll would cross a 32-lane
    # head-block boundary.  Stage masks (0 = keep, 1 = main roll, 2 = fix
    # roll) are host constants.
    r = pos
    for idx, s in enumerate(ROLL_STAGES):
        m = sm_ref[SM_STAGE + BT * idx:SM_STAGE + BT * (idx + 1), :]
        ra = pltpu.roll(r, shift=s, axis=1)
        rb = pltpu.roll(r, shift=s + HBT - BT, axis=1)           # = s - 32 (mod 128)
        r = jnp.where(m > 1.5, rb, jnp.where(m > 0.5, ra, r))
    r_up = pltpu.roll(r, shift=BT - 1, axis=0)                   # r_up[row] = r[row + 1]
    shifted = (sm_ref[SM_BAND_LE:SM_BAND_LE + BT, :] * r
               + sm_ref[SM_BAND_GE2:SM_BAND_GE2 + BT, :] * r_up)

    score = (content + shifted) * (1.0 / SQRT_DIM)
    score = score - jnp.max(score, axis=-1, keepdims=True)       # per-row constant: softmax-safe
    e = jnp.exp(score) * sm_ref[SM_BATCH:SM_BATCH + BT, :]       # zero cross-batch keys
    denom = jnp.dot(e, wC_ref[WC_SEG:WC_SEG + HBT, :],           # per-head-block sums (MXU)
                    preferred_element_type=f32)
    attn = e * pl.reciprocal(denom, approx=True)
    ctx = jnp.dot(attn, v_exp, preferred_element_type=f32)       # [BT, D]
    x = x + jnp.dot(ctx, wC_ref[WC_WOUT:WC_WOUT + D, 0:D],
                    preferred_element_type=f32) + vec(V_BOUT)

    # ---- conformer convolution module ----
    h = layer_norm(x, V_CV_LN_G, V_CV_LN_B)
    a = jnp.dot(h, wC_ref[WC_PW1A:WC_PW1A + D, 0:D], preferred_element_type=f32) + vec(V_PW1A_B)
    g = jnp.dot(h, wC_ref[WC_PW1B:WC_PW1B + D, 0:D], preferred_element_type=f32) + vec(V_PW1B_B)
    gate = a * jax.nn.sigmoid(g)                                 # GLU          [BT, D]
    # Depthwise conv over time: masked sublane rolls; zero-padding and batch
    # boundaries are pre-folded into the per-tap weights (mr slab).
    conv = gate * mr_ref[MR_DW + BT * PAD:MR_DW + BT * (PAD + 1), 0:D]
    for kk in range(CONV_KERNEL):
        off = kk - PAD
        if off == 0:
            continue
        g_sh = pltpu.roll(gate, shift=(-off) % BT, axis=0)       # gate[t + off]
        conv = conv + g_sh * mr_ref[MR_DW + BT * kk:MR_DW + BT * (kk + 1), 0:D]
    bn = conv * vec(V_BN_SCALE) + vec(V_BN_SHIFT)                # folded inference BatchNorm
    h = swish(bn)
    h = jnp.dot(h, wC_ref[WC_PW2:WC_PW2 + D, 0:D], preferred_element_type=f32) + vec(V_PW2_B)
    x = x + h

    # ---- feed-forward module #2 (half-step residual) ----
    x = x + 0.5 * feed_forward(x, V_FF2_LN_G, V_FF2_LN_B,
                               WA_FF2_W1, V_FF2_B1, WB_FF2_W2, V_FF2_B2)

    # ---- final LayerNorm ----
    o_ref[...] = layer_norm(x, V_FIN_LN_G, V_FIN_LN_B)


# ------------------------------ host wrapper ---------------------------------
def _prepare_operands(p):
    """Fold / fuse the PyTorch-style parameters into 6 packed kernel slabs."""
    f32 = np.float32
    rows = np.arange(BT)
    i_r = rows % T                      # query time
    b_r = rows // T                     # query batch
    cols = np.arange(HBT)
    h_c = cols // BT                    # key head
    bp_c = (cols % BT) // T             # key batch
    j_c = cols % T                      # key time
    d_idx = np.arange(D)
    head_d = d_idx // D_HEAD

    # --- wA [96, 128]: D->128 matmul RHS, plus head-masked positional RHS ---
    pe_proj = np.asarray(p["pos_emb"] @ p["wpos"], dtype=f32)              # [T, D]
    pe_exp = pe_proj.T[:, j_c] * (head_d[:, None] == h_c[None, :])          # [D, HBT]
    wA = np.zeros((96, HBT), f32)
    wA[WA_FF1_W1:WA_FF1_W1 + D] = np.asarray(p["ff1_w1"])
    wA[WA_FF2_W1:WA_FF2_W1 + D] = np.asarray(p["ff2_w1"])
    wA[WA_PE_EXP:WA_PE_EXP + D] = pe_exp

    # --- wB [256, 32]: 128->D matmul RHS ---
    wB = np.zeros((2 * DFF, D), f32)
    wB[WB_FF1_W2:WB_FF1_W2 + DFF] = np.asarray(p["ff1_w2"])
    wB[WB_FF2_W2:WB_FF2_W2 + DFF] = np.asarray(p["ff2_w2"])

    # --- wC [352, 128]: DxD weights (leading 32 lanes) + SegOnes block ---
    wC = np.zeros((352, HBT), f32)

    def put(r0, m):
        m = np.asarray(m, dtype=f32)
        wC[r0:r0 + m.shape[0], 0:m.shape[1]] = m

    put(WC_WQ, p["wq"]); put(WC_WK, p["wk"]); put(WC_WV, p["wv"]); put(WC_WOUT, p["wout"])
    put(WC_PW1A, p["pw1_w"][:, :D]); put(WC_PW1B, p["pw1_w"][:, D:]); put(WC_PW2, p["pw2_w"])
    seg_ones = (cols[:, None] // BT == cols[None, :] // BT).astype(f32)     # [HBT, HBT]
    put(WC_SEG, seg_ones)

    # --- mr [352, 32]: head row-mask + masked depthwise taps ---
    mr = np.zeros((HBT + CONV_KERNEL * BT, D), f32)
    mr[MR_HEADMASK:MR_HEADMASK + HBT] = (h_c[:, None] == head_d[None, :])
    dw = np.asarray(p["dw_w"], dtype=f32)                                    # [K, D]
    for kk in range(CONV_KERNEL):
        off = kk - PAD
        valid = ((i_r + off >= 0) & (i_r + off < T)).astype(f32)             # [BT]
        mr[MR_DW + BT * kk:MR_DW + BT * (kk + 1)] = valid[:, None] * dw[kk][None, :]

    # --- sm [224, 128]: score-path masks ---
    sm = np.zeros((224, HBT), f32)
    sm[SM_BAND_LE:SM_BAND_LE + BT] = (j_c[None, :] <= i_r[:, None])
    sm[SM_BAND_GE2:SM_BAND_GE2 + BT] = (j_c[None, :] >= i_r[:, None] + 2)
    sm[SM_BATCH:SM_BATCH + BT] = (bp_c[None, :] == b_r[:, None])
    for idx, s in enumerate(ROLL_STAGES):
        sel = (((i_r + 1) & s) != 0)[:, None]
        fix = ((bp_c == 0) & (j_c < s))[None, :]
        sm[SM_STAGE + BT * idx:SM_STAGE + BT * (idx + 1)] = \
            np.where(sel, np.where(fix, 2.0, 1.0), 0.0)

    # --- vecs [24, 128]: all gains / biases, one per row ---
    u_vec = np.asarray(p["u_bias"], dtype=f32).reshape(1, D)
    v_vec = np.asarray(p["v_bias"], dtype=f32).reshape(1, D)
    bq = np.asarray(p["bq"], dtype=f32)
    bn_scale = np.asarray(p["bn_g"], dtype=f32) / np.sqrt(np.asarray(p["bn_var"], dtype=f32) + BN_EPS)
    bn_shift = np.asarray(p["bn_b"], dtype=f32) - np.asarray(p["bn_mean"], dtype=f32) * bn_scale
    vec_rows = {
        V_FF1_LN_G: p["ff1_ln_g"], V_FF1_LN_B: p["ff1_ln_b"],
        V_FF1_B1: p["ff1_b1"], V_FF1_B2: p["ff1_b2"],
        V_ATT_LN_G: p["att_ln_g"], V_ATT_LN_B: p["att_ln_b"],
        V_BK: p["bk"], V_BV: p["bv"],
        V_QU: bq + u_vec, V_QV: bq + v_vec, V_BOUT: p["bout"],
        V_CV_LN_G: p["cv_ln_g"], V_CV_LN_B: p["cv_ln_b"],
        V_PW1A_B: p["pw1_b"][:, :D], V_PW1B_B: p["pw1_b"][:, D:],
        V_BN_SCALE: bn_scale, V_BN_SHIFT: bn_shift, V_PW2_B: p["pw2_b"],
        V_FF2_LN_G: p["ff2_ln_g"], V_FF2_LN_B: p["ff2_ln_b"],
        V_FF2_B1: p["ff2_b1"], V_FF2_B2: p["ff2_b2"],
        V_FIN_LN_G: p["fin_ln_g"], V_FIN_LN_B: p["fin_ln_b"],
    }
    vecs = np.zeros((24, HBT), f32)
    for r0, arr in vec_rows.items():
        arr = np.asarray(arr, dtype=f32).reshape(1, -1)
        vecs[r0:r0 + 1, 0:arr.shape[1]] = arr

    return tuple(jnp.asarray(a) for a in (wA, wB, wC, mr, sm, vecs))


def conformer_block(x, params):
    ops = _prepare_operands(params)
    x2 = x.reshape(BT, D).astype(jnp.float32)
    out2 = pl.pallas_call(
        conformer_kernel,
        out_shape=jax.ShapeDtypeStruct((BT, D), jnp.float32),
    )(x2, *ops)
    return out2.reshape(B, T, D)


# ------------------------- parameter / constant setup ------------------------
def sinusoidal_pe(length, d_model):
    pe = np.zeros((length, d_model), np.float32)
    position = np.arange(length, dtype=np.float32)[:, None]
    div_term = np.exp(np.arange(0, d_model, 2, dtype=np.float32)
                      * -(math.log(10000.0) / d_model))
    pe[:, 0::2] = np.sin(position * div_term)
    pe[:, 1::2] = np.cos(position * div_term)
    return pe


def init_params(key):
    ks = iter(jax.random.split(key, 32))

    def w(shape, scale=0.05):
        return jax.random.normal(next(ks), shape, jnp.float32) * scale

    ones = lambda n: jnp.ones((1, n), jnp.float32)
    zeros = lambda n: jnp.zeros((1, n), jnp.float32)
    return {
        "ff1_ln_g": ones(D), "ff1_ln_b": zeros(D),
        "ff1_w1": w((D, DFF)), "ff1_b1": w((1, DFF), 0.02),
        "ff1_w2": w((DFF, D)), "ff1_b2": w((1, D), 0.02),
        "att_ln_g": ones(D), "att_ln_b": zeros(D),
        "wq": w((D, D)), "bq": w((1, D), 0.02),
        "wk": w((D, D)), "bk": w((1, D), 0.02),
        "wv": w((D, D)), "bv": w((1, D), 0.02),
        "wpos": w((D, D)),
        "u_bias": w((NUM_HEADS, D_HEAD), 0.1),
        "v_bias": w((NUM_HEADS, D_HEAD), 0.1),
        "wout": w((D, D)), "bout": w((1, D), 0.02),
        "pos_emb": jnp.asarray(sinusoidal_pe(T, D)),
        "cv_ln_g": ones(D), "cv_ln_b": zeros(D),
        "pw1_w": w((D, CONV_EXPANSION * D)), "pw1_b": w((1, CONV_EXPANSION * D), 0.02),
        "dw_w": w((CONV_KERNEL, D), 0.1),
        "bn_g": ones(D), "bn_b": zeros(D), "bn_mean": zeros(D), "bn_var": ones(D),
        "pw2_w": w((D, D)), "pw2_b": w((1, D), 0.02),
        "ff2_ln_g": ones(D), "ff2_ln_b": zeros(D),
        "ff2_w1": w((D, DFF)), "ff2_b1": w((1, DFF), 0.02),
        "ff2_w2": w((DFF, D)), "ff2_b2": w((1, D), 0.02),
        "fin_ln_g": ones(D), "fin_ln_b": zeros(D),
    }


# ------------------------- pure-JAX reference (for checking) -----------------
def _ln_ref(x, g, b):
    mu = jnp.mean(x, axis=-1, keepdims=True)
    var = jnp.mean((x - mu) ** 2, axis=-1, keepdims=True)
    return (x - mu) / jnp.sqrt(var + LN_EPS) * g + b


def _ff_ref(x, g, b, w1, b1, w2, b2):
    h = _ln_ref(x, g, b)
    h = h @ w1 + b1
    h = h * jax.nn.sigmoid(h)
    return h @ w2 + b2


def _rel_shift_ref(pos_score):
    bb, hh, l1, l2 = pos_score.shape
    padded = jnp.concatenate(
        [jnp.zeros((bb, hh, l1, 1), pos_score.dtype), pos_score], axis=-1)
    padded = padded.reshape(bb, hh, l2 + 1, l1)
    return padded[:, :, 1:].reshape(bb, hh, l1, l2)


def _mhsa_ref(x, p):
    h = _ln_ref(x, p["att_ln_g"], p["att_ln_b"])
    q = (h @ p["wq"] + p["bq"]).reshape(B, T, NUM_HEADS, D_HEAD)
    k = (h @ p["wk"] + p["bk"]).reshape(B, T, NUM_HEADS, D_HEAD)
    v = (h @ p["wv"] + p["bv"]).reshape(B, T, NUM_HEADS, D_HEAD)
    pe = (p["pos_emb"] @ p["wpos"]).reshape(T, NUM_HEADS, D_HEAD)
    content = jnp.einsum("bihd,bjhd->bhij", q + p["u_bias"], k)
    pos = jnp.einsum("bihd,jhd->bhij", q + p["v_bias"], pe)
    score = (content + _rel_shift_ref(pos)) / SQRT_DIM
    attn = jax.nn.softmax(score, axis=-1)
    ctx = jnp.einsum("bhij,bjhd->bihd", attn, v).reshape(B, T, D)
    return ctx @ p["wout"] + p["bout"]


def _conv_ref(x, p):
    h = _ln_ref(x, p["cv_ln_g"], p["cv_ln_b"])
    h = h @ p["pw1_w"] + p["pw1_b"]
    gate = h[..., :D] * jax.nn.sigmoid(h[..., D:])
    gpad = jnp.pad(gate, ((0, 0), (PAD, PAD), (0, 0)))
    conv = sum(gpad[:, kk:kk + T, :] * p["dw_w"][kk] for kk in range(CONV_KERNEL))
    bn = (conv - p["bn_mean"]) / jnp.sqrt(p["bn_var"] + BN_EPS) * p["bn_g"] + p["bn_b"]
    h = bn * jax.nn.sigmoid(bn)
    return h @ p["pw2_w"] + p["pw2_b"]


def reference_forward(x, p):
    x = x + 0.5 * _ff_ref(x, p["ff1_ln_g"], p["ff1_ln_b"],
                          p["ff1_w1"], p["ff1_b1"], p["ff1_w2"], p["ff1_b2"])
    x = x + _mhsa_ref(x, p)
    x = x + _conv_ref(x, p)
    x = x + 0.5 * _ff_ref(x, p["ff2_ln_g"], p["ff2_ln_b"],
                          p["ff2_w1"], p["ff2_b1"], p["ff2_w2"], p["ff2_b2"])
    return _ln_ref(x, p["fin_ln_g"], p["fin_ln_b"])


# ----------------------------------- main -------------------------------------
if __name__ == "__main__":
    key = jax.random.PRNGKey(0)
    kx, kp = jax.random.split(key)
    params = init_params(kp)
    x = jax.random.normal(kx, (B, T, D), jnp.float32)

    out = conformer_block(x, params)
    out = jax.block_until_ready(out)
    assert out.shape == (B, T, D)

    ref = reference_forward(x, params)
    np.testing.assert_allclose(np.asarray(out), np.asarray(ref), rtol=5e-3, atol=5e-3)
    print("KERNEL_OK")
</pallas_src>

<mosaic_0001>
module attributes {stable_mosaic.version = 11 : i64} {
  func.func @conformer_kernel(%arg0: memref<32x32xf32, #tpu.memory_space<vmem>>, %arg1: memref<96x128xf32, #tpu.memory_space<vmem>>, %arg2: memref<256x32xf32, #tpu.memory_space<vmem>>, %arg3: memref<352x128xf32, #tpu.memory_space<vmem>>, %arg4: memref<352x32xf32, #tpu.memory_space<vmem>>, %arg5: memref<224x128xf32, #tpu.memory_space<vmem>>, %arg6: memref<24x128xf32, #tpu.memory_space<vmem>>, %arg7: memref<32x32xf32, #tpu.memory_space<vmem>>) attributes {dimension_semantics = [], scalar_prefetch = 0 : i64, scratch_operands = 0 : i64, tpu.core_type = #tpu.core_type<tc>} {
    %c0 = arith.constant 0 : index
    %c0_0 = arith.constant 0 : index
    %0 = vector.load %arg0[%c0, %c0_0] : memref<32x32xf32, #tpu.memory_space<vmem>>, vector<32x32xf32>
    %cst = arith.constant dense<0.000000e+00> : vector<32xf32>
    %1 = vector.multi_reduction <add>, %0, %cst [1] : vector<32x32xf32> to vector<32xf32>
    %2 = vector.shape_cast %1 : vector<32xf32> to vector<32x1xf32>
    %cst_1 = arith.constant 3.200000e+01 : f32
    %3 = vector.broadcast %cst_1 : f32 to vector<32x1xf32>
    %4 = arith.divf %2, %3 : vector<32x1xf32>
    %5 = vector.broadcast %4 : vector<32x1xf32> to vector<32x32xf32>
    %6 = arith.subf %0, %5 : vector<32x32xf32>
    %7 = arith.mulf %6, %6 : vector<32x32xf32>
    %cst_2 = arith.constant dense<0.000000e+00> : vector<32xf32>
    %8 = vector.multi_reduction <add>, %7, %cst_2 [1] : vector<32x32xf32> to vector<32xf32>
    %9 = vector.shape_cast %8 : vector<32xf32> to vector<32x1xf32>
    %cst_3 = arith.constant 3.200000e+01 : f32
    %10 = vector.broadcast %cst_3 : f32 to vector<32x1xf32>
    %11 = arith.divf %9, %10 : vector<32x1xf32>
    %12 = vector.broadcast %4 : vector<32x1xf32> to vector<32x32xf32>
    %13 = arith.subf %0, %12 : vector<32x32xf32>
    %cst_4 = arith.constant 9.99999974E-6 : f32
    %14 = vector.broadcast %cst_4 : f32 to vector<32x1xf32>
    %15 = arith.addf %11, %14 : vector<32x1xf32>
    %16 = math.rsqrt %15 : vector<32x1xf32>
    %17 = vector.broadcast %16 : vector<32x1xf32> to vector<32x32xf32>
    %18 = arith.mulf %13, %17 : vector<32x32xf32>
    %c0_5 = arith.constant 0 : index
    %c0_6 = arith.constant 0 : index
    %19 = vector.load %arg6[%c0_5, %c0_6] : memref<24x128xf32, #tpu.memory_space<vmem>>, vector<1x32xf32>
    %20 = vector.broadcast %19 : vector<1x32xf32> to vector<32x32xf32>
    %21 = arith.mulf %18, %20 : vector<32x32xf32>
    %c1 = arith.constant 1 : index
    %c0_7 = arith.constant 0 : index
    %22 = vector.load %arg6[%c1, %c0_7] : memref<24x128xf32, #tpu.memory_space<vmem>>, vector<1x32xf32>
    %23 = vector.broadcast %22 : vector<1x32xf32> to vector<32x32xf32>
    %24 = arith.addf %21, %23 : vector<32x32xf32>
    %c0_8 = arith.constant 0 : index
    %c0_9 = arith.constant 0 : index
    %25 = vector.load %arg1[%c0_8, %c0_9] : memref<96x128xf32, #tpu.memory_space<vmem>>, vector<32x128xf32>
    %cst_10 = arith.constant dense<0.000000e+00> : vector<32x128xf32>
    %26 = tpu.matmul %24, %25, %cst_10 {dimension_numbers = #tpu.dot_dimension_numbers<[1], [0], [0], [1], [0, 0, 1, 1], [], []>} : vector<32x32xf32>, vector<32x128xf32>, vector<32x128xf32> -> vector<32x128xf32>
    %c2 = arith.constant 2 : index
    %c0_11 = arith.constant 0 : index
    %27 = vector.load %arg6[%c2, %c0_11] : memref<24x128xf32, #tpu.memory_space<vmem>>, vector<1x128xf32>
    %28 = vector.broadcast %27 : vector<1x128xf32> to vector<32x128xf32>
    %29 = arith.addf %26, %28 : vector<32x128xf32>
    %30 = arith.negf %29 : vector<32x128xf32>
    %31 = math.exp %30 : vector<32x128xf32>
    %cst_12 = arith.constant 1.000000e+00 : f32
    %32 = vector.broadcast %cst_12 : f32 to vector<32x128xf32>
    %33 = arith.addf %32, %31 : vector<32x128xf32>
    %34 = arith.divf %32, %33 : vector<32x128xf32>
    %35 = arith.mulf %29, %34 : vector<32x128xf32>
    %c0_13 = arith.constant 0 : index
    %c0_14 = arith.constant 0 : index
    %36 = vector.load %arg2[%c0_13, %c0_14] : memref<256x32xf32, #tpu.memory_space<vmem>>, vector<128x32xf32>
    %cst_15 = arith.constant dense<0.000000e+00> : vector<32x32xf32>
    %37 = tpu.matmul %35, %36, %cst_15 {dimension_numbers = #tpu.dot_dimension_numbers<[1], [0], [0], [1], [0, 0, 1, 1], [], []>} : vector<32x128xf32>, vector<128x32xf32>, vector<32x32xf32> -> vector<32x32xf32>
    %c3 = arith.constant 3 : index
    %c0_16 = arith.constant 0 : index
    %38 = vector.load %arg6[%c3, %c0_16] : memref<24x128xf32, #tpu.memory_space<vmem>>, vector<1x32xf32>
    %39 = vector.broadcast %38 : vector<1x32xf32> to vector<32x32xf32>
    %40 = arith.addf %37, %39 : vector<32x32xf32>
    %cst_17 = arith.constant 5.000000e-01 : f32
    %41 = vector.broadcast %cst_17 : f32 to vector<32x32xf32>
    %42 = arith.mulf %41, %40 : vector<32x32xf32>
    %43 = arith.addf %0, %42 : vector<32x32xf32>
    %cst_18 = arith.constant dense<0.000000e+00> : vector<32xf32>
    %44 = vector.multi_reduction <add>, %43, %cst_18 [1] : vector<32x32xf32> to vector<32xf32>
    %45 = vector.shape_cast %44 : vector<32xf32> to vector<32x1xf32>
    %cst_19 = arith.constant 3.200000e+01 : f32
    %46 = vector.broadcast %cst_19 : f32 to vector<32x1xf32>
    %47 = arith.divf %45, %46 : vector<32x1xf32>
    %48 = vector.broadcast %47 : vector<32x1xf32> to vector<32x32xf32>
    %49 = arith.subf %43, %48 : vector<32x32xf32>
    %50 = arith.mulf %49, %49 : vector<32x32xf32>
    %cst_20 = arith.constant dense<0.000000e+00> : vector<32xf32>
    %51 = vector.multi_reduction <add>, %50, %cst_20 [1] : vector<32x32xf32> to vector<32xf32>
    %52 = vector.shape_cast %51 : vector<32xf32> to vector<32x1xf32>
    %cst_21 = arith.constant 3.200000e+01 : f32
    %53 = vector.broadcast %cst_21 : f32 to vector<32x1xf32>
    %54 = arith.divf %52, %53 : vector<32x1xf32>
    %55 = vector.broadcast %47 : vector<32x1xf32> to vector<32x32xf32>
    %56 = arith.subf %43, %55 : vector<32x32xf32>
    %cst_22 = arith.constant 9.99999974E-6 : f32
    %57 = vector.broadcast %cst_22 : f32 to vector<32x1xf32>
    %58 = arith.addf %54, %57 : vector<32x1xf32>
    %59 = math.rsqrt %58 : vector<32x1xf32>
    %60 = vector.broadcast %59 : vector<32x1xf32> to vector<32x32xf32>
    %61 = arith.mulf %56, %60 : vector<32x32xf32>
    %c4 = arith.constant 4 : index
    %c0_23 = arith.constant 0 : index
    %62 = vector.load %arg6[%c4, %c0_23] : memref<24x128xf32, #tpu.memory_space<vmem>>, vector<1x32xf32>
    %63 = vector.broadcast %62 : vector<1x32xf32> to vector<32x32xf32>
    %64 = arith.mulf %61, %63 : vector<32x32xf32>
    %c5 = arith.constant 5 : index
    %c0_24 = arith.constant 0 : index
    %65 = vector.load %arg6[%c5, %c0_24] : memref<24x128xf32, #tpu.memory_space<vmem>>, vector<1x32xf32>
    %66 = vector.broadcast %65 : vector<1x32xf32> to vector<32x32xf32>
    %67 = arith.addf %64, %66 : vector<32x32xf32>
    %c0_25 = arith.constant 0 : index
    %c0_26 = arith.constant 0 : index
    %68 = vector.load %arg3[%c0_25, %c0_26] : memref<352x128xf32, #tpu.memory_space<vmem>>, vector<32x32xf32>
    %cst_27 = arith.constant dense<0.000000e+00> : vector<32x32xf32>
    %69 = tpu.matmul %67, %68, %cst_27 {dimension_numbers = #tpu.dot_dimension_numbers<[1], [0], [0], [1], [0, 0, 1, 1], [], []>} : vector<32x32xf32>, vector<32x32xf32>, vector<32x32xf32> -> vector<32x32xf32>
    %c32 = arith.constant 32 : index
    %c0_28 = arith.constant 0 : index
    %70 = vector.load %arg3[%c32, %c0_28] : memref<352x128xf32, #tpu.memory_space<vmem>>, vector<32x32xf32>
    %cst_29 = arith.constant dense<0.000000e+00> : vector<32x32xf32>
    %71 = tpu.matmul %67, %70, %cst_29 {dimension_numbers = #tpu.dot_dimension_numbers<[1], [0], [0], [1], [0, 0, 1, 1], [], []>} : vector<32x32xf32>, vector<32x32xf32>, vector<32x32xf32> -> vector<32x32xf32>
    %c6 = arith.constant 6 : index
    %c0_30 = arith.constant 0 : index
    %72 = vector.load %arg6[%c6, %c0_30] : memref<24x128xf32, #tpu.memory_space<vmem>>, vector<1x32xf32>
    %73 = vector.broadcast %72 : vector<1x32xf32> to vector<32x32xf32>
    %74 = arith.addf %71, %73 : vector<32x32xf32>
    %c64 = arith.constant 64 : index
    %c0_31 = arith.constant 0 : index
    %75 = vector.load %arg3[%c64, %c0_31] : memref<352x128xf32, #tpu.memory_space<vmem>>, vector<32x32xf32>
    %cst_32 = arith.constant dense<0.000000e+00> : vector<32x32xf32>
    %76 = tpu.matmul %67, %75, %cst_32 {dimension_numbers = #tpu.dot_dimension_numbers<[1], [0], [0], [1], [0, 0, 1, 1], [], []>} : vector<32x32xf32>, vector<32x32xf32>, vector<32x32xf32> -> vector<32x32xf32>
    %c7 = arith.constant 7 : index
    %c0_33 = arith.constant 0 : index
    %77 = vector.load %arg6[%c7, %c0_33] : memref<24x128xf32, #tpu.memory_space<vmem>>, vector<1x32xf32>
    %78 = vector.broadcast %77 : vector<1x32xf32> to vector<32x32xf32>
    %79 = arith.addf %76, %78 : vector<32x32xf32>
    %c0_34 = arith.constant 0 : index
    %c0_35 = arith.constant 0 : index
    %80 = vector.load %arg4[%c0_34, %c0_35] : memref<352x32xf32, #tpu.memory_space<vmem>>, vector<128x32xf32>
    %81 = tpu.concatenate %74, %74, %74, %74 in 0 : vector<32x32xf32>, vector<32x32xf32>, vector<32x32xf32>, vector<32x32xf32> -> vector<128x32xf32>
    %82 = arith.mulf %81, %80 : vector<128x32xf32>
    %83 = tpu.concatenate %79, %79, %79, %79 in 0 : vector<32x32xf32>, vector<32x32xf32>, vector<32x32xf32>, vector<32x32xf32> -> vector<128x32xf32>
    %84 = arith.mulf %83, %80 : vector<128x32xf32>
    %c8 = arith.constant 8 : index
    %c0_36 = arith.constant 0 : index
    %85 = vector.load %arg6[%c8, %c0_36] : memref<24x128xf32, #tpu.memory_space<vmem>>, vector<1x32xf32>
    %86 = vector.broadcast %85 : vector<1x32xf32> to vector<32x32xf32>
    %87 = arith.addf %69, %86 : vector<32x32xf32>
    %cst_37 = arith.constant dense<0.000000e+00> : vector<32x128xf32>
    %88 = tpu.matmul %87, %82, %cst_37 {dimension_numbers = #tpu.dot_dimension_numbers<[1], [1], [0], [0], [0, 0, 1, 0], [], []>} : vector<32x32xf32>, vector<128x32xf32>, vector<32x128xf32> -> vector<32x128xf32>
    %c9 = arith.constant 9 : index
    %c0_38 = arith.constant 0 : index
    %89 = vector.load %arg6[%c9, %c0_38] : memref<24x128xf32, #tpu.memory_space<vmem>>, vector<1x32xf32>
    %90 = vector.broadcast %89 : vector<1x32xf32> to vector<32x32xf32>
    %91 = arith.addf %69, %90 : vector<32x32xf32>
    %c64_39 = arith.constant 64 : index
    %c0_40 = arith.constant 0 : index
    %92 = vector.load %arg1[%c64_39, %c0_40] : memref<96x128xf32, #tpu.memory_space<vmem>>, vector<32x128xf32>
    %cst_41 = arith.constant dense<0.000000e+00> : vector<32x128xf32>
    %93 = tpu.matmul %91, %92, %cst_41 {dimension_numbers = #tpu.dot_dimension_numbers<[1], [0], [0], [1], [0, 0, 1, 1], [], []>} : vector<32x32xf32>, vector<32x128xf32>, vector<32x128xf32> -> vector<32x128xf32>
    %c96 = arith.constant 96 : index
    %c0_42 = arith.constant 0 : index
    %94 = vector.load %arg5[%c96, %c0_42] : memref<224x128xf32, #tpu.memory_space<vmem>>, vector<32x128xf32>
    %c1_i32 = arith.constant 1 : i32
    %95 = tpu.dynamic_rotate %93 by %c1_i32 dim 1 : vector<32x128xf32>, i32 -> vector<32x128xf32>
    %c97_i32 = arith.constant 97 : i32
    %96 = tpu.dynamic_rotate %93 by %c97_i32 dim 1 : vector<32x128xf32>, i32 -> vector<32x128xf32>
    %cst_43 = arith.constant 1.500000e+00 : f32
    %97 = vector.broadcast %cst_43 : f32 to vector<32x128xf32>
    %98 = arith.cmpf ogt, %94, %97 : vector<32x128xf32>
    %cst_44 = arith.constant 5.000000e-01 : f32
    %99 = vector.broadcast %cst_44 : f32 to vector<32x128xf32>
    %100 = arith.cmpf ogt, %94, %99 : vector<32x128xf32>
    %101 = arith.select %100, %95, %93 : vector<32x128xi1>, vector<32x128xf32>
    %102 = arith.select %98, %96, %101 : vector<32x128xi1>, vector<32x128xf32>
    %c128 = arith.constant 128 : index
    %c0_45 = arith.constant 0 : index
    %103 = vector.load %arg5[%c128, %c0_45] : memref<224x128xf32, #tpu.memory_space<vmem>>, vector<32x128xf32>
    %c2_i32 = arith.constant 2 : i32
    %104 = tpu.dynamic_rotate %102 by %c2_i32 dim 1 : vector<32x128xf32>, i32 -> vector<32x128xf32>
    %c98_i32 = arith.constant 98 : i32
    %105 = tpu.dynamic_rotate %102 by %c98_i32 dim 1 : vector<32x128xf32>, i32 -> vector<32x128xf32>
    %cst_46 = arith.constant 1.500000e+00 : f32
    %106 = vector.broadcast %cst_46 : f32 to vector<32x128xf32>
    %107 = arith.cmpf ogt, %103, %106 : vector<32x128xf32>
    %cst_47 = arith.constant 5.000000e-01 : f32
    %108 = vector.broadcast %cst_47 : f32 to vector<32x128xf32>
    %109 = arith.cmpf ogt, %103, %108 : vector<32x128xf32>
    %110 = arith.select %109, %104, %102 : vector<32x128xi1>, vector<32x128xf32>
    %111 = arith.select %107, %105, %110 : vector<32x128xi1>, vector<32x128xf32>
    %c160 = arith.constant 160 : index
    %c0_48 = arith.constant 0 : index
    %112 = vector.load %arg5[%c160, %c0_48] : memref<224x128xf32, #tpu.memory_space<vmem>>, vector<32x128xf32>
    %c4_i32 = arith.constant 4 : i32
    %113 = tpu.dynamic_rotate %111 by %c4_i32 dim 1 : vector<32x128xf32>, i32 -> vector<32x128xf32>
    %c100_i32 = arith.constant 100 : i32
    %114 = tpu.dynamic_rotate %111 by %c100_i32 dim 1 : vector<32x128xf32>, i32 -> vector<32x128xf32>
    %cst_49 = arith.constant 1.500000e+00 : f32
    %115 = vector.broadcast %cst_49 : f32 to vector<32x128xf32>
    %116 = arith.cmpf ogt, %112, %115 : vector<32x128xf32>
    %cst_50 = arith.constant 5.000000e-01 : f32
    %117 = vector.broadcast %cst_50 : f32 to vector<32x128xf32>
    %118 = arith.cmpf ogt, %112, %117 : vector<32x128xf32>
    %119 = arith.select %118, %113, %111 : vector<32x128xi1>, vector<32x128xf32>
    %120 = arith.select %116, %114, %119 : vector<32x128xi1>, vector<32x128xf32>
    %c192 = arith.constant 192 : index
    %c0_51 = arith.constant 0 : index
    %121 = vector.load %arg5[%c192, %c0_51] : memref<224x128xf32, #tpu.memory_space<vmem>>, vector<32x128xf32>
    %c8_i32 = arith.constant 8 : i32
    %122 = tpu.dynamic_rotate %120 by %c8_i32 dim 1 : vector<32x128xf32>, i32 -> vector<32x128xf32>
    %c104_i32 = arith.constant 104 : i32
    %123 = tpu.dynamic_rotate %120 by %c104_i32 dim 1 : vector<32x128xf32>, i32 -> vector<32x128xf32>
    %cst_52 = arith.constant 1.500000e+00 : f32
    %124 = vector.broadcast %cst_52 : f32 to vector<32x128xf32>
    %125 = arith.cmpf ogt, %121, %124 : vector<32x128xf32>
    %cst_53 = arith.constant 5.000000e-01 : f32
    %126 = vector.broadcast %cst_53 : f32 to vector<32x128xf32>
    %127 = arith.cmpf ogt, %121, %126 : vector<32x128xf32>
    %128 = arith.select %127, %122, %120 : vector<32x128xi1>, vector<32x128xf32>
    %129 = arith.select %125, %123, %128 : vector<32x128xi1>, vector<32x128xf32>
    %c31_i32 = arith.constant 31 : i32
    %130 = tpu.dynamic_rotate %129 by %c31_i32 dim 0 : vector<32x128xf32>, i32 -> vector<32x128xf32>
    %c0_54 = arith.constant 0 : index
    %c0_55 = arith.constant 0 : index
    %131 = vector.load %arg5[%c0_54, %c0_55] : memref<224x128xf32, #tpu.memory_space<vmem>>, vector<32x128xf32>
    %132 = arith.mulf %131, %129 : vector<32x128xf32>
    %c32_56 = arith.constant 32 : index
    %c0_57 = arith.constant 0 : index
    %133 = vector.load %arg5[%c32_56, %c0_57] : memref<224x128xf32, #tpu.memory_space<vmem>>, vector<32x128xf32>
    %134 = arith.mulf %133, %130 : vector<32x128xf32>
    %135 = arith.addf %132, %134 : vector<32x128xf32>
    %136 = arith.addf %88, %135 : vector<32x128xf32>
    %cst_58 = arith.constant 0.176776692 : f32
    %137 = vector.broadcast %cst_58 : f32 to vector<32x128xf32>
    %138 = arith.mulf %136, %137 : vector<32x128xf32>
    %cst_59 = arith.constant dense<0xFF800000> : vector<32xf32>
    %139 = vector.multi_reduction <maximumf>, %138, %cst_59 [1] : vector<32x128xf32> to vector<32xf32>
    %140 = vector.shape_cast %139 : vector<32xf32> to vector<32x1xf32>
    %141 = vector.broadcast %140 : vector<32x1xf32> to vector<32x128xf32>
    %142 = arith.subf %138, %141 : vector<32x128xf32>
    %143 = math.exp %142 : vector<32x128xf32>
    %c64_60 = arith.constant 64 : index
    %c0_61 = arith.constant 0 : index
    %144 = vector.load %arg5[%c64_60, %c0_61] : memref<224x128xf32, #tpu.memory_space<vmem>>, vector<32x128xf32>
    %145 = arith.mulf %143, %144 : vector<32x128xf32>
    %c224 = arith.constant 224 : index
    %c0_62 = arith.constant 0 : index
    %146 = vector.load %arg3[%c224, %c0_62] : memref<352x128xf32, #tpu.memory_space<vmem>>, vector<128x128xf32>
    %cst_63 = arith.constant dense<0.000000e+00> : vector<32x128xf32>
    %147 = tpu.matmul %145, %146, %cst_63 {dimension_numbers = #tpu.dot_dimension_numbers<[1], [0], [0], [1], [0, 0, 1, 1], [], []>} : vector<32x128xf32>, vector<128x128xf32>, vector<32x128xf32> -> vector<32x128xf32>
    %148 = tpu.reciprocal %147 {approx = true} : vector<32x128xf32> -> vector<32x128xf32>
    %149 = arith.mulf %145, %148 : vector<32x128xf32>
    %cst_64 = arith.constant dense<0.000000e+00> : vector<32x32xf32>
    %150 = tpu.matmul %149, %84, %cst_64 {dimension_numbers = #tpu.dot_dimension_numbers<[1], [0], [0], [1], [0, 0, 1, 1], [], []>} : vector<32x128xf32>, vector<128x32xf32>, vector<32x32xf32> -> vector<32x32xf32>
    %c96_65 = arith.constant 96 : index
    %c0_66 = arith.constant 0 : index
    %151 = vector.load %arg3[%c96_65, %c0_66] : memref<352x128xf32, #tpu.memory_space<vmem>>, vector<32x32xf32>
    %cst_67 = arith.constant dense<0.000000e+00> : vector<32x32xf32>
    %152 = tpu.matmul %150, %151, %cst_67 {dimension_numbers = #tpu.dot_dimension_numbers<[1], [0], [0], [1], [0, 0, 1, 1], [], []>} : vector<32x32xf32>, vector<32x32xf32>, vector<32x32xf32> -> vector<32x32xf32>
    %153 = arith.addf %43, %152 : vector<32x32xf32>
    %c10 = arith.constant 10 : index
    %c0_68 = arith.constant 0 : index
    %154 = vector.load %arg6[%c10, %c0_68] : memref<24x128xf32, #tpu.memory_space<vmem>>, vector<1x32xf32>
    %155 = vector.broadcast %154 : vector<1x32xf32> to vector<32x32xf32>
    %156 = arith.addf %153, %155 : vector<32x32xf32>
    %cst_69 = arith.constant dense<0.000000e+00> : vector<32xf32>
    %157 = vector.multi_reduction <add>, %156, %cst_69 [1] : vector<32x32xf32> to vector<32xf32>
    %158 = vector.shape_cast %157 : vector<32xf32> to vector<32x1xf32>
    %cst_70 = arith.constant 3.200000e+01 : f32
    %159 = vector.broadcast %cst_70 : f32 to vector<32x1xf32>
    %160 = arith.divf %158, %159 : vector<32x1xf32>
    %161 = vector.broadcast %160 : vector<32x1xf32> to vector<32x32xf32>
    %162 = arith.subf %156, %161 : vector<32x32xf32>
    %163 = arith.mulf %162, %162 : vector<32x32xf32>
    %cst_71 = arith.constant dense<0.000000e+00> : vector<32xf32>
    %164 = vector.multi_reduction <add>, %163, %cst_71 [1] : vector<32x32xf32> to vector<32xf32>
    %165 = vector.shape_cast %164 : vector<32xf32> to vector<32x1xf32>
    %cst_72 = arith.constant 3.200000e+01 : f32
    %166 = vector.broadcast %cst_72 : f32 to vector<32x1xf32>
    %167 = arith.divf %165, %166 : vector<32x1xf32>
    %168 = vector.broadcast %160 : vector<32x1xf32> to vector<32x32xf32>
    %169 = arith.subf %156, %168 : vector<32x32xf32>
    %cst_73 = arith.constant 9.99999974E-6 : f32
    %170 = vector.broadcast %cst_73 : f32 to vector<32x1xf32>
    %171 = arith.addf %167, %170 : vector<32x1xf32>
    %172 = math.rsqrt %171 : vector<32x1xf32>
    %173 = vector.broadcast %172 : vector<32x1xf32> to vector<32x32xf32>
    %174 = arith.mulf %169, %173 : vector<32x32xf32>
    %c11 = arith.constant 11 : index
    %c0_74 = arith.constant 0 : index
    %175 = vector.load %arg6[%c11, %c0_74] : memref<24x128xf32, #tpu.memory_space<vmem>>, vector<1x32xf32>
    %176 = vector.broadcast %175 : vector<1x32xf32> to vector<32x32xf32>
    %177 = arith.mulf %174, %176 : vector<32x32xf32>
    %c12 = arith.constant 12 : index
    %c0_75 = arith.constant 0 : index
    %178 = vector.load %arg6[%c12, %c0_75] : memref<24x128xf32, #tpu.memory_space<vmem>>, vector<1x32xf32>
    %179 = vector.broadcast %178 : vector<1x32xf32> to vector<32x32xf32>
    %180 = arith.addf %177, %179 : vector<32x32xf32>
    %c128_76 = arith.constant 128 : index
    %c0_77 = arith.constant 0 : index
    %181 = vector.load %arg3[%c128_76, %c0_77] : memref<352x128xf32, #tpu.memory_space<vmem>>, vector<32x32xf32>
    %cst_78 = arith.constant dense<0.000000e+00> : vector<32x32xf32>
    %182 = tpu.matmul %180, %181, %cst_78 {dimension_numbers = #tpu.dot_dimension_numbers<[1], [0], [0], [1], [0, 0, 1, 1], [], []>} : vector<32x32xf32>, vector<32x32xf32>, vector<32x32xf32> -> vector<32x32xf32>
    %c13 = arith.constant 13 : index
    %c0_79 = arith.constant 0 : index
    %183 = vector.load %arg6[%c13, %c0_79] : memref<24x128xf32, #tpu.memory_space<vmem>>, vector<1x32xf32>
    %184 = vector.broadcast %183 : vector<1x32xf32> to vector<32x32xf32>
    %185 = arith.addf %182, %184 : vector<32x32xf32>
    %c160_80 = arith.constant 160 : index
    %c0_81 = arith.constant 0 : index
    %186 = vector.load %arg3[%c160_80, %c0_81] : memref<352x128xf32, #tpu.memory_space<vmem>>, vector<32x32xf32>
    %cst_82 = arith.constant dense<0.000000e+00> : vector<32x32xf32>
    %187 = tpu.matmul %180, %186, %cst_82 {dimension_numbers = #tpu.dot_dimension_numbers<[1], [0], [0], [1], [0, 0, 1, 1], [], []>} : vector<32x32xf32>, vector<32x32xf32>, vector<32x32xf32> -> vector<32x32xf32>
    %c14 = arith.constant 14 : index
    %c0_83 = arith.constant 0 : index
    %188 = vector.load %arg6[%c14, %c0_83] : memref<24x128xf32, #tpu.memory_space<vmem>>, vector<1x32xf32>
    %189 = vector.broadcast %188 : vector<1x32xf32> to vector<32x32xf32>
    %190 = arith.addf %187, %189 : vector<32x32xf32>
    %191 = arith.negf %190 : vector<32x32xf32>
    %192 = math.exp %191 : vector<32x32xf32>
    %cst_84 = arith.constant 1.000000e+00 : f32
    %193 = vector.broadcast %cst_84 : f32 to vector<32x32xf32>
    %194 = arith.addf %193, %192 : vector<32x32xf32>
    %195 = arith.divf %193, %194 : vector<32x32xf32>
    %196 = arith.mulf %185, %195 : vector<32x32xf32>
    %c224_85 = arith.constant 224 : index
    %c0_86 = arith.constant 0 : index
    %197 = vector.load %arg4[%c224_85, %c0_86] : memref<352x32xf32, #tpu.memory_space<vmem>>, vector<32x32xf32>
    %198 = arith.mulf %196, %197 : vector<32x32xf32>
    %c3_i32 = arith.constant 3 : i32
    %199 = tpu.dynamic_rotate %196 by %c3_i32 dim 0 : vector<32x32xf32>, i32 -> vector<32x32xf32>
    %c128_87 = arith.constant 128 : index
    %c0_88 = arith.constant 0 : index
    %200 = vector.load %arg4[%c128_87, %c0_88] : memref<352x32xf32, #tpu.memory_space<vmem>>, vector<32x32xf32>
    %201 = arith.mulf %199, %200 : vector<32x32xf32>
    %202 = arith.addf %198, %201 : vector<32x32xf32>
    %c2_i32_89 = arith.constant 2 : i32
    %203 = tpu.dynamic_rotate %196 by %c2_i32_89 dim 0 : vector<32x32xf32>, i32 -> vector<32x32xf32>
    %c160_90 = arith.constant 160 : index
    %c0_91 = arith.constant 0 : index
    %204 = vector.load %arg4[%c160_90, %c0_91] : memref<352x32xf32, #tpu.memory_space<vmem>>, vector<32x32xf32>
    %205 = arith.mulf %203, %204 : vector<32x32xf32>
    %206 = arith.addf %202, %205 : vector<32x32xf32>
    %c1_i32_92 = arith.constant 1 : i32
    %207 = tpu.dynamic_rotate %196 by %c1_i32_92 dim 0 : vector<32x32xf32>, i32 -> vector<32x32xf32>
    %c192_93 = arith.constant 192 : index
    %c0_94 = arith.constant 0 : index
    %208 = vector.load %arg4[%c192_93, %c0_94] : memref<352x32xf32, #tpu.memory_space<vmem>>, vector<32x32xf32>
    %209 = arith.mulf %207, %208 : vector<32x32xf32>
    %210 = arith.addf %206, %209 : vector<32x32xf32>
    %c31_i32_95 = arith.constant 31 : i32
    %211 = tpu.dynamic_rotate %196 by %c31_i32_95 dim 0 : vector<32x32xf32>, i32 -> vector<32x32xf32>
    %c256 = arith.constant 256 : index
    %c0_96 = arith.constant 0 : index
    %212 = vector.load %arg4[%c256, %c0_96] : memref<352x32xf32, #tpu.memory_space<vmem>>, vector<32x32xf32>
    %213 = arith.mulf %211, %212 : vector<32x32xf32>
    %214 = arith.addf %210, %213 : vector<32x32xf32>
    %c30_i32 = arith.constant 30 : i32
    %215 = tpu.dynamic_rotate %196 by %c30_i32 dim 0 : vector<32x32xf32>, i32 -> vector<32x32xf32>
    %c288 = arith.constant 288 : index
    %c0_97 = arith.constant 0 : index
    %216 = vector.load %arg4[%c288, %c0_97] : memref<352x32xf32, #tpu.memory_space<vmem>>, vector<32x32xf32>
    %217 = arith.mulf %215, %216 : vector<32x32xf32>
    %218 = arith.addf %214, %217 : vector<32x32xf32>
    %c29_i32 = arith.constant 29 : i32
    %219 = tpu.dynamic_rotate %196 by %c29_i32 dim 0 : vector<32x32xf32>, i32 -> vector<32x32xf32>
    %c320 = arith.constant 320 : index
    %c0_98 = arith.constant 0 : index
    %220 = vector.load %arg4[%c320, %c0_98] : memref<352x32xf32, #tpu.memory_space<vmem>>, vector<32x32xf32>
    %221 = arith.mulf %219, %220 : vector<32x32xf32>
    %222 = arith.addf %218, %221 : vector<32x32xf32>
    %c15 = arith.constant 15 : index
    %c0_99 = arith.constant 0 : index
    %223 = vector.load %arg6[%c15, %c0_99] : memref<24x128xf32, #tpu.memory_space<vmem>>, vector<1x32xf32>
    %224 = vector.broadcast %223 : vector<1x32xf32> to vector<32x32xf32>
    %225 = arith.mulf %222, %224 : vector<32x32xf32>
    %c16 = arith.constant 16 : index
    %c0_100 = arith.constant 0 : index
    %226 = vector.load %arg6[%c16, %c0_100] : memref<24x128xf32, #tpu.memory_space<vmem>>, vector<1x32xf32>
    %227 = vector.broadcast %226 : vector<1x32xf32> to vector<32x32xf32>
    %228 = arith.addf %225, %227 : vector<32x32xf32>
    %229 = arith.negf %228 : vector<32x32xf32>
    %230 = math.exp %229 : vector<32x32xf32>
    %cst_101 = arith.constant 1.000000e+00 : f32
    %231 = vector.broadcast %cst_101 : f32 to vector<32x32xf32>
    %232 = arith.addf %231, %230 : vector<32x32xf32>
    %233 = arith.divf %231, %232 : vector<32x32xf32>
    %234 = arith.mulf %228, %233 : vector<32x32xf32>
    %c192_102 = arith.constant 192 : index
    %c0_103 = arith.constant 0 : index
    %235 = vector.load %arg3[%c192_102, %c0_103] : memref<352x128xf32, #tpu.memory_space<vmem>>, vector<32x32xf32>
    %cst_104 = arith.constant dense<0.000000e+00> : vector<32x32xf32>
    %236 = tpu.matmul %234, %235, %cst_104 {dimension_numbers = #tpu.dot_dimension_numbers<[1], [0], [0], [1], [0, 0, 1, 1], [], []>} : vector<32x32xf32>, vector<32x32xf32>, vector<32x32xf32> -> vector<32x32xf32>
    %c17 = arith.constant 17 : index
    %c0_105 = arith.constant 0 : index
    %237 = vector.load %arg6[%c17, %c0_105] : memref<24x128xf32, #tpu.memory_space<vmem>>, vector<1x32xf32>
    %238 = vector.broadcast %237 : vector<1x32xf32> to vector<32x32xf32>
    %239 = arith.addf %236, %238 : vector<32x32xf32>
    %240 = arith.addf %156, %239 : vector<32x32xf32>
    %cst_106 = arith.constant dense<0.000000e+00> : vector<32xf32>
    %241 = vector.multi_reduction <add>, %240, %cst_106 [1] : vector<32x32xf32> to vector<32xf32>
    %242 = vector.shape_cast %241 : vector<32xf32> to vector<32x1xf32>
    %cst_107 = arith.constant 3.200000e+01 : f32
    %243 = vector.broadcast %cst_107 : f32 to vector<32x1xf32>
    %244 = arith.divf %242, %243 : vector<32x1xf32>
    %245 = vector.broadcast %244 : vector<32x1xf32> to vector<32x32xf32>
    %246 = arith.subf %240, %245 : vector<32x32xf32>
    %247 = arith.mulf %246, %246 : vector<32x32xf32>
    %cst_108 = arith.constant dense<0.000000e+00> : vector<32xf32>
    %248 = vector.multi_reduction <add>, %247, %cst_108 [1] : vector<32x32xf32> to vector<32xf32>
    %249 = vector.shape_cast %248 : vector<32xf32> to vector<32x1xf32>
    %cst_109 = arith.constant 3.200000e+01 : f32
    %250 = vector.broadcast %cst_109 : f32 to vector<32x1xf32>
    %251 = arith.divf %249, %250 : vector<32x1xf32>
    %252 = vector.broadcast %244 : vector<32x1xf32> to vector<32x32xf32>
    %253 = arith.subf %240, %252 : vector<32x32xf32>
    %cst_110 = arith.constant 9.99999974E-6 : f32
    %254 = vector.broadcast %cst_110 : f32 to vector<32x1xf32>
    %255 = arith.addf %251, %254 : vector<32x1xf32>
    %256 = math.rsqrt %255 : vector<32x1xf32>
    %257 = vector.broadcast %256 : vector<32x1xf32> to vector<32x32xf32>
    %258 = arith.mulf %253, %257 : vector<32x32xf32>
    %c18 = arith.constant 18 : index
    %c0_111 = arith.constant 0 : index
    %259 = vector.load %arg6[%c18, %c0_111] : memref<24x128xf32, #tpu.memory_space<vmem>>, vector<1x32xf32>
    %260 = vector.broadcast %259 : vector<1x32xf32> to vector<32x32xf32>
    %261 = arith.mulf %258, %260 : vector<32x32xf32>
    %c19 = arith.constant 19 : index
    %c0_112 = arith.constant 0 : index
    %262 = vector.load %arg6[%c19, %c0_112] : memref<24x128xf32, #tpu.memory_space<vmem>>, vector<1x32xf32>
    %263 = vector.broadcast %262 : vector<1x32xf32> to vector<32x32xf32>
    %264 = arith.addf %261, %263 : vector<32x32xf32>
    %c32_113 = arith.constant 32 : index
    %c0_114 = arith.constant 0 : index
    %265 = vector.load %arg1[%c32_113, %c0_114] : memref<96x128xf32, #tpu.memory_space<vmem>>, vector<32x128xf32>
    %cst_115 = arith.constant dense<0.000000e+00> : vector<32x128xf32>
    %266 = tpu.matmul %264, %265, %cst_115 {dimension_numbers = #tpu.dot_dimension_numbers<[1], [0], [0], [1], [0, 0, 1, 1], [], []>} : vector<32x32xf32>, vector<32x128xf32>, vector<32x128xf32> -> vector<32x128xf32>
    %c20 = arith.constant 20 : index
    %c0_116 = arith.constant 0 : index
    %267 = vector.load %arg6[%c20, %c0_116] : memref<24x128xf32, #tpu.memory_space<vmem>>, vector<1x128xf32>
    %268 = vector.broadcast %267 : vector<1x128xf32> to vector<32x128xf32>
    %269 = arith.addf %266, %268 : vector<32x128xf32>
    %270 = arith.negf %269 : vector<32x128xf32>
    %271 = math.exp %270 : vector<32x128xf32>
    %cst_117 = arith.constant 1.000000e+00 : f32
    %272 = vector.broadcast %cst_117 : f32 to vector<32x128xf32>
    %273 = arith.addf %272, %271 : vector<32x128xf32>
    %274 = arith.divf %272, %273 : vector<32x128xf32>
    %275 = arith.mulf %269, %274 : vector<32x128xf32>
    %c128_118 = arith.constant 128 : index
    %c0_119 = arith.constant 0 : index
    %276 = vector.load %arg2[%c128_118, %c0_119] : memref<256x32xf32, #tpu.memory_space<vmem>>, vector<128x32xf32>
    %cst_120 = arith.constant dense<0.000000e+00> : vector<32x32xf32>
    %277 = tpu.matmul %275, %276, %cst_120 {dimension_numbers = #tpu.dot_dimension_numbers<[1], [0], [0], [1], [0, 0, 1, 1], [], []>} : vector<32x128xf32>, vector<128x32xf32>, vector<32x32xf32> -> vector<32x32xf32>
    %c21 = arith.constant 21 : index
    %c0_121 = arith.constant 0 : index
    %278 = vector.load %arg6[%c21, %c0_121] : memref<24x128xf32, #tpu.memory_space<vmem>>, vector<1x32xf32>
    %279 = vector.broadcast %278 : vector<1x32xf32> to vector<32x32xf32>
    %280 = arith.addf %277, %279 : vector<32x32xf32>
    %cst_122 = arith.constant 5.000000e-01 : f32
    %281 = vector.broadcast %cst_122 : f32 to vector<32x32xf32>
    %282 = arith.mulf %281, %280 : vector<32x32xf32>
    %283 = arith.addf %240, %282 : vector<32x32xf32>
    %cst_123 = arith.constant dense<0.000000e+00> : vector<32xf32>
    %284 = vector.multi_reduction <add>, %283, %cst_123 [1] : vector<32x32xf32> to vector<32xf32>
    %285 = vector.shape_cast %284 : vector<32xf32> to vector<32x1xf32>
    %cst_124 = arith.constant 3.200000e+01 : f32
    %286 = vector.broadcast %cst_124 : f32 to vector<32x1xf32>
    %287 = arith.divf %285, %286 : vector<32x1xf32>
    %288 = vector.broadcast %287 : vector<32x1xf32> to vector<32x32xf32>
    %289 = arith.subf %283, %288 : vector<32x32xf32>
    %290 = arith.mulf %289, %289 : vector<32x32xf32>
    %cst_125 = arith.constant dense<0.000000e+00> : vector<32xf32>
    %291 = vector.multi_reduction <add>, %290, %cst_125 [1] : vector<32x32xf32> to vector<32xf32>
    %292 = vector.shape_cast %291 : vector<32xf32> to vector<32x1xf32>
    %cst_126 = arith.constant 3.200000e+01 : f32
    %293 = vector.broadcast %cst_126 : f32 to vector<32x1xf32>
    %294 = arith.divf %292, %293 : vector<32x1xf32>
    %295 = vector.broadcast %287 : vector<32x1xf32> to vector<32x32xf32>
    %296 = arith.subf %283, %295 : vector<32x32xf32>
    %cst_127 = arith.constant 9.99999974E-6 : f32
    %297 = vector.broadcast %cst_127 : f32 to vector<32x1xf32>
    %298 = arith.addf %294, %297 : vector<32x1xf32>
    %299 = math.rsqrt %298 : vector<32x1xf32>
    %300 = vector.broadcast %299 : vector<32x1xf32> to vector<32x32xf32>
    %301 = arith.mulf %296, %300 : vector<32x32xf32>
    %c22 = arith.constant 22 : index
    %c0_128 = arith.constant 0 : index
    %302 = vector.load %arg6[%c22, %c0_128] : memref<24x128xf32, #tpu.memory_space<vmem>>, vector<1x32xf32>
    %303 = vector.broadcast %302 : vector<1x32xf32> to vector<32x32xf32>
    %304 = arith.mulf %301, %303 : vector<32x32xf32>
    %c23 = arith.constant 23 : index
    %c0_129 = arith.constant 0 : index
    %305 = vector.load %arg6[%c23, %c0_129] : memref<24x128xf32, #tpu.memory_space<vmem>>, vector<1x32xf32>
    %306 = vector.broadcast %305 : vector<1x32xf32> to vector<32x32xf32>
    %307 = arith.addf %304, %306 : vector<32x32xf32>
    %c0_130 = arith.constant 0 : index
    %c0_131 = arith.constant 0 : index
    %308 = vector.load %arg7[%c0_130, %c0_131] : memref<32x32xf32, #tpu.memory_space<vmem>>, vector<32x32xf32>
    tpu.vector_store %arg7[%c0_130, %c0_131], %307 {strides = array<i32>} : memref<32x32xf32, #tpu.memory_space<vmem>>, vector<32x32xf32>,
    return
  }
}

</mosaic_0001>

<llo_original>
// kernel: tpu_custom_call.1
$region0: #{tpu_custom_call.1}
  #allocation0 [shape = 'u32[]', space=smem, size = 0x4, offset = 0x4, fixed_abs, tag = 'smem constant byte address 0x4 - core index']
  #allocation1 [shape = 'u32[144,128]{1,0:T(1,128)}', space=vmem, size = 0x12000, scoped, tag = 'internal scratch']
  %s0 = inlined_call_operand.hbm [shape: f32[32,32], index: 0, kind: input, shape index: {}]
  %s1 = inlined_call_operand.vmem [shape: f32[96,128], index: 1, kind: input, shape index: {}]
  %s2 = inlined_call_operand.vmem [shape: f32[256,32], index: 2, kind: input, shape index: {}]
  %s3 = inlined_call_operand.vmem [shape: f32[352,128], index: 3, kind: input, shape index: {}]
  %s4 = inlined_call_operand.vmem [shape: f32[352,32], index: 4, kind: input, shape index: {}]
  %s5 = inlined_call_operand.vmem [shape: f32[224,128], index: 5, kind: input, shape index: {}]
  %s6 = inlined_call_operand.hbm [shape: f32[24,128], index: 6, kind: input, shape index: {}]
  %s7 = inlined_call_operand.hbm [shape: f32[32,32], index: 7, kind: output, shape index: {}]
  %s8 = sld [smem:[#allocation0]]
  $region46: #{tpu_custom_call.1} parent=0
    _
  %s10 = ssub.s32 1, %s8
  %s11 = scalar_select 0, %s10, %s8
  $region1: #{tpu_custom_call.1} parent=0
    #allocation2 [shape = 'u8[16384]{0}', space=vmem, size = 0x4000, scoped, tag = 'input window, operand 0, single buffered']
    #allocation3 [shape = 's32[1]{0}', space=sflag, size = 0x4, scoped, tag = 'scoped memory for tpu_custom_call.1']
    #allocation4 [shape = 's32[1]{0}', space=sflag, size = 0x4, scoped, tag = 'scoped memory for tpu_custom_call.1']
    #allocation5 [shape = 'u8[12288]{0}', space=vmem, size = 0x3000, scoped, tag = 'input window, operand 6, single buffered']
    #allocation6 [shape = 's32[1]{0}', space=sflag, size = 0x4, scoped, tag = 'scoped memory for tpu_custom_call.1']
    #allocation7 [shape = 'u8[16384]{0}', space=vmem, size = 0x4000, scoped, tag = 'output window, operand 0, single buffered']
    %12 = vsyncpa [#allocation3], 0
    %13 = vsyncpa [#allocation6], 0
    %14 = vsyncpa [#allocation4], 0
    // Predicated region
    $region2: #{tpu_custom_call.1} parent=1 // pred_check
      _
    $region3: #{tpu_custom_call.1} parent=1 // pred_check_branch
      %16 = sbr.rel (0) target = $region5
    $region4: #{tpu_custom_call.1} parent=1 // pred_region
      %s18 = ssub.s32 512, 512
      %19 = vsyncadd [#allocation3], %s18
      %s20 = sshll.u32 [#allocation2], 4
      %s21 = int_to_ptr.vmem [resolvable:$true] %s20
      %26 = dma.hbm_to_vmem [thread:$0]  %s0, 512, %s21, [#allocation3], 128, 128, 8
    $region5: #{tpu_custom_call.1} parent=1 // pred_fallthru
      _
    // Predicated region
    $region6: #{tpu_custom_call.1} parent=1 // pred_check
      _
    $region7: #{tpu_custom_call.1} parent=1 // pred_check_branch
      %28 = sbr.rel (0) target = $region9
    $region8: #{tpu_custom_call.1} parent=1 // pred_region
      _
    $region9: #{tpu_custom_call.1} parent=1 // pred_fallthru
      _
    // Predicated region
    $region10: #{tpu_custom_call.1} parent=1 // pred_check
      _
    $region11: #{tpu_custom_call.1} parent=1 // pred_check_branch
      %30 = sbr.rel (0) target = $region13
    $region12: #{tpu_custom_call.1} parent=1 // pred_region
      _
    $region13: #{tpu_custom_call.1} parent=1 // pred_fallthru
      _
    // Predicated region
    $region14: #{tpu_custom_call.1} parent=1 // pred_check
      _
    $region15: #{tpu_custom_call.1} parent=1 // pred_check_branch
      %32 = sbr.rel (0) target = $region17
    $region16: #{tpu_custom_call.1} parent=1 // pred_region
      _
    $region17: #{tpu_custom_call.1} parent=1 // pred_fallthru
      _
    // Predicated region
    $region18: #{tpu_custom_call.1} parent=1 // pred_check
      _
    $region19: #{tpu_custom_call.1} parent=1 // pred_check_branch
      %34 = sbr.rel (0) target = $region21
    $region20: #{tpu_custom_call.1} parent=1 // pred_region
      _
    $region21: #{tpu_custom_call.1} parent=1 // pred_fallthru
      _
    // Predicated region
    $region22: #{tpu_custom_call.1} parent=1 // pred_check
      _
    $region23: #{tpu_custom_call.1} parent=1 // pred_check_branch
      %36 = sbr.rel (0) target = $region25
    $region24: #{tpu_custom_call.1} parent=1 // pred_region
      _
    $region25: #{tpu_custom_call.1} parent=1 // pred_fallthru
      _
    // Predicated region
    $region26: #{tpu_custom_call.1} parent=1 // pred_check
      _
    $region27: #{tpu_custom_call.1} parent=1 // pred_check_branch
      %38 = sbr.rel (0) target = $region29
    $region28: #{tpu_custom_call.1} parent=1 // pred_region
      %s40 = ssub.s32 384, 384
      %41 = vsyncadd [#allocation6], %s40
      %s42 = sshll.u32 [#allocation5], 4
      %s43 = int_to_ptr.vmem [resolvable:$true] %s42
      %48 = dma.hbm_to_vmem [thread:$0]  %s6, 384, %s43, [#allocation6], 128, 128, 8
    $region29: #{tpu_custom_call.1} parent=1 // pred_fallthru
      _
    // Predicated region
    $region30: #{tpu_custom_call.1} parent=1 // pred_check
      _
    $region31: #{tpu_custom_call.1} parent=1 // pred_check_branch
      %50 = sbr.rel (0) target = $region33
    $region32: #{tpu_custom_call.1} parent=1 // pred_region
      %51 = dma.done [#allocation3], 512
    $region33: #{tpu_custom_call.1} parent=1 // pred_fallthru
      _
    // Predicated region
    $region34: #{tpu_custom_call.1} parent=1 // pred_check
      _
    $region35: #{tpu_custom_call.1} parent=1 // pred_check_branch
      %53 = sbr.rel (0) target = $region37
    $region36: #{tpu_custom_call.1} parent=1 // pred_region
      %54 = dma.done [#allocation6], 384
    $region37: #{tpu_custom_call.1} parent=1 // pred_fallthru
      _
    %v55 = vld [vmem:[#allocation2] sm:$0xff]
    %v56 = vld [vmem:[#allocation2 + $0x8] sm:$0xff]
    %v57 = vld [vmem:[#allocation2 + $0x10] sm:$0xff]
    %v58 = vld [vmem:[#allocation2 + $0x18] sm:$0xff]
    %vm59 = vcmask 261120
    %v60 = vsel %vm59, %v55, 0.0
    %61 = vadd.xlane.f32.xlu0 %v60
    %v62 = vpop.xlane.xlu0 %61
    %v63 = vsel %vm59, %v56, 0.0
    %64 = vadd.xlane.f32.xlu0 %v63
    %v65 = vpop.xlane.xlu0 %64
    %v66 = vsel %vm59, %v57, 0.0
    %67 = vadd.xlane.f32.xlu0 %v66
    %v68 = vpop.xlane.xlu0 %67
    %v69 = vsel %vm59, %v58, 0.0
    %70 = vadd.xlane.f32.xlu0 %v69
    %v71 = vpop.xlane.xlu0 %70
    %v72 = vrcp.pop 32.0
    %v73 = vmul.f32 %v62, %v72
    %v74 = vmul.f32 %v65, %v72
    %v75 = vmul.f32 %v68, %v72
    %v76 = vmul.f32 %v71, %v72
    %v77 = vsub.f32 %v55, %v73
    %v78 = vsub.f32 %v56, %v74
    %v79 = vsub.f32 %v57, %v75
    %v80 = vsub.f32 %v58, %v76
    %v81 = vmul.f32 %v77, %v77
    %v82 = vmul.f32 %v78, %v78
    %v83 = vmul.f32 %v79, %v79
    %v84 = vmul.f32 %v80, %v80
    %v85 = vsel %vm59, %v81, 0.0
    %86 = vadd.xlane.f32.xlu0 %v85
    %v87 = vpop.xlane.xlu0 %86
    %v88 = vsel %vm59, %v82, 0.0
    %89 = vadd.xlane.f32.xlu0 %v88
    %v90 = vpop.xlane.xlu0 %89
    %v91 = vsel %vm59, %v83, 0.0
    %92 = vadd.xlane.f32.xlu0 %v91
    %v93 = vpop.xlane.xlu0 %92
    %v94 = vsel %vm59, %v84, 0.0
    %95 = vadd.xlane.f32.xlu0 %v94
    %v96 = vpop.xlane.xlu0 %95
    %v97 = vmul.f32 %v87, %v72
    %v98 = vmul.f32 %v90, %v72
    %v99 = vmul.f32 %v93, %v72
    %v100 = vmul.f32 %v96, %v72
    %v101 = vadd.f32 %v97, 1e-05
    %v102 = vadd.f32 %v98, 1e-05
    %v103 = vadd.f32 %v99, 1e-05
    %v104 = vadd.f32 %v100, 1e-05
    %v105 = vrsqrt.pop %v101
    %v106 = vrsqrt.pop %v102
    %v107 = vrsqrt.pop %v103
    %v108 = vrsqrt.pop %v104
    %v109 = vmul.f32 %v77, %v105
    %v110 = vmul.f32 %v78, %v106
    %v111 = vmul.f32 %v79, %v107
    %v112 = vmul.f32 %v80, %v108
    %v113 = vld [vmem:[#allocation5] sm:$0x1]
    %v114 = vlaneseq
    %v115 = vshrl.u32 %v114, 7
    %v116 = vsub.s32 0, %v115
    %v117 = vrot.slane %v113, %v116
    %v118 = vmul.f32 %v109, %v117
    %v119 = vmul.f32 %v110, %v117
    %v120 = vmul.f32 %v111, %v117
    %v121 = vmul.f32 %v112, %v117
    %v122 = vld [vmem:[#allocation5 + $0x1] sm:$0x1]
    %v123 = vlaneseq
    %v124 = vshrl.u32 %v123, 7
    %v125 = vsub.s32 0, %v124
    %v126 = vrot.slane %v122, %v125
    %v127 = vadd.f32 %v118, %v126
    %v128 = vadd.f32 %v119, %v126
    %v129 = vadd.f32 %v120, %v126
    %v130 = vadd.f32 %v121, %v126
    %v131 = vld [vmem:[%s1] sm:$0xff]
    %v132 = vld [vmem:[%s1 + $0x8] sm:$0xff]
    %v133 = vld [vmem:[%s1 + $0x10] sm:$0xff]
    %v134 = vld [vmem:[%s1 + $0x18] sm:$0xff]
    %v135 = vld [vmem:[#allocation5 + $0x2] sm:$0x1]
    %v136 = vlaneseq
    %v137 = vshrl.u32 %v136, 7
    %v138 = vsub.s32 0, %v137
    %v139 = vrot.slane %v135, %v138
    %v141 = vsel %vm59, %v127, 0
    %v144 = vsel %vm59, %v128, 0
    %v147 = vsel %vm59, %v129, 0
    %v150 = vsel %vm59, %v130, 0
    %152 = vmatprep.subr.mxu0 0.0
    %153 = vmatpush1.msra.mxu0 %v131
    %154 = vmatprep.subr.mxu0 0.0
    %155 = vmatpush1.msra.mxu0 %v132
    %156 = vmatprep.subr.mxu0 0.0
    %157 = vmatpush1.msra.mxu0 %v133
    %158 = vmatprep.subr.mxu0 0.0
    %159 = vmatpush1.msra.mxu0 %v134
    %160 = vmatprep.subr.mxu0 0.0
    %161 = vmatpush1.msra.mxu0 0.0
    %162 = vmatprep.subr.mxu0 0.0
    %163 = vmatpush1.msra.mxu0 0.0
    %164 = vmatprep.subr.mxu0 0.0
    %165 = vmatpush1.msra.mxu0 0.0
    %166 = vmatprep.subr.mxu0 0.0
    %167 = vmatpush1.msra.mxu0 0.0
    %168 = vmatprep.subr.mxu0 0.0
    %169 = vmatpush1.msra.mxu0 0.0
    %170 = vmatprep.subr.mxu0 0.0
    %171 = vmatpush1.msra.mxu0 0.0
    %172 = vmatprep.subr.mxu0 0.0
    %173 = vmatpush1.msra.mxu0 0.0
    %174 = vmatprep.subr.mxu0 0.0
    %175 = vmatpush1.msra.mxu0 0.0
    %176 = vmatprep.subr.mxu0 0.0
    %177 = vmatpush1.msra.mxu0 0.0
    %178 = vmatprep.subr.mxu0 0.0
    %179 = vmatpush1.msra.mxu0 0.0
    %180 = vmatprep.subr.mxu0 0.0
    %181 = vmatpush1.msra.mxu0 0.0
    %182 = vmatprep.subr.mxu0 0.0
    %183 = vmatpush1.msra.mxu0 0.0
    %184 = vmatprep.subr.mxu0 0.0
    %185 = vmatpush1.msra.mxu0 0.0
    %186 = vmatprep.subr.mxu0 0.0
    %187 = vmatpush1.msra.mxu0 0.0
    %188 = vmatprep.subr.mxu0 0.0
    %189 = vmatpush1.msra.mxu0 0.0
    %190 = vmatprep.subr.mxu0 0.0
    %191 = vmatpush1.msra.mxu0 0.0
    %192 = vmatprep.subr.mxu0 0.0
    %193 = vmatpush1.msra.mxu0 0.0
    %194 = vmatprep.subr.mxu0 0.0
    %195 = vmatpush1.msra.mxu0 0.0
    %196 = vmatprep.subr.mxu0 0.0
    %197 = vmatpush1.msra.mxu0 0.0
    %198 = vmatprep.subr.mxu0 0.0
    %199 = vmatpush1.msra.mxu0 0.0
    %200 = vmatprep.subr.mxu0 0.0
    %201 = vmatpush1.msra.mxu0 0.0
    %202 = vmatprep.subr.mxu0 0.0
    %203 = vmatpush1.msra.mxu0 0.0
    %204 = vmatprep.subr.mxu0 0.0
    %205 = vmatpush1.msra.mxu0 0.0
    %206 = vmatprep.subr.mxu0 0.0
    %207 = vmatpush1.msra.mxu0 0.0
    %208 = vmatprep.subr.mxu0 0.0
    %209 = vmatpush1.msra.mxu0 0.0
    %210 = vmatprep.subr.mxu0 0.0
    %211 = vmatpush1.msra.mxu0 0.0
    %212 = vmatprep.subr.mxu0 0.0
    %213 = vmatpush1.msra.mxu0 0.0
    %214 = vmatprep.subr.mxu0 0.0
    %215 = vmatpush1.msra.mxu0 0.0
    %216 = vmatprep.mubr.f32.mxu0 0.0
    %217 = vmatmul.mubr.f32.gmra.mrb[0].mxu0 %v141
    %v218 = vpop.f32.mrb[0].mxu0
    %v219 = vadd.f32 %v139, %v218
    %v220 = vpop.f32.mrb[0].mxu0
    %221 = vmatprep.mubr.f32.mxu0 0.0
    %222 = vmatmul.mubr.f32.gmra.mrb[0].mxu0 %v144
    %v223 = vpop.f32.mrb[0].mxu0
    %v224 = vadd.f32 %v139, %v223
    %v225 = vpop.f32.mrb[0].mxu0
    %226 = vmatprep.mubr.f32.mxu0 0.0
    %227 = vmatmul.mubr.f32.gmra.mrb[0].mxu0 %v147
    %v228 = vpop.f32.mrb[0].mxu0
    %v229 = vadd.f32 %v139, %v228
    %v230 = vpop.f32.mrb[0].mxu0
    %231 = vmatprep.mubr.f32.mxu0 0.0
    %232 = vmatmul.mubr.f32.gmra.mrb[0].mxu0 %v150
    %v233 = vpop.f32.mrb[0].mxu0
    %v234 = vadd.f32 %v139, %v233
    %v235 = vpop.f32.mrb[0].mxu0
    %236 = vdwg.mxu0
    %v237 = vxor.u32 %v219, 2147483648
    %v238 = vxor.u32 %v224, 2147483648
    %v239 = vxor.u32 %v229, 2147483648
    %v240 = vxor.u32 %v234, 2147483648
    %v241 = vmul.f32 %v237, 1.442695
    %v242 = vpow.pop %v241
    %v243 = vmul.f32 %v238, 1.442695
    %v244 = vpow.pop %v243
    %v245 = vmul.f32 %v239, 1.442695
    %v246 = vpow.pop %v245
    %v247 = vmul.f32 %v240, 1.442695
    %v248 = vpow.pop %v247
    %v249 = vadd.f32 %v242, 1.0
    %v250 = vadd.f32 %v244, 1.0
    %v251 = vadd.f32 %v246, 1.0
    %v252 = vadd.f32 %v248, 1.0
    %v253 = vrcp.pop %v249
    %v254 = vmul.f32 1.0, %v253
    %v255 = vrcp.pop %v250
    %v256 = vmul.f32 1.0, %v255
    %v257 = vrcp.pop %v251
    %v258 = vmul.f32 1.0, %v257
    %v259 = vrcp.pop %v252
    %v260 = vmul.f32 1.0, %v259
    %v261 = vmul.f32 %v219, %v254
    %v262 = vmul.f32 %v224, %v256
    %v263 = vmul.f32 %v229, %v258
    %v264 = vmul.f32 %v234, %v260
    %v265 = vld [vmem:[%s2] sm:$0xff]
    %v266 = vld [vmem:[%s2 + $0x8] sm:$0xff]
    %v267 = vld [vmem:[%s2 + $0x10] sm:$0xff]
    %v268 = vld [vmem:[%s2 + $0x18] sm:$0xff]
    %v269 = vld [vmem:[%s2 + $0x20] sm:$0xff]
    %v270 = vld [vmem:[%s2 + $0x28] sm:$0xff]
    %v271 = vld [vmem:[%s2 + $0x30] sm:$0xff]
    %v272 = vld [vmem:[%s2 + $0x38] sm:$0xff]
    %v273 = vld [vmem:[%s2 + $0x40] sm:$0xff]
    %v274 = vld [vmem:[%s2 + $0x48] sm:$0xff]
    %v275 = vld [vmem:[%s2 + $0x50] sm:$0xff]
    %v276 = vld [vmem:[%s2 + $0x58] sm:$0xff]
    %v277 = vld [vmem:[%s2 + $0x60] sm:$0xff]
    %v278 = vld [vmem:[%s2 + $0x68] sm:$0xff]
    %v279 = vld [vmem:[%s2 + $0x70] sm:$0xff]
    %v280 = vld [vmem:[%s2 + $0x78] sm:$0xff]
    %v281 = vld [vmem:[#allocation5 + $0x3] sm:$0x1]
    %v282 = vlaneseq
    %v283 = vshrl.u32 %v282, 7
    %v284 = vsub.s32 0, %v283
    %v285 = vrot.slane %v281, %v284
    %286 = vmatprep.subr.mxu0 0.0
    %287 = vmatpush1.msra.mxu0 %v265
    %288 = vmatprep.subr.mxu0 0.0
    %289 = vmatpush1.msra.mxu0 %v266
    %290 = vmatprep.subr.mxu0 0.0
    %291 = vmatpush1.msra.mxu0 %v267
    %292 = vmatprep.subr.mxu0 0.0
    %293 = vmatpush1.msra.mxu0 %v268
    %294 = vmatprep.subr.mxu0 0.0
    %295 = vmatpush1.msra.mxu0 %v269
    %296 = vmatprep.subr.mxu0 0.0
    %297 = vmatpush1.msra.mxu0 %v270
    %298 = vmatprep.subr.mxu0 0.0
    %299 = vmatpush1.msra.mxu0 %v271
    %300 = vmatprep.subr.mxu0 0.0
    %301 = vmatpush1.msra.mxu0 %v272
    %302 = vmatprep.subr.mxu0 0.0
    %303 = vmatpush1.msra.mxu0 %v273
    %304 = vmatprep.subr.mxu0 0.0
    %305 = vmatpush1.msra.mxu0 %v274
    %306 = vmatprep.subr.mxu0 0.0
    %307 = vmatpush1.msra.mxu0 %v275
    %308 = vmatprep.subr.mxu0 0.0
    %309 = vmatpush1.msra.mxu0 %v276
    %310 = vmatprep.subr.mxu0 0.0
    %311 = vmatpush1.msra.mxu0 %v277
    %312 = vmatprep.subr.mxu0 0.0
    %313 = vmatpush1.msra.mxu0 %v278
    %314 = vmatprep.subr.mxu0 0.0
    %315 = vmatpush1.msra.mxu0 %v279
    %316 = vmatprep.subr.mxu0 0.0
    %317 = vmatpush1.msra.mxu0 %v280
    %318 = vmatprep.subr.mxu0 0.0
    %319 = vmatpush1.msra.mxu0 0.0
    %320 = vmatprep.subr.mxu0 0.0
    %321 = vmatpush1.msra.mxu0 0.0
    %322 = vmatprep.subr.mxu0 0.0
    %323 = vmatpush1.msra.mxu0 0.0
    %324 = vmatprep.subr.mxu0 0.0
    %325 = vmatpush1.msra.mxu0 0.0
    %326 = vmatprep.subr.mxu0 0.0
    %327 = vmatpush1.msra.mxu0 0.0
    %328 = vmatprep.subr.mxu0 0.0
    %329 = vmatpush1.msra.mxu0 0.0
    %330 = vmatprep.subr.mxu0 0.0
    %331 = vmatpush1.msra.mxu0 0.0
    %332 = vmatprep.subr.mxu0 0.0
    %333 = vmatpush1.msra.mxu0 0.0
    %334 = vmatprep.subr.mxu0 0.0
    %335 = vmatpush1.msra.mxu0 0.0
    %336 = vmatprep.subr.mxu0 0.0
    %337 = vmatpush1.msra.mxu0 0.0
    %338 = vmatprep.subr.mxu0 0.0
    %339 = vmatpush1.msra.mxu0 0.0
    %340 = vmatprep.subr.mxu0 0.0
    %341 = vmatpush1.msra.mxu0 0.0
    %342 = vmatprep.subr.mxu0 0.0
    %343 = vmatpush1.msra.mxu0 0.0
    %344 = vmatprep.subr.mxu0 0.0
    %345 = vmatpush1.msra.mxu0 0.0
    %346 = vmatprep.subr.mxu0 0.0
    %347 = vmatpush1.msra.mxu0 0.0
    %348 = vmatprep.subr.mxu0 0.0
    %349 = vmatpush1.msra.mxu0 0.0
    %350 = vmatprep.mubr.f32.mxu0 0.0
    %351 = vmatmul.mubr.f32.gmra.mrb[0].mxu0 %v261
    %v352 = vpop.f32.mrb[0].mxu0
    %v353 = vadd.f32 %v285, %v352
    %v354 = vpop.f32.mrb[0].mxu0
    %355 = vmatprep.mubr.f32.mxu0 0.0
    %356 = vmatmul.mubr.f32.gmra.mrb[0].mxu0 %v262
    %v357 = vpop.f32.mrb[0].mxu0
    %v358 = vadd.f32 %v285, %v357
    %v359 = vpop.f32.mrb[0].mxu0
    %360 = vmatprep.mubr.f32.mxu0 0.0
    %361 = vmatmul.mubr.f32.gmra.mrb[0].mxu0 %v263
    %v362 = vpop.f32.mrb[0].mxu0
    %v363 = vadd.f32 %v285, %v362
    %v364 = vpop.f32.mrb[0].mxu0
    %365 = vmatprep.mubr.f32.mxu0 0.0
    %366 = vmatmul.mubr.f32.gmra.mrb[0].mxu0 %v264
    %v367 = vpop.f32.mrb[0].mxu0
    %v368 = vadd.f32 %v285, %v367
    %v369 = vpop.f32.mrb[0].mxu0
    %370 = vdwg.mxu0
    %v371 = vmul.f32 %v353, 0.5
    %v372 = vmul.f32 %v358, 0.5
    %v373 = vmul.f32 %v363, 0.5
    %v374 = vmul.f32 %v368, 0.5
    %v375 = vadd.f32 %v55, %v371
    %v376 = vadd.f32 %v56, %v372
    %v377 = vadd.f32 %v57, %v373
    %v378 = vadd.f32 %v58, %v374
    %v379 = vsel %vm59, %v375, 0.0
    %380 = vadd.xlane.f32.xlu0 %v379
    %v381 = vpop.xlane.xlu0 %380
    %v382 = vsel %vm59, %v376, 0.0
    %383 = vadd.xlane.f32.xlu0 %v382
    %v384 = vpop.xlane.xlu0 %383
    %v385 = vsel %vm59, %v377, 0.0
    %386 = vadd.xlane.f32.xlu0 %v385
    %v387 = vpop.xlane.xlu0 %386
    %v388 = vsel %vm59, %v378, 0.0
    %389 = vadd.xlane.f32.xlu0 %v388
    %v390 = vpop.xlane.xlu0 %389
    %v391 = vmul.f32 %v381, %v72
    %v392 = vmul.f32 %v384, %v72
    %v393 = vmul.f32 %v387, %v72
    %v394 = vmul.f32 %v390, %v72
    %v395 = vsub.f32 %v375, %v391
    %v396 = vsub.f32 %v376, %v392
    %v397 = vsub.f32 %v377, %v393
    %v398 = vsub.f32 %v378, %v394
    %v399 = vmul.f32 %v395, %v395
    %v400 = vmul.f32 %v396, %v396
    %v401 = vmul.f32 %v397, %v397
    %v402 = vmul.f32 %v398, %v398
    %v403 = vsel %vm59, %v399, 0.0
    %404 = vadd.xlane.f32.xlu0 %v403
    %v405 = vpop.xlane.xlu0 %404
    %v406 = vsel %vm59, %v400, 0.0
    %407 = vadd.xlane.f32.xlu0 %v406
    %v408 = vpop.xlane.xlu0 %407
    %v409 = vsel %vm59, %v401, 0.0
    %410 = vadd.xlane.f32.xlu0 %v409
    %v411 = vpop.xlane.xlu0 %410
    %v412 = vsel %vm59, %v402, 0.0
    %413 = vadd.xlane.f32.xlu0 %v412
    %v414 = vpop.xlane.xlu0 %413
    %v415 = vmul.f32 %v405, %v72
    %v416 = vmul.f32 %v408, %v72
    %v417 = vmul.f32 %v411, %v72
    %v418 = vmul.f32 %v414, %v72
    %v419 = vadd.f32 %v415, 1e-05
    %v420 = vadd.f32 %v416, 1e-05
    %v421 = vadd.f32 %v417, 1e-05
    %v422 = vadd.f32 %v418, 1e-05
    %v423 = vrsqrt.pop %v419
    %v424 = vrsqrt.pop %v420
    %v425 = vrsqrt.pop %v421
    %v426 = vrsqrt.pop %v422
    %v427 = vmul.f32 %v395, %v423
    %v428 = vmul.f32 %v396, %v424
    %v429 = vmul.f32 %v397, %v425
    %v430 = vmul.f32 %v398, %v426
    %v431 = vld [vmem:[#allocation5 + $0x4] sm:$0x1]
    %v432 = vlaneseq
    %v433 = vshrl.u32 %v432, 7
    %v434 = vsub.s32 0, %v433
    %v435 = vrot.slane %v431, %v434
    %v436 = vmul.f32 %v427, %v435
    %v437 = vmul.f32 %v428, %v435
    %v438 = vmul.f32 %v429, %v435
    %v439 = vmul.f32 %v430, %v435
    %v440 = vld [vmem:[#allocation5 + $0x5] sm:$0x1]
    %v441 = vlaneseq
    %v442 = vshrl.u32 %v441, 7
    %v443 = vsub.s32 0, %v442
    %v444 = vrot.slane %v440, %v443
    %v445 = vadd.f32 %v436, %v444
    %v446 = vadd.f32 %v437, %v444
    %v447 = vadd.f32 %v438, %v444
    %v448 = vadd.f32 %v439, %v444
    %v449 = vld [vmem:[%s3] sm:$0xff]
    %v450 = vld [vmem:[%s3 + $0x8] sm:$0xff]
    %v451 = vld [vmem:[%s3 + $0x10] sm:$0xff]
    %v452 = vld [vmem:[%s3 + $0x18] sm:$0xff]
    %v454 = vsel %vm59, %v445, 0
    %v457 = vsel %vm59, %v446, 0
    %v460 = vsel %vm59, %v447, 0
    %v463 = vsel %vm59, %v448, 0
    %465 = vmatprep.subr.mxu0 0.0
    %466 = vmatpush1.msra.mxu0 %v449
    %467 = vmatprep.subr.mxu0 0.0
    %468 = vmatpush1.msra.mxu0 %v450
    %469 = vmatprep.subr.mxu0 0.0
    %470 = vmatpush1.msra.mxu0 %v451
    %471 = vmatprep.subr.mxu0 0.0
    %472 = vmatpush1.msra.mxu0 %v452
    %473 = vmatprep.subr.mxu0 0.0
    %474 = vmatpush1.msra.mxu0 0.0
    %475 = vmatprep.subr.mxu0 0.0
    %476 = vmatpush1.msra.mxu0 0.0
    %477 = vmatprep.subr.mxu0 0.0
    %478 = vmatpush1.msra.mxu0 0.0
    %479 = vmatprep.subr.mxu0 0.0
    %480 = vmatpush1.msra.mxu0 0.0
    %481 = vmatprep.subr.mxu0 0.0
    %482 = vmatpush1.msra.mxu0 0.0
    %483 = vmatprep.subr.mxu0 0.0
    %484 = vmatpush1.msra.mxu0 0.0
    %485 = vmatprep.subr.mxu0 0.0
    %486 = vmatpush1.msra.mxu0 0.0
    %487 = vmatprep.subr.mxu0 0.0
    %488 = vmatpush1.msra.mxu0 0.0
    %489 = vmatprep.subr.mxu0 0.0
    %490 = vmatpush1.msra.mxu0 0.0
    %491 = vmatprep.subr.mxu0 0.0
    %492 = vmatpush1.msra.mxu0 0.0
    %493 = vmatprep.subr.mxu0 0.0
    %494 = vmatpush1.msra.mxu0 0.0
    %495 = vmatprep.subr.mxu0 0.0
    %496 = vmatpush1.msra.mxu0 0.0
    %497 = vmatprep.subr.mxu0 0.0
    %498 = vmatpush1.msra.mxu0 0.0
    %499 = vmatprep.subr.mxu0 0.0
    %500 = vmatpush1.msra.mxu0 0.0
    %501 = vmatprep.subr.mxu0 0.0
    %502 = vmatpush1.msra.mxu0 0.0
    %503 = vmatprep.subr.mxu0 0.0
    %504 = vmatpush1.msra.mxu0 0.0
    %505 = vmatprep.subr.mxu0 0.0
    %506 = vmatpush1.msra.mxu0 0.0
    %507 = vmatprep.subr.mxu0 0.0
    %508 = vmatpush1.msra.mxu0 0.0
    %509 = vmatprep.subr.mxu0 0.0
    %510 = vmatpush1.msra.mxu0 0.0
    %511 = vmatprep.subr.mxu0 0.0
    %512 = vmatpush1.msra.mxu0 0.0
    %513 = vmatprep.subr.mxu0 0.0
    %514 = vmatpush1.msra.mxu0 0.0
    %515 = vmatprep.subr.mxu0 0.0
    %516 = vmatpush1.msra.mxu0 0.0
    %517 = vmatprep.subr.mxu0 0.0
    %518 = vmatpush1.msra.mxu0 0.0
    %519 = vmatprep.subr.mxu0 0.0
    %520 = vmatpush1.msra.mxu0 0.0
    %521 = vmatprep.subr.mxu0 0.0
    %522 = vmatpush1.msra.mxu0 0.0
    %523 = vmatprep.subr.mxu0 0.0
    %524 = vmatpush1.msra.mxu0 0.0
    %525 = vmatprep.subr.mxu0 0.0
    %526 = vmatpush1.msra.mxu0 0.0
    %527 = vmatprep.subr.mxu0 0.0
    %528 = vmatpush1.msra.mxu0 0.0
    %529 = vmatprep.mubr.f32.mxu0 0.0
    %530 = vmatmul.mubr.f32.gmra.mrb[0].mxu0 %v454
    %v531 = vpop.f32.mrb[0].mxu0
    %v532 = vadd.f32 0.0, %v531
    %v533 = vpop.f32.mrb[0].mxu0
    %534 = vmatprep.mubr.f32.mxu0 0.0
    %535 = vmatmul.mubr.f32.gmra.mrb[0].mxu0 %v457
    %v536 = vpop.f32.mrb[0].mxu0
    %v537 = vadd.f32 0.0, %v536
    %v538 = vpop.f32.mrb[0].mxu0
    %539 = vmatprep.mubr.f32.mxu0 0.0
    %540 = vmatmul.mubr.f32.gmra.mrb[0].mxu0 %v460
    %v541 = vpop.f32.mrb[0].mxu0
    %v542 = vadd.f32 0.0, %v541
    %v543 = vpop.f32.mrb[0].mxu0
    %544 = vmatprep.mubr.f32.mxu0 0.0
    %545 = vmatmul.mubr.f32.gmra.mrb[0].mxu0 %v463
    %v546 = vpop.f32.mrb[0].mxu0
    %v547 = vadd.f32 0.0, %v546
    %v548 = vpop.f32.mrb[0].mxu0
    %549 = vdwg.mxu0
    %v550 = vld [vmem:[%s3 + $0x20] sm:$0xff]
    %v551 = vld [vmem:[%s3 + $0x28] sm:$0xff]
    %v552 = vld [vmem:[%s3 + $0x30] sm:$0xff]
    %v553 = vld [vmem:[%s3 + $0x38] sm:$0xff]
    %v554 = vld [vmem:[#allocation5 + $0x6] sm:$0x1]
    %v555 = vlaneseq
    %v556 = vshrl.u32 %v555, 7
    %v557 = vsub.s32 0, %v556
    %v558 = vrot.slane %v554, %v557
    %559 = vmatprep.subr.mxu0 0.0
    %560 = vmatpush1.msra.mxu0 %v550
    %561 = vmatprep.subr.mxu0 0.0
    %562 = vmatpush1.msra.mxu0 %v551
    %563 = vmatprep.subr.mxu0 0.0
    %564 = vmatpush1.msra.mxu0 %v552
    %565 = vmatprep.subr.mxu0 0.0
    %566 = vmatpush1.msra.mxu0 %v553
    %567 = vmatprep.subr.mxu0 0.0
    %568 = vmatpush1.msra.mxu0 0.0
    %569 = vmatprep.subr.mxu0 0.0
    %570 = vmatpush1.msra.mxu0 0.0
    %571 = vmatprep.subr.mxu0 0.0
    %572 = vmatpush1.msra.mxu0 0.0
    %573 = vmatprep.subr.mxu0 0.0
    %574 = vmatpush1.msra.mxu0 0.0
    %575 = vmatprep.subr.mxu0 0.0
    %576 = vmatpush1.msra.mxu0 0.0
    %577 = vmatprep.subr.mxu0 0.0
    %578 = vmatpush1.msra.mxu0 0.0
    %579 = vmatprep.subr.mxu0 0.0
    %580 = vmatpush1.msra.mxu0 0.0
    %581 = vmatprep.subr.mxu0 0.0
    %582 = vmatpush1.msra.mxu0 0.0
    %583 = vmatprep.subr.mxu0 0.0
    %584 = vmatpush1.msra.mxu0 0.0
    %585 = vmatprep.subr.mxu0 0.0
    %586 = vmatpush1.msra.mxu0 0.0
    %587 = vmatprep.subr.mxu0 0.0
    %588 = vmatpush1.msra.mxu0 0.0
    %589 = vmatprep.subr.mxu0 0.0
    %590 = vmatpush1.msra.mxu0 0.0
    %591 = vmatprep.subr.mxu0 0.0
    %592 = vmatpush1.msra.mxu0 0.0
    %593 = vmatprep.subr.mxu0 0.0
    %594 = vmatpush1.msra.mxu0 0.0
    %595 = vmatprep.subr.mxu0 0.0
    %596 = vmatpush1.msra.mxu0 0.0
    %597 = vmatprep.subr.mxu0 0.0
    %598 = vmatpush1.msra.mxu0 0.0
    %599 = vmatprep.subr.mxu0 0.0
    %600 = vmatpush1.msra.mxu0 0.0
    %601 = vmatprep.subr.mxu0 0.0
    %602 = vmatpush1.msra.mxu0 0.0
    %603 = vmatprep.subr.mxu0 0.0
    %604 = vmatpush1.msra.mxu0 0.0
    %605 = vmatprep.subr.mxu0 0.0
    %606 = vmatpush1.msra.mxu0 0.0
    %607 = vmatprep.subr.mxu0 0.0
    %608 = vmatpush1.msra.mxu0 0.0
    %609 = vmatprep.subr.mxu0 0.0
    %610 = vmatpush1.msra.mxu0 0.0
    %611 = vmatprep.subr.mxu0 0.0
    %612 = vmatpush1.msra.mxu0 0.0
    %613 = vmatprep.subr.mxu0 0.0
    %614 = vmatpush1.msra.mxu0 0.0
    %615 = vmatprep.subr.mxu0 0.0
    %616 = vmatpush1.msra.mxu0 0.0
    %617 = vmatprep.subr.mxu0 0.0
    %618 = vmatpush1.msra.mxu0 0.0
    %619 = vmatprep.subr.mxu0 0.0
    %620 = vmatpush1.msra.mxu0 0.0
    %621 = vmatprep.subr.mxu0 0.0
    %622 = vmatpush1.msra.mxu0 0.0
    %623 = vmatprep.mubr.f32.mxu0 0.0
    %624 = vmatmul.mubr.f32.gmra.mrb[0].mxu0 %v454
    %v625 = vpop.f32.mrb[0].mxu0
    %v626 = vadd.f32 %v558, %v625
    %v627 = vpop.f32.mrb[0].mxu0
    %628 = vmatprep.mubr.f32.mxu0 0.0
    %629 = vmatmul.mubr.f32.gmra.mrb[0].mxu0 %v457
    %v630 = vpop.f32.mrb[0].mxu0
    %v631 = vadd.f32 %v558, %v630
    %v632 = vpop.f32.mrb[0].mxu0
    %633 = vmatprep.mubr.f32.mxu0 0.0
    %634 = vmatmul.mubr.f32.gmra.mrb[0].mxu0 %v460
    %v635 = vpop.f32.mrb[0].mxu0
    %v636 = vadd.f32 %v558, %v635
    %v637 = vpop.f32.mrb[0].mxu0
    %638 = vmatprep.mubr.f32.mxu0 0.0
    %639 = vmatmul.mubr.f32.gmra.mrb[0].mxu0 %v463
    %v640 = vpop.f32.mrb[0].mxu0
    %v641 = vadd.f32 %v558, %v640
    %v642 = vpop.f32.mrb[0].mxu0
    %643 = vdwg.mxu0
    %v644 = vld [vmem:[%s3 + $0x40] sm:$0xff]
    %v645 = vld [vmem:[%s3 + $0x48] sm:$0xff]
    %v646 = vld [vmem:[%s3 + $0x50] sm:$0xff]
    %v647 = vld [vmem:[%s3 + $0x58] sm:$0xff]
    %v648 = vld [vmem:[#allocation5 + $0x7] sm:$0x1]
    %v649 = vlaneseq
    %v650 = vshrl.u32 %v649, 7
    %v651 = vsub.s32 0, %v650
    %v652 = vrot.slane %v648, %v651
    %653 = vmatprep.subr.mxu0 0.0
    %654 = vmatpush1.msra.mxu0 %v644
    %655 = vmatprep.subr.mxu0 0.0
    %656 = vmatpush1.msra.mxu0 %v645
    %657 = vmatprep.subr.mxu0 0.0
    %658 = vmatpush1.msra.mxu0 %v646
    %659 = vmatprep.subr.mxu0 0.0
    %660 = vmatpush1.msra.mxu0 %v647
    %661 = vmatprep.subr.mxu0 0.0
    %662 = vmatpush1.msra.mxu0 0.0
    %663 = vmatprep.subr.mxu0 0.0
    %664 = vmatpush1.msra.mxu0 0.0
    %665 = vmatprep.subr.mxu0 0.0
    %666 = vmatpush1.msra.mxu0 0.0
    %667 = vmatprep.subr.mxu0 0.0
    %668 = vmatpush1.msra.mxu0 0.0
    %669 = vmatprep.subr.mxu0 0.0
    %670 = vmatpush1.msra.mxu0 0.0
    %671 = vmatprep.subr.mxu0 0.0
    %672 = vmatpush1.msra.mxu0 0.0
    %673 = vmatprep.subr.mxu0 0.0
    %674 = vmatpush1.msra.mxu0 0.0
    %675 = vmatprep.subr.mxu0 0.0
    %676 = vmatpush1.msra.mxu0 0.0
    %677 = vmatprep.subr.mxu0 0.0
    %678 = vmatpush1.msra.mxu0 0.0
    %679 = vmatprep.subr.mxu0 0.0
    %680 = vmatpush1.msra.mxu0 0.0
    %681 = vmatprep.subr.mxu0 0.0
    %682 = vmatpush1.msra.mxu0 0.0
    %683 = vmatprep.subr.mxu0 0.0
    %684 = vmatpush1.msra.mxu0 0.0
    %685 = vmatprep.subr.mxu0 0.0
    %686 = vmatpush1.msra.mxu0 0.0
    %687 = vmatprep.subr.mxu0 0.0
    %688 = vmatpush1.msra.mxu0 0.0
    %689 = vmatprep.subr.mxu0 0.0
    %690 = vmatpush1.msra.mxu0 0.0
    %691 = vmatprep.subr.mxu0 0.0
    %692 = vmatpush1.msra.mxu0 0.0
    %693 = vmatprep.subr.mxu0 0.0
    %694 = vmatpush1.msra.mxu0 0.0
    %695 = vmatprep.subr.mxu0 0.0
    %696 = vmatpush1.msra.mxu0 0.0
    %697 = vmatprep.subr.mxu0 0.0
    %698 = vmatpush1.msra.mxu0 0.0
    %699 = vmatprep.subr.mxu0 0.0
    %700 = vmatpush1.msra.mxu0 0.0
    %701 = vmatprep.subr.mxu0 0.0
    %702 = vmatpush1.msra.mxu0 0.0
    %703 = vmatprep.subr.mxu0 0.0
    %704 = vmatpush1.msra.mxu0 0.0
    %705 = vmatprep.subr.mxu0 0.0
    %706 = vmatpush1.msra.mxu0 0.0
    %707 = vmatprep.subr.mxu0 0.0
    %708 = vmatpush1.msra.mxu0 0.0
    %709 = vmatprep.subr.mxu0 0.0
    %710 = vmatpush1.msra.mxu0 0.0
    %711 = vmatprep.subr.mxu0 0.0
    %712 = vmatpush1.msra.mxu0 0.0
    %713 = vmatprep.subr.mxu0 0.0
    %714 = vmatpush1.msra.mxu0 0.0
    %715 = vmatprep.subr.mxu0 0.0
    %716 = vmatpush1.msra.mxu0 0.0
    %717 = vmatprep.mubr.f32.mxu0 0.0
    %718 = vmatmul.mubr.f32.gmra.mrb[0].mxu0 %v454
    %v719 = vpop.f32.mrb[0].mxu0
    %v720 = vadd.f32 %v652, %v719
    %v721 = vpop.f32.mrb[0].mxu0
    %722 = vmatprep.mubr.f32.mxu0 0.0
    %723 = vmatmul.mubr.f32.gmra.mrb[0].mxu0 %v457
    %v724 = vpop.f32.mrb[0].mxu0
    %v725 = vadd.f32 %v652, %v724
    %v726 = vpop.f32.mrb[0].mxu0
    %727 = vmatprep.mubr.f32.mxu0 0.0
    %728 = vmatmul.mubr.f32.gmra.mrb[0].mxu0 %v460
    %v729 = vpop.f32.mrb[0].mxu0
    %v730 = vadd.f32 %v652, %v729
    %v731 = vpop.f32.mrb[0].mxu0
    %732 = vmatprep.mubr.f32.mxu0 0.0
    %733 = vmatmul.mubr.f32.gmra.mrb[0].mxu0 %v463
    %v734 = vpop.f32.mrb[0].mxu0
    %v735 = vadd.f32 %v652, %v734
    %v736 = vpop.f32.mrb[0].mxu0
    %737 = vdwg.mxu0
    %v738 = vld [vmem:[%s4] sm:$0xff]
    %v739 = vld [vmem:[%s4 + $0x8] sm:$0xff]
    %v740 = vld [vmem:[%s4 + $0x10] sm:$0xff]
    %v741 = vld [vmem:[%s4 + $0x18] sm:$0xff]
    %v742 = vld [vmem:[%s4 + $0x20] sm:$0xff]
    %v743 = vld [vmem:[%s4 + $0x28] sm:$0xff]
    %v744 = vld [vmem:[%s4 + $0x30] sm:$0xff]
    %v745 = vld [vmem:[%s4 + $0x38] sm:$0xff]
    %v746 = vld [vmem:[%s4 + $0x40] sm:$0xff]
    %v747 = vld [vmem:[%s4 + $0x48] sm:$0xff]
    %v748 = vld [vmem:[%s4 + $0x50] sm:$0xff]
    %v749 = vld [vmem:[%s4 + $0x58] sm:$0xff]
    %v750 = vld [vmem:[%s4 + $0x60] sm:$0xff]
    %v751 = vld [vmem:[%s4 + $0x68] sm:$0xff]
    %v752 = vld [vmem:[%s4 + $0x70] sm:$0xff]
    %v753 = vld [vmem:[%s4 + $0x78] sm:$0xff]
    %v754 = vmul.f32 %v626, %v738
    %v755 = vmul.f32 %v631, %v739
    %v756 = vmul.f32 %v636, %v740
    %v757 = vmul.f32 %v641, %v741
    %v758 = vmul.f32 %v626, %v742
    %v759 = vmul.f32 %v631, %v743
    %v760 = vmul.f32 %v636, %v744
    %v761 = vmul.f32 %v641, %v745
    %v762 = vmul.f32 %v626, %v746
    %v763 = vmul.f32 %v631, %v747
    %v764 = vmul.f32 %v636, %v748
    %v765 = vmul.f32 %v641, %v749
    %v766 = vmul.f32 %v626, %v750
    %v767 = vmul.f32 %v631, %v751
    %v768 = vmul.f32 %v636, %v752
    %v769 = vmul.f32 %v641, %v753
    %v770 = vmul.f32 %v720, %v738
    %v771 = vmul.f32 %v725, %v739
    %v772 = vmul.f32 %v730, %v740
    %v773 = vmul.f32 %v735, %v741
    %v774 = vmul.f32 %v720, %v742
    %v775 = vmul.f32 %v725, %v743
    %v776 = vmul.f32 %v730, %v744
    %v777 = vmul.f32 %v735, %v745
    %v778 = vmul.f32 %v720, %v746
    %v779 = vmul.f32 %v725, %v747
    %v780 = vmul.f32 %v730, %v748
    %v781 = vmul.f32 %v735, %v749
    %v782 = vmul.f32 %v720, %v750
    %v783 = vmul.f32 %v725, %v751
    %v784 = vmul.f32 %v730, %v752
    %v785 = vmul.f32 %v735, %v753
    %v786 = vld [vmem:[#allocation5 + $0x8] sm:$0x1]
    %v787 = vlaneseq
    %v788 = vshrl.u32 %v787, 7
    %v789 = vsub.s32 0, %v788
    %v790 = vrot.slane %v786, %v789
    %v791 = vadd.f32 %v532, %v790
    %v792 = vadd.f32 %v537, %v790
    %v793 = vadd.f32 %v542, %v790
    %v794 = vadd.f32 %v547, %v790
    %v795 = vld [vmem:[#allocation5 + $0x9] sm:$0x1]
    %v796 = vlaneseq
    %v797 = vshrl.u32 %v796, 7
    %v798 = vsub.s32 0, %v797
    %v799 = vrot.slane %v795, %v798
    %v800 = vadd.f32 %v532, %v799
    %v801 = vadd.f32 %v537, %v799
    %v802 = vadd.f32 %v542, %v799
    %v803 = vadd.f32 %v547, %v799
    %v804 = vld [vmem:[%s1 + $0x40] sm:$0xff]
    %v805 = vld [vmem:[%s1 + $0x48] sm:$0xff]
    %v806 = vld [vmem:[%s1 + $0x50] sm:$0xff]
    %v807 = vld [vmem:[%s1 + $0x58] sm:$0xff]
    %v809 = vsel %vm59, %v800, 0
    %v812 = vsel %vm59, %v801, 0
    %v815 = vsel %vm59, %v802, 0
    %v818 = vsel %vm59, %v803, 0
    %820 = vmatprep.subr.mxu0 0.0
    %821 = vmatpush1.msra.mxu0 %v804
    %822 = vmatprep.subr.mxu0 0.0
    %823 = vmatpush1.msra.mxu0 %v805
    %824 = vmatprep.subr.mxu0 0.0
    %825 = vmatpush1.msra.mxu0 %v806
    %826 = vmatprep.subr.mxu0 0.0
    %827 = vmatpush1.msra.mxu0 %v807
    %828 = vmatprep.subr.mxu0 0.0
    %829 = vmatpush1.msra.mxu0 0.0
    %830 = vmatprep.subr.mxu0 0.0
    %831 = vmatpush1.msra.mxu0 0.0
    %832 = vmatprep.subr.mxu0 0.0
    %833 = vmatpush1.msra.mxu0 0.0
    %834 = vmatprep.subr.mxu0 0.0
    %835 = vmatpush1.msra.mxu0 0.0
    %836 = vmatprep.subr.mxu0 0.0
    %837 = vmatpush1.msra.mxu0 0.0
    %838 = vmatprep.subr.mxu0 0.0
    %839 = vmatpush1.msra.mxu0 0.0
    %840 = vmatprep.subr.mxu0 0.0
    %841 = vmatpush1.msra.mxu0 0.0
    %842 = vmatprep.subr.mxu0 0.0
    %843 = vmatpush1.msra.mxu0 0.0
    %844 = vmatprep.subr.mxu0 0.0
    %845 = vmatpush1.msra.mxu0 0.0
    %846 = vmatprep.subr.mxu0 0.0
    %847 = vmatpush1.msra.mxu0 0.0
    %848 = vmatprep.subr.mxu0 0.0
    %849 = vmatpush1.msra.mxu0 0.0
    %850 = vmatprep.subr.mxu0 0.0
    %851 = vmatpush1.msra.mxu0 0.0
    %852 = vmatprep.subr.mxu0 0.0
    %853 = vmatpush1.msra.mxu0 0.0
    %854 = vmatprep.subr.mxu0 0.0
    %855 = vmatpush1.msra.mxu0 0.0
    %856 = vmatprep.subr.mxu0 0.0
    %857 = vmatpush1.msra.mxu0 0.0
    %858 = vmatprep.subr.mxu0 0.0
    %859 = vmatpush1.msra.mxu0 0.0
    %860 = vmatprep.subr.mxu0 0.0
    %861 = vmatpush1.msra.mxu0 0.0
    %862 = vmatprep.subr.mxu0 0.0
    %863 = vmatpush1.msra.mxu0 0.0
    %864 = vmatprep.subr.mxu0 0.0
    %865 = vmatpush1.msra.mxu0 0.0
    %866 = vmatprep.subr.mxu0 0.0
    %867 = vmatpush1.msra.mxu0 0.0
    %868 = vmatprep.subr.mxu0 0.0
    %869 = vmatpush1.msra.mxu0 0.0
    %870 = vmatprep.subr.mxu0 0.0
    %871 = vmatpush1.msra.mxu0 0.0
    %872 = vmatprep.subr.mxu0 0.0
    %873 = vmatpush1.msra.mxu0 0.0
    %874 = vmatprep.subr.mxu0 0.0
    %875 = vmatpush1.msra.mxu0 0.0
    %876 = vmatprep.subr.mxu0 0.0
    %877 = vmatpush1.msra.mxu0 0.0
    %878 = vmatprep.subr.mxu0 0.0
    %879 = vmatpush1.msra.mxu0 0.0
    %880 = vmatprep.subr.mxu0 0.0
    %881 = vmatpush1.msra.mxu0 0.0
    %882 = vmatprep.subr.mxu0 0.0
    %883 = vmatpush1.msra.mxu0 0.0
    %884 = vmatprep.mubr.f32.mxu0 0.0
    %885 = vmatmul.mubr.f32.gmra.mrb[0].mxu0 %v809
    %v886 = vpop.f32.mrb[0].mxu0
    %v887 = vadd.f32 0.0, %v886
    %v888 = vpop.f32.mrb[0].mxu0
    %889 = vmatprep.mubr.f32.mxu0 0.0
    %890 = vmatmul.mubr.f32.gmra.mrb[0].mxu0 %v812
    %v891 = vpop.f32.mrb[0].mxu0
    %v892 = vadd.f32 0.0, %v891
    %v893 = vpop.f32.mrb[0].mxu0
    %894 = vmatprep.mubr.f32.mxu0 0.0
    %895 = vmatmul.mubr.f32.gmra.mrb[0].mxu0 %v815
    %v896 = vpop.f32.mrb[0].mxu0
    %v897 = vadd.f32 0.0, %v896
    %v898 = vpop.f32.mrb[0].mxu0
    %899 = vmatprep.mubr.f32.mxu0 0.0
    %900 = vmatmul.mubr.f32.gmra.mrb[0].mxu0 %v818
    %v901 = vpop.f32.mrb[0].mxu0
    %v902 = vadd.f32 0.0, %v901
    %v903 = vpop.f32.mrb[0].mxu0
    %904 = vdwg.mxu0
    %v905 = vld [vmem:[%s5 + $0x60] sm:$0xff]
    %v906 = vld [vmem:[%s5 + $0x68] sm:$0xff]
    %v907 = vld [vmem:[%s5 + $0x70] sm:$0xff]
    %v908 = vld [vmem:[%s5 + $0x78] sm:$0xff]
    %909 = vrot.lane.b32.xlu0 %v887, 1
    %v910 = vpop.permute.xlu0 %909
    %911 = vrot.lane.b32.xlu0 %v892, 1
    %v912 = vpop.permute.xlu0 %911
    %913 = vrot.lane.b32.xlu0 %v897, 1
    %v914 = vpop.permute.xlu0 %913
    %915 = vrot.lane.b32.xlu0 %v902, 1
    %v916 = vpop.permute.xlu0 %915
    %917 = vrot.lane.b32.xlu0 %v887, 97
    %v918 = vpop.permute.xlu0 %917
    %919 = vrot.lane.b32.xlu0 %v892, 97
    %v920 = vpop.permute.xlu0 %919
    %921 = vrot.lane.b32.xlu0 %v897, 97
    %v922 = vpop.permute.xlu0 %921
    %923 = vrot.lane.b32.xlu0 %v902, 97
    %v924 = vpop.permute.xlu0 %923
    %vm925 = vcmp.gt.f32.partialorder %v905, 1.5
    %vm926 = vcmp.gt.f32.partialorder %v906, 1.5
    %vm927 = vcmp.gt.f32.partialorder %v907, 1.5
    %vm928 = vcmp.gt.f32.partialorder %v908, 1.5
    %vm929 = vcmp.gt.f32.partialorder %v905, 0.5
    %vm930 = vcmp.gt.f32.partialorder %v906, 0.5
    %vm931 = vcmp.gt.f32.partialorder %v907, 0.5
    %vm932 = vcmp.gt.f32.partialorder %v908, 0.5
    %v933 = vsel %vm929, %v910, %v887
    %v934 = vsel %vm930, %v912, %v892
    %v935 = vsel %vm931, %v914, %v897
    %v936 = vsel %vm932, %v916, %v902
    %v937 = vsel %vm925, %v918, %v933
    %v938 = vsel %vm926, %v920, %v934
    %v939 = vsel %vm927, %v922, %v935
    %v940 = vsel %vm928, %v924, %v936
    %v941 = vld [vmem:[%s5 + $0x80] sm:$0xff]
    %v942 = vld [vmem:[%s5 + $0x88] sm:$0xff]
    %v943 = vld [vmem:[%s5 + $0x90] sm:$0xff]
    %v944 = vld [vmem:[%s5 + $0x98] sm:$0xff]
    %945 = vrot.lane.b32.xlu0 %v937, 2
    %v946 = vpop.permute.xlu0 %945
    %947 = vrot.lane.b32.xlu0 %v938, 2
    %v948 = vpop.permute.xlu0 %947
    %949 = vrot.lane.b32.xlu0 %v939, 2
    %v950 = vpop.permute.xlu0 %949
    %951 = vrot.lane.b32.xlu0 %v940, 2
    %v952 = vpop.permute.xlu0 %951
    %953 = vrot.lane.b32.xlu0 %v937, 98
    %v954 = vpop.permute.xlu0 %953
    %955 = vrot.lane.b32.xlu0 %v938, 98
    %v956 = vpop.permute.xlu0 %955
    %957 = vrot.lane.b32.xlu0 %v939, 98
    %v958 = vpop.permute.xlu0 %957
    %959 = vrot.lane.b32.xlu0 %v940, 98
    %v960 = vpop.permute.xlu0 %959
    %vm961 = vcmp.gt.f32.partialorder %v941, 1.5
    %vm962 = vcmp.gt.f32.partialorder %v942, 1.5
    %vm963 = vcmp.gt.f32.partialorder %v943, 1.5
    %vm964 = vcmp.gt.f32.partialorder %v944, 1.5
    %vm965 = vcmp.gt.f32.partialorder %v941, 0.5
    %vm966 = vcmp.gt.f32.partialorder %v942, 0.5
    %vm967 = vcmp.gt.f32.partialorder %v943, 0.5
    %vm968 = vcmp.gt.f32.partialorder %v944, 0.5
    %v969 = vsel %vm965, %v946, %v937
    %v970 = vsel %vm966, %v948, %v938
    %v971 = vsel %vm967, %v950, %v939
    %v972 = vsel %vm968, %v952, %v940
    %v973 = vsel %vm961, %v954, %v969
    %v974 = vsel %vm962, %v956, %v970
    %v975 = vsel %vm963, %v958, %v971
    %v976 = vsel %vm964, %v960, %v972
    %v977 = vld [vmem:[%s5 + $0xa0] sm:$0xff]
    %v978 = vld [vmem:[%s5 + $0xa8] sm:$0xff]
    %v979 = vld [vmem:[%s5 + $0xb0] sm:$0xff]
    %v980 = vld [vmem:[%s5 + $0xb8] sm:$0xff]
    %981 = vrot.lane.b32.xlu0 %v973, 4
    %v982 = vpop.permute.xlu0 %981
    %983 = vrot.lane.b32.xlu0 %v974, 4
    %v984 = vpop.permute.xlu0 %983
    %985 = vrot.lane.b32.xlu0 %v975, 4
    %v986 = vpop.permute.xlu0 %985
    %987 = vrot.lane.b32.xlu0 %v976, 4
    %v988 = vpop.permute.xlu0 %987
    %989 = vrot.lane.b32.xlu0 %v973, 100
    %v990 = vpop.permute.xlu0 %989
    %991 = vrot.lane.b32.xlu0 %v974, 100
    %v992 = vpop.permute.xlu0 %991
    %993 = vrot.lane.b32.xlu0 %v975, 100
    %v994 = vpop.permute.xlu0 %993
    %995 = vrot.lane.b32.xlu0 %v976, 100
    %v996 = vpop.permute.xlu0 %995
    %vm997 = vcmp.gt.f32.partialorder %v977, 1.5
    %vm998 = vcmp.gt.f32.partialorder %v978, 1.5
    %vm999 = vcmp.gt.f32.partialorder %v979, 1.5
    %vm1000 = vcmp.gt.f32.partialorder %v980, 1.5
    %vm1001 = vcmp.gt.f32.partialorder %v977, 0.5
    %vm1002 = vcmp.gt.f32.partialorder %v978, 0.5
    %vm1003 = vcmp.gt.f32.partialorder %v979, 0.5
    %vm1004 = vcmp.gt.f32.partialorder %v980, 0.5
    %v1005 = vsel %vm1001, %v982, %v973
    %v1006 = vsel %vm1002, %v984, %v974
    %v1007 = vsel %vm1003, %v986, %v975
    %v1008 = vsel %vm1004, %v988, %v976
    %v1009 = vsel %vm997, %v990, %v1005
    %v1010 = vsel %vm998, %v992, %v1006
    %v1011 = vsel %vm999, %v994, %v1007
    %v1012 = vsel %vm1000, %v996, %v1008
    %v1013 = vld [vmem:[%s5 + $0xc0] sm:$0xff]
    %v1014 = vld [vmem:[%s5 + $0xc8] sm:$0xff]
    %v1015 = vld [vmem:[%s5 + $0xd0] sm:$0xff]
    %v1016 = vld [vmem:[%s5 + $0xd8] sm:$0xff]
    %1017 = vrot.lane.b32.xlu0 %v1009, 8
    %v1018 = vpop.permute.xlu0 %1017
    %1019 = vrot.lane.b32.xlu0 %v1010, 8
    %v1020 = vpop.permute.xlu0 %1019
    %1021 = vrot.lane.b32.xlu0 %v1011, 8
    %v1022 = vpop.permute.xlu0 %1021
    %1023 = vrot.lane.b32.xlu0 %v1012, 8
    %v1024 = vpop.permute.xlu0 %1023
    %1025 = vrot.lane.b32.xlu0 %v1009, 104
    %v1026 = vpop.permute.xlu0 %1025
    %1027 = vrot.lane.b32.xlu0 %v1010, 104
    %v1028 = vpop.permute.xlu0 %1027
    %1029 = vrot.lane.b32.xlu0 %v1011, 104
    %v1030 = vpop.permute.xlu0 %1029
    %1031 = vrot.lane.b32.xlu0 %v1012, 104
    %v1032 = vpop.permute.xlu0 %1031
    %vm1033 = vcmp.gt.f32.partialorder %v1013, 1.5
    %vm1034 = vcmp.gt.f32.partialorder %v1014, 1.5
    %vm1035 = vcmp.gt.f32.partialorder %v1015, 1.5
    %vm1036 = vcmp.gt.f32.partialorder %v1016, 1.5
    %vm1037 = vcmp.gt.f32.partialorder %v1013, 0.5
    %vm1038 = vcmp.gt.f32.partialorder %v1014, 0.5
    %vm1039 = vcmp.gt.f32.partialorder %v1015, 0.5
    %vm1040 = vcmp.gt.f32.partialorder %v1016, 0.5
    %v1041 = vsel %vm1037, %v1018, %v1009
    %v1042 = vsel %vm1038, %v1020, %v1010
    %v1043 = vsel %vm1039, %v1022, %v1011
    %v1044 = vsel %vm1040, %v1024, %v1012
    %v1045 = vsel %vm1033, %v1026, %v1041
    %v1046 = vsel %vm1034, %v1028, %v1042
    %v1047 = vsel %vm1035, %v1030, %v1043
    %v1048 = vsel %vm1036, %v1032, %v1044
    %v1049 = vrot.slane %v1045, 1
    %v1050 = vrot.slane %v1046, 1
    %v1051 = vrot.slane %v1047, 1
    %v1052 = vrot.slane %v1048, 1
    %v1053 = vlaneseq
    %v1054 = vshrl.u32 %v1053, 7
    %vm1055 = vcmp.lt.s32.totalorder %v1054, 7
    %v1056 = vsel %vm1055, %v1051, %v1052
    %v1057 = vsel %vm1055, %v1050, %v1051
    %v1058 = vsel %vm1055, %v1049, %v1050
    %v1059 = vsel %vm1055, %v1052, %v1049
    %v1060 = vld [vmem:[%s5] sm:$0xff]
    %v1061 = vld [vmem:[%s5 + $0x8] sm:$0xff]
    %v1062 = vld [vmem:[%s5 + $0x10] sm:$0xff]
    %v1063 = vld [vmem:[%s5 + $0x18] sm:$0xff]
    %v1064 = vmul.f32 %v1060, %v1045
    %v1065 = vmul.f32 %v1061, %v1046
    %v1066 = vmul.f32 %v1062, %v1047
    %v1067 = vmul.f32 %v1063, %v1048
    %v1068 = vld [vmem:[%s5 + $0x20] sm:$0xff]
    %v1069 = vld [vmem:[%s5 + $0x28] sm:$0xff]
    %v1070 = vld [vmem:[%s5 + $0x30] sm:$0xff]
    %v1071 = vld [vmem:[%s5 + $0x38] sm:$0xff]
    %v1072 = vmul.f32 %v1068, %v1058
    %v1073 = vmul.f32 %v1069, %v1057
    %v1074 = vmul.f32 %v1070, %v1056
    %v1075 = vmul.f32 %v1071, %v1059
    %v1076 = vadd.f32 %v1064, %v1072
    %v1077 = vadd.f32 %v1065, %v1073
    %v1078 = vadd.f32 %v1066, %v1074
    %v1079 = vadd.f32 %v1067, %v1075
    %v1081 = vsel %vm59, %v791, 0
    %v1084 = vsel %vm59, %v792, 0
    %v1087 = vsel %vm59, %v793, 0
    %v1090 = vsel %vm59, %v794, 0
    %v1093 = vsel %vm59, %v754, 0
    %v1096 = vsel %vm59, %v755, 0
    %v1099 = vsel %vm59, %v756, 0
    %v1102 = vsel %vm59, %v757, 0
    %v1105 = vsel %vm59, %v758, 0
    %v1108 = vsel %vm59, %v759, 0
    %v1111 = vsel %vm59, %v760, 0
    %v1114 = vsel %vm59, %v761, 0
    %v1117 = vsel %vm59, %v762, 0
    %v1120 = vsel %vm59, %v763, 0
    %v1123 = vsel %vm59, %v764, 0
    %v1126 = vsel %vm59, %v765, 0
    %v1129 = vsel %vm59, %v766, 0
    %v1132 = vsel %vm59, %v767, 0
    %v1135 = vsel %vm59, %v768, 0
    %v1138 = vsel %vm59, %v769, 0
    %1140 = vmatprep.subr.mxu0 0.0
    %1141 = vmatpush1.xpose.msra.mxu0 %v1093
    %1142 = vmatprep.subr.mxu0 0.0
    %1143 = vmatpush1.xpose.msra.mxu0 %v1096
    %1144 = vmatprep.subr.mxu0 0.0
    %1145 = vmatpush1.xpose.msra.mxu0 %v1099
    %1146 = vmatprep.subr.mxu0 0.0
    %1147 = vmatpush1.xpose.msra.mxu0 %v1102
    %1148 = vmatprep.subr.mxu0 0.0
    %1149 = vmatpush1.xpose.msra.mxu0 %v1105
    %1150 = vmatprep.subr.mxu0 0.0
    %1151 = vmatpush1.xpose.msra.mxu0 %v1108
    %1152 = vmatprep.subr.mxu0 0.0
    %1153 = vmatpush1.xpose.msra.mxu0 %v1111
    %1154 = vmatprep.subr.mxu0 0.0
    %1155 = vmatpush1.xpose.msra.mxu0 %v1114
    %1156 = vmatprep.subr.mxu0 0.0
    %1157 = vmatpush1.xpose.msra.mxu0 %v1117
    %1158 = vmatprep.subr.mxu0 0.0
    %1159 = vmatpush1.xpose.msra.mxu0 %v1120
    %1160 = vmatprep.subr.mxu0 0.0
    %1161 = vmatpush1.xpose.msra.mxu0 %v1123
    %1162 = vmatprep.subr.mxu0 0.0
    %1163 = vmatpush1.xpose.msra.mxu0 %v1126
    %1164 = vmatprep.subr.mxu0 0.0
    %1165 = vmatpush1.xpose.msra.mxu0 %v1129
    %1166 = vmatprep.subr.mxu0 0.0
    %1167 = vmatpush1.xpose.msra.mxu0 %v1132
    %1168 = vmatprep.subr.mxu0 0.0
    %1169 = vmatpush1.xpose.msra.mxu0 %v1135
    %1170 = vmatprep.subr.mxu0 0.0
    %1171 = vmatpush1.xpose.msra.mxu0 %v1138
    %1172 = vmatprep.subr.mxu0 0.0
    %1173 = vmatpush1.xpose.msra.mxu0 0.0
    %1174 = vmatprep.subr.mxu0 0.0
    %1175 = vmatpush1.xpose.msra.mxu0 0.0
    %1176 = vmatprep.subr.mxu0 0.0
    %1177 = vmatpush1.xpose.msra.mxu0 0.0
    %1178 = vmatprep.subr.mxu0 0.0
    %1179 = vmatpush1.xpose.msra.mxu0 0.0
    %1180 = vmatprep.subr.mxu0 0.0
    %1181 = vmatpush1.xpose.msra.mxu0 0.0
    %1182 = vmatprep.subr.mxu0 0.0
    %1183 = vmatpush1.xpose.msra.mxu0 0.0
    %1184 = vmatprep.subr.mxu0 0.0
    %1185 = vmatpush1.xpose.msra.mxu0 0.0
    %1186 = vmatprep.subr.mxu0 0.0
    %1187 = vmatpush1.xpose.msra.mxu0 0.0
    %1188 = vmatprep.subr.mxu0 0.0
    %1189 = vmatpush1.xpose.msra.mxu0 0.0
    %1190 = vmatprep.subr.mxu0 0.0
    %1191 = vmatpush1.xpose.msra.mxu0 0.0
    %1192 = vmatprep.subr.mxu0 0.0
    %1193 = vmatpush1.xpose.msra.mxu0 0.0
    %1194 = vmatprep.subr.mxu0 0.0
    %1195 = vmatpush1.xpose.msra.mxu0 0.0
    %1196 = vmatprep.subr.mxu0 0.0
    %1197 = vmatpush1.xpose.msra.mxu0 0.0
    %1198 = vmatprep.subr.mxu0 0.0
    %1199 = vmatpush1.xpose.msra.mxu0 0.0
    %1200 = vmatprep.subr.mxu0 0.0
    %1201 = vmatpush1.xpose.msra.mxu0 0.0
    %1202 = vmatprep.subr.mxu0 0.0
    %1203 = vmatpush1.xpose.msra.mxu0 0.0
    %1204 = vmatprep.mubr.f32.mxu0 0.0
    %1205 = vmatmul.mubr.f32.gmra.mrb[0].mxu0 %v1081
    %v1206 = vpop.f32.mrb[0].mxu0
    %v1207 = vadd.f32 %v1076, %v1206
    %v1208 = vpop.f32.mrb[0].mxu0
    %1209 = vmatprep.mubr.f32.mxu0 0.0
    %1210 = vmatmul.mubr.f32.gmra.mrb[0].mxu0 %v1084
    %v1211 = vpop.f32.mrb[0].mxu0
    %v1212 = vadd.f32 %v1077, %v1211
    %v1213 = vpop.f32.mrb[0].mxu0
    %1214 = vmatprep.mubr.f32.mxu0 0.0
    %1215 = vmatmul.mubr.f32.gmra.mrb[0].mxu0 %v1087
    %v1216 = vpop.f32.mrb[0].mxu0
    %v1217 = vadd.f32 %v1078, %v1216
    %v1218 = vpop.f32.mrb[0].mxu0
    %1219 = vmatprep.mubr.f32.mxu0 0.0
    %1220 = vmatmul.mubr.f32.gmra.mrb[0].mxu0 %v1090
    %v1221 = vpop.f32.mrb[0].mxu0
    %v1222 = vadd.f32 %v1079, %v1221
    %v1223 = vpop.f32.mrb[0].mxu0
    %1224 = vdwg.mxu0
    %v1225 = vmul.f32 %v1207, 0.17677669
    %v1226 = vmul.f32 %v1212, 0.17677669
    %v1227 = vmul.f32 %v1217, 0.17677669
    %v1228 = vmul.f32 %v1222, 0.17677669
    %1229 = vmax.xlane.f32.xlu0 %v1225
    %v1230 = vpop.xlane.xlu0 %1229
    %1231 = vmax.xlane.f32.xlu0 %v1226
    %v1232 = vpop.xlane.xlu0 %1231
    %1233 = vmax.xlane.f32.xlu0 %v1227
    %v1234 = vpop.xlane.xlu0 %1233
    %1235 = vmax.xlane.f32.xlu0 %v1228
    %v1236 = vpop.xlane.xlu0 %1235
    %v1237 = vsub.f32 %v1225, %v1230
    %v1238 = vsub.f32 %v1226, %v1232
    %v1239 = vsub.f32 %v1227, %v1234
    %v1240 = vsub.f32 %v1228, %v1236
    %v1241 = vmul.f32 %v1237, 1.442695
    %v1242 = vpow.pop %v1241
    %v1243 = vmul.f32 %v1238, 1.442695
    %v1244 = vpow.pop %v1243
    %v1245 = vmul.f32 %v1239, 1.442695
    %v1246 = vpow.pop %v1245
    %v1247 = vmul.f32 %v1240, 1.442695
    %v1248 = vpow.pop %v1247
    %v1249 = vld [vmem:[%s5 + $0x40] sm:$0xff]
    %v1250 = vld [vmem:[%s5 + $0x48] sm:$0xff]
    %v1251 = vld [vmem:[%s5 + $0x50] sm:$0xff]
    %v1252 = vld [vmem:[%s5 + $0x58] sm:$0xff]
    %v1253 = vmul.f32 %v1242, %v1249
    %v1254 = vmul.f32 %v1244, %v1250
    %v1255 = vmul.f32 %v1246, %v1251
    %v1256 = vmul.f32 %v1248, %v1252
    %v1257 = vld [vmem:[%s3 + $0xe0] sm:$0xff]
    %v1258 = vld [vmem:[%s3 + $0xe8] sm:$0xff]
    %v1259 = vld [vmem:[%s3 + $0xf0] sm:$0xff]
    %v1260 = vld [vmem:[%s3 + $0xf8] sm:$0xff]
    %v1261 = vld [vmem:[%s3 + $0x100] sm:$0xff]
    %v1262 = vld [vmem:[%s3 + $0x108] sm:$0xff]
    %v1263 = vld [vmem:[%s3 + $0x110] sm:$0xff]
    %v1264 = vld [vmem:[%s3 + $0x118] sm:$0xff]
    %v1265 = vld [vmem:[%s3 + $0x120] sm:$0xff]
    %v1266 = vld [vmem:[%s3 + $0x128] sm:$0xff]
    %v1267 = vld [vmem:[%s3 + $0x130] sm:$0xff]
    %v1268 = vld [vmem:[%s3 + $0x138] sm:$0xff]
    %v1269 = vld [vmem:[%s3 + $0x140] sm:$0xff]
    %v1270 = vld [vmem:[%s3 + $0x148] sm:$0xff]
    %v1271 = vld [vmem:[%s3 + $0x150] sm:$0xff]
    %v1272 = vld [vmem:[%s3 + $0x158] sm:$0xff]
    %1273 = vmatprep.subr.mxu0 0.0
    %1274 = vmatpush1.msra.mxu0 %v1257
    %1275 = vmatprep.subr.mxu0 0.0
    %1276 = vmatpush1.msra.mxu0 %v1258
    %1277 = vmatprep.subr.mxu0 0.0
    %1278 = vmatpush1.msra.mxu0 %v1259
    %1279 = vmatprep.subr.mxu0 0.0
    %1280 = vmatpush1.msra.mxu0 %v1260
    %1281 = vmatprep.subr.mxu0 0.0
    %1282 = vmatpush1.msra.mxu0 %v1261
    %1283 = vmatprep.subr.mxu0 0.0
    %1284 = vmatpush1.msra.mxu0 %v1262
    %1285 = vmatprep.subr.mxu0 0.0
    %1286 = vmatpush1.msra.mxu0 %v1263
    %1287 = vmatprep.subr.mxu0 0.0
    %1288 = vmatpush1.msra.mxu0 %v1264
    %1289 = vmatprep.subr.mxu0 0.0
    %1290 = vmatpush1.msra.mxu0 %v1265
    %1291 = vmatprep.subr.mxu0 0.0
    %1292 = vmatpush1.msra.mxu0 %v1266
    %1293 = vmatprep.subr.mxu0 0.0
    %1294 = vmatpush1.msra.mxu0 %v1267
    %1295 = vmatprep.subr.mxu0 0.0
    %1296 = vmatpush1.msra.mxu0 %v1268
    %1297 = vmatprep.subr.mxu0 0.0
    %1298 = vmatpush1.msra.mxu0 %v1269
    %1299 = vmatprep.subr.mxu0 0.0
    %1300 = vmatpush1.msra.mxu0 %v1270
    %1301 = vmatprep.subr.mxu0 0.0
    %1302 = vmatpush1.msra.mxu0 %v1271
    %1303 = vmatprep.subr.mxu0 0.0
    %1304 = vmatpush1.msra.mxu0 %v1272
    %1305 = vmatprep.subr.mxu0 0.0
    %1306 = vmatpush1.msra.mxu0 0.0
    %1307 = vmatprep.subr.mxu0 0.0
    %1308 = vmatpush1.msra.mxu0 0.0
    %1309 = vmatprep.subr.mxu0 0.0
    %1310 = vmatpush1.msra.mxu0 0.0
    %1311 = vmatprep.subr.mxu0 0.0
    %1312 = vmatpush1.msra.mxu0 0.0
    %1313 = vmatprep.subr.mxu0 0.0
    %1314 = vmatpush1.msra.mxu0 0.0
    %1315 = vmatprep.subr.mxu0 0.0
    %1316 = vmatpush1.msra.mxu0 0.0
    %1317 = vmatprep.subr.mxu0 0.0
    %1318 = vmatpush1.msra.mxu0 0.0
    %1319 = vmatprep.subr.mxu0 0.0
    %1320 = vmatpush1.msra.mxu0 0.0
    %1321 = vmatprep.subr.mxu0 0.0
    %1322 = vmatpush1.msra.mxu0 0.0
    %1323 = vmatprep.subr.mxu0 0.0
    %1324 = vmatpush1.msra.mxu0 0.0
    %1325 = vmatprep.subr.mxu0 0.0
    %1326 = vmatpush1.msra.mxu0 0.0
    %1327 = vmatprep.subr.mxu0 0.0
    %1328 = vmatpush1.msra.mxu0 0.0
    %1329 = vmatprep.subr.mxu0 0.0
    %1330 = vmatpush1.msra.mxu0 0.0
    %1331 = vmatprep.subr.mxu0 0.0
    %1332 = vmatpush1.msra.mxu0 0.0
    %1333 = vmatprep.subr.mxu0 0.0
    %1334 = vmatpush1.msra.mxu0 0.0
    %1335 = vmatprep.subr.mxu0 0.0
    %1336 = vmatpush1.msra.mxu0 0.0
    %1337 = vmatprep.mubr.f32.mxu0 0.0
    %1338 = vmatmul.mubr.f32.gmra.mrb[0].mxu0 %v1253
    %v1339 = vpop.f32.mrb[0].mxu0
    %v1340 = vadd.f32 0.0, %v1339
    %v1341 = vpop.f32.mrb[0].mxu0
    %1342 = vmatprep.mubr.f32.mxu0 0.0
    %1343 = vmatmul.mubr.f32.gmra.mrb[0].mxu0 %v1254
    %v1344 = vpop.f32.mrb[0].mxu0
    %v1345 = vadd.f32 0.0, %v1344
    %v1346 = vpop.f32.mrb[0].mxu0
    %1347 = vmatprep.mubr.f32.mxu0 0.0
    %1348 = vmatmul.mubr.f32.gmra.mrb[0].mxu0 %v1255
    %v1349 = vpop.f32.mrb[0].mxu0
    %v1350 = vadd.f32 0.0, %v1349
    %v1351 = vpop.f32.mrb[0].mxu0
    %1352 = vmatprep.mubr.f32.mxu0 0.0
    %1353 = vmatmul.mubr.f32.gmra.mrb[0].mxu0 %v1256
    %v1354 = vpop.f32.mrb[0].mxu0
    %v1355 = vadd.f32 0.0, %v1354
    %v1356 = vpop.f32.mrb[0].mxu0
    %1357 = vdwg.mxu0
    %v1358 = vrcp.pop %v1340
    %v1359 = vrcp.pop %v1345
    %v1360 = vrcp.pop %v1350
    %v1361 = vrcp.pop %v1355
    %v1362 = vmul.f32 %v1253, %v1358
    %v1363 = vmul.f32 %v1254, %v1359
    %v1364 = vmul.f32 %v1255, %v1360
    %v1365 = vmul.f32 %v1256, %v1361
    %1366 = vmatprep.subr.mxu0 0.0
    %1367 = vmatpush1.msra.mxu0 %v770
    %1368 = vmatprep.subr.mxu0 0.0
    %1369 = vmatpush1.msra.mxu0 %v771
    %1370 = vmatprep.subr.mxu0 0.0
    %1371 = vmatpush1.msra.mxu0 %v772
    %1372 = vmatprep.subr.mxu0 0.0
    %1373 = vmatpush1.msra.mxu0 %v773
    %1374 = vmatprep.subr.mxu0 0.0
    %1375 = vmatpush1.msra.mxu0 %v774
    %1376 = vmatprep.subr.mxu0 0.0
    %1377 = vmatpush1.msra.mxu0 %v775
    %1378 = vmatprep.subr.mxu0 0.0
    %1379 = vmatpush1.msra.mxu0 %v776
    %1380 = vmatprep.subr.mxu0 0.0
    %1381 = vmatpush1.msra.mxu0 %v777
    %1382 = vmatprep.subr.mxu0 0.0
    %1383 = vmatpush1.msra.mxu0 %v778
    %1384 = vmatprep.subr.mxu0 0.0
    %1385 = vmatpush1.msra.mxu0 %v779
    %1386 = vmatprep.subr.mxu0 0.0
    %1387 = vmatpush1.msra.mxu0 %v780
    %1388 = vmatprep.subr.mxu0 0.0
    %1389 = vmatpush1.msra.mxu0 %v781
    %1390 = vmatprep.subr.mxu0 0.0
    %1391 = vmatpush1.msra.mxu0 %v782
    %1392 = vmatprep.subr.mxu0 0.0
    %1393 = vmatpush1.msra.mxu0 %v783
    %1394 = vmatprep.subr.mxu0 0.0
    %1395 = vmatpush1.msra.mxu0 %v784
    %1396 = vmatprep.subr.mxu0 0.0
    %1397 = vmatpush1.msra.mxu0 %v785
    %1398 = vmatprep.subr.mxu0 0.0
    %1399 = vmatpush1.msra.mxu0 0.0
    %1400 = vmatprep.subr.mxu0 0.0
    %1401 = vmatpush1.msra.mxu0 0.0
    %1402 = vmatprep.subr.mxu0 0.0
    %1403 = vmatpush1.msra.mxu0 0.0
    %1404 = vmatprep.subr.mxu0 0.0
    %1405 = vmatpush1.msra.mxu0 0.0
    %1406 = vmatprep.subr.mxu0 0.0
    %1407 = vmatpush1.msra.mxu0 0.0
    %1408 = vmatprep.subr.mxu0 0.0
    %1409 = vmatpush1.msra.mxu0 0.0
    %1410 = vmatprep.subr.mxu0 0.0
    %1411 = vmatpush1.msra.mxu0 0.0
    %1412 = vmatprep.subr.mxu0 0.0
    %1413 = vmatpush1.msra.mxu0 0.0
    %1414 = vmatprep.subr.mxu0 0.0
    %1415 = vmatpush1.msra.mxu0 0.0
    %1416 = vmatprep.subr.mxu0 0.0
    %1417 = vmatpush1.msra.mxu0 0.0
    %1418 = vmatprep.subr.mxu0 0.0
    %1419 = vmatpush1.msra.mxu0 0.0
    %1420 = vmatprep.subr.mxu0 0.0
    %1421 = vmatpush1.msra.mxu0 0.0
    %1422 = vmatprep.subr.mxu0 0.0
    %1423 = vmatpush1.msra.mxu0 0.0
    %1424 = vmatprep.subr.mxu0 0.0
    %1425 = vmatpush1.msra.mxu0 0.0
    %1426 = vmatprep.subr.mxu0 0.0
    %1427 = vmatpush1.msra.mxu0 0.0
    %1428 = vmatprep.subr.mxu0 0.0
    %1429 = vmatpush1.msra.mxu0 0.0
    %1430 = vmatprep.mubr.f32.mxu0 0.0
    %1431 = vmatmul.mubr.f32.gmra.mrb[0].mxu0 %v1362
    %v1432 = vpop.f32.mrb[0].mxu0
    %v1433 = vadd.f32 0.0, %v1432
    %v1434 = vpop.f32.mrb[0].mxu0
    %1435 = vmatprep.mubr.f32.mxu0 0.0
    %1436 = vmatmul.mubr.f32.gmra.mrb[0].mxu0 %v1363
    %v1437 = vpop.f32.mrb[0].mxu0
    %v1438 = vadd.f32 0.0, %v1437
    %v1439 = vpop.f32.mrb[0].mxu0
    %1440 = vmatprep.mubr.f32.mxu0 0.0
    %1441 = vmatmul.mubr.f32.gmra.mrb[0].mxu0 %v1364
    %v1442 = vpop.f32.mrb[0].mxu0
    %v1443 = vadd.f32 0.0, %v1442
    %v1444 = vpop.f32.mrb[0].mxu0
    %1445 = vmatprep.mubr.f32.mxu0 0.0
    %1446 = vmatmul.mubr.f32.gmra.mrb[0].mxu0 %v1365
    %v1447 = vpop.f32.mrb[0].mxu0
    %v1448 = vadd.f32 0.0, %v1447
    %v1449 = vpop.f32.mrb[0].mxu0
    %1450 = vdwg.mxu0
    %v1451 = vld [vmem:[%s3 + $0x60] sm:$0xff]
    %v1452 = vld [vmem:[%s3 + $0x68] sm:$0xff]
    %v1453 = vld [vmem:[%s3 + $0x70] sm:$0xff]
    %v1454 = vld [vmem:[%s3 + $0x78] sm:$0xff]
    %v1456 = vsel %vm59, %v1433, 0
    %v1459 = vsel %vm59, %v1438, 0
    %v1462 = vsel %vm59, %v1443, 0
    %v1465 = vsel %vm59, %v1448, 0
    %1467 = vmatprep.subr.mxu0 0.0
    %1468 = vmatpush1.msra.mxu0 %v1451
    %1469 = vmatprep.subr.mxu0 0.0
    %1470 = vmatpush1.msra.mxu0 %v1452
    %1471 = vmatprep.subr.mxu0 0.0
    %1472 = vmatpush1.msra.mxu0 %v1453
    %1473 = vmatprep.subr.mxu0 0.0
    %1474 = vmatpush1.msra.mxu0 %v1454
    %1475 = vmatprep.subr.mxu0 0.0
    %1476 = vmatpush1.msra.mxu0 0.0
    %1477 = vmatprep.subr.mxu0 0.0
    %1478 = vmatpush1.msra.mxu0 0.0
    %1479 = vmatprep.subr.mxu0 0.0
    %1480 = vmatpush1.msra.mxu0 0.0
    %1481 = vmatprep.subr.mxu0 0.0
    %1482 = vmatpush1.msra.mxu0 0.0
    %1483 = vmatprep.subr.mxu0 0.0
    %1484 = vmatpush1.msra.mxu0 0.0
    %1485 = vmatprep.subr.mxu0 0.0
    %1486 = vmatpush1.msra.mxu0 0.0
    %1487 = vmatprep.subr.mxu0 0.0
    %1488 = vmatpush1.msra.mxu0 0.0
    %1489 = vmatprep.subr.mxu0 0.0
    %1490 = vmatpush1.msra.mxu0 0.0
    %1491 = vmatprep.subr.mxu0 0.0
    %1492 = vmatpush1.msra.mxu0 0.0
    %1493 = vmatprep.subr.mxu0 0.0
    %1494 = vmatpush1.msra.mxu0 0.0
    %1495 = vmatprep.subr.mxu0 0.0
    %1496 = vmatpush1.msra.mxu0 0.0
    %1497 = vmatprep.subr.mxu0 0.0
    %1498 = vmatpush1.msra.mxu0 0.0
    %1499 = vmatprep.subr.mxu0 0.0
    %1500 = vmatpush1.msra.mxu0 0.0
    %1501 = vmatprep.subr.mxu0 0.0
    %1502 = vmatpush1.msra.mxu0 0.0
    %1503 = vmatprep.subr.mxu0 0.0
    %1504 = vmatpush1.msra.mxu0 0.0
    %1505 = vmatprep.subr.mxu0 0.0
    %1506 = vmatpush1.msra.mxu0 0.0
    %1507 = vmatprep.subr.mxu0 0.0
    %1508 = vmatpush1.msra.mxu0 0.0
    %1509 = vmatprep.subr.mxu0 0.0
    %1510 = vmatpush1.msra.mxu0 0.0
    %1511 = vmatprep.subr.mxu0 0.0
    %1512 = vmatpush1.msra.mxu0 0.0
    %1513 = vmatprep.subr.mxu0 0.0
    %1514 = vmatpush1.msra.mxu0 0.0
    %1515 = vmatprep.subr.mxu0 0.0
    %1516 = vmatpush1.msra.mxu0 0.0
    %1517 = vmatprep.subr.mxu0 0.0
    %1518 = vmatpush1.msra.mxu0 0.0
    %1519 = vmatprep.subr.mxu0 0.0
    %1520 = vmatpush1.msra.mxu0 0.0
    %1521 = vmatprep.subr.mxu0 0.0
    %1522 = vmatpush1.msra.mxu0 0.0
    %1523 = vmatprep.subr.mxu0 0.0
    %1524 = vmatpush1.msra.mxu0 0.0
    %1525 = vmatprep.subr.mxu0 0.0
    %1526 = vmatpush1.msra.mxu0 0.0
    %1527 = vmatprep.subr.mxu0 0.0
    %1528 = vmatpush1.msra.mxu0 0.0
    %1529 = vmatprep.subr.mxu0 0.0
    %1530 = vmatpush1.msra.mxu0 0.0
    %1531 = vmatprep.mubr.f32.mxu0 0.0
    %1532 = vmatmul.mubr.f32.gmra.mrb[0].mxu0 %v1456
    %v1533 = vpop.f32.mrb[0].mxu0
    %v1534 = vadd.f32 0.0, %v1533
    %v1535 = vpop.f32.mrb[0].mxu0
    %1536 = vmatprep.mubr.f32.mxu0 0.0
    %1537 = vmatmul.mubr.f32.gmra.mrb[0].mxu0 %v1459
    %v1538 = vpop.f32.mrb[0].mxu0
    %v1539 = vadd.f32 0.0, %v1538
    %v1540 = vpop.f32.mrb[0].mxu0
    %1541 = vmatprep.mubr.f32.mxu0 0.0
    %1542 = vmatmul.mubr.f32.gmra.mrb[0].mxu0 %v1462
    %v1543 = vpop.f32.mrb[0].mxu0
    %v1544 = vadd.f32 0.0, %v1543
    %v1545 = vpop.f32.mrb[0].mxu0
    %1546 = vmatprep.mubr.f32.mxu0 0.0
    %1547 = vmatmul.mubr.f32.gmra.mrb[0].mxu0 %v1465
    %v1548 = vpop.f32.mrb[0].mxu0
    %v1549 = vadd.f32 0.0, %v1548
    %v1550 = vpop.f32.mrb[0].mxu0
    %1551 = vdwg.mxu0
    %v1552 = vadd.f32 %v375, %v1534
    %v1553 = vadd.f32 %v376, %v1539
    %v1554 = vadd.f32 %v377, %v1544
    %v1555 = vadd.f32 %v378, %v1549
    %v1556 = vld [vmem:[#allocation5 + $0xa] sm:$0x1]
    %v1557 = vlaneseq
    %v1558 = vshrl.u32 %v1557, 7
    %v1559 = vsub.s32 0, %v1558
    %v1560 = vrot.slane %v1556, %v1559
    %v1561 = vadd.f32 %v1552, %v1560
    %v1562 = vadd.f32 %v1553, %v1560
    %v1563 = vadd.f32 %v1554, %v1560
    %v1564 = vadd.f32 %v1555, %v1560
    %v1565 = vsel %vm59, %v1561, 0.0
    %1566 = vadd.xlane.f32.xlu0 %v1565
    %v1567 = vpop.xlane.xlu0 %1566
    %v1568 = vsel %vm59, %v1562, 0.0
    %1569 = vadd.xlane.f32.xlu0 %v1568
    %v1570 = vpop.xlane.xlu0 %1569
    %v1571 = vsel %vm59, %v1563, 0.0
    %1572 = vadd.xlane.f32.xlu0 %v1571
    %v1573 = vpop.xlane.xlu0 %1572
    %v1574 = vsel %vm59, %v1564, 0.0
    %1575 = vadd.xlane.f32.xlu0 %v1574
    %v1576 = vpop.xlane.xlu0 %1575
    %v1577 = vmul.f32 %v1567, %v72
    %v1578 = vmul.f32 %v1570, %v72
    %v1579 = vmul.f32 %v1573, %v72
    %v1580 = vmul.f32 %v1576, %v72
    %v1581 = vsub.f32 %v1561, %v1577
    %v1582 = vsub.f32 %v1562, %v1578
    %v1583 = vsub.f32 %v1563, %v1579
    %v1584 = vsub.f32 %v1564, %v1580
    %v1585 = vmul.f32 %v1581, %v1581
    %v1586 = vmul.f32 %v1582, %v1582
    %v1587 = vmul.f32 %v1583, %v1583
    %v1588 = vmul.f32 %v1584, %v1584
    %v1589 = vsel %vm59, %v1585, 0.0
    %1590 = vadd.xlane.f32.xlu0 %v1589
    %v1591 = vpop.xlane.xlu0 %1590
    %v1592 = vsel %vm59, %v1586, 0.0
    %1593 = vadd.xlane.f32.xlu0 %v1592
    %v1594 = vpop.xlane.xlu0 %1593
    %v1595 = vsel %vm59, %v1587, 0.0
    %1596 = vadd.xlane.f32.xlu0 %v1595
    %v1597 = vpop.xlane.xlu0 %1596
    %v1598 = vsel %vm59, %v1588, 0.0
    %1599 = vadd.xlane.f32.xlu0 %v1598
    %v1600 = vpop.xlane.xlu0 %1599
    %v1601 = vmul.f32 %v1591, %v72
    %v1602 = vmul.f32 %v1594, %v72
    %v1603 = vmul.f32 %v1597, %v72
    %v1604 = vmul.f32 %v1600, %v72
    %v1605 = vadd.f32 %v1601, 1e-05
    %v1606 = vadd.f32 %v1602, 1e-05
    %v1607 = vadd.f32 %v1603, 1e-05
    %v1608 = vadd.f32 %v1604, 1e-05
    %v1609 = vrsqrt.pop %v1605
    %v1610 = vrsqrt.pop %v1606
    %v1611 = vrsqrt.pop %v1607
    %v1612 = vrsqrt.pop %v1608
    %v1613 = vmul.f32 %v1581, %v1609
    %v1614 = vmul.f32 %v1582, %v1610
    %v1615 = vmul.f32 %v1583, %v1611
    %v1616 = vmul.f32 %v1584, %v1612
    %v1617 = vld [vmem:[#allocation5 + $0xb] sm:$0x1]
    %v1618 = vlaneseq
    %v1619 = vshrl.u32 %v1618, 7
    %v1620 = vsub.s32 0, %v1619
    %v1621 = vrot.slane %v1617, %v1620
    %v1622 = vmul.f32 %v1613, %v1621
    %v1623 = vmul.f32 %v1614, %v1621
    %v1624 = vmul.f32 %v1615, %v1621
    %v1625 = vmul.f32 %v1616, %v1621
    %v1626 = vld [vmem:[#allocation5 + $0xc] sm:$0x1]
    %v1627 = vlaneseq
    %v1628 = vshrl.u32 %v1627, 7
    %v1629 = vsub.s32 0, %v1628
    %v1630 = vrot.slane %v1626, %v1629
    %v1631 = vadd.f32 %v1622, %v1630
    %v1632 = vadd.f32 %v1623, %v1630
    %v1633 = vadd.f32 %v1624, %v1630
    %v1634 = vadd.f32 %v1625, %v1630
    %v1635 = vld [vmem:[%s3 + $0x80] sm:$0xff]
    %v1636 = vld [vmem:[%s3 + $0x88] sm:$0xff]
    %v1637 = vld [vmem:[%s3 + $0x90] sm:$0xff]
    %v1638 = vld [vmem:[%s3 + $0x98] sm:$0xff]
    %v1639 = vld [vmem:[#allocation5 + $0xd] sm:$0x1]
    %v1640 = vlaneseq
    %v1641 = vshrl.u32 %v1640, 7
    %v1642 = vsub.s32 0, %v1641
    %v1643 = vrot.slane %v1639, %v1642
    %v1645 = vsel %vm59, %v1631, 0
    %v1648 = vsel %vm59, %v1632, 0
    %v1651 = vsel %vm59, %v1633, 0
    %v1654 = vsel %vm59, %v1634, 0
    %1656 = vmatprep.subr.mxu0 0.0
    %1657 = vmatpush1.msra.mxu0 %v1635
    %1658 = vmatprep.subr.mxu0 0.0
    %1659 = vmatpush1.msra.mxu0 %v1636
    %1660 = vmatprep.subr.mxu0 0.0
    %1661 = vmatpush1.msra.mxu0 %v1637
    %1662 = vmatprep.subr.mxu0 0.0
    %1663 = vmatpush1.msra.mxu0 %v1638
    %1664 = vmatprep.subr.mxu0 0.0
    %1665 = vmatpush1.msra.mxu0 0.0
    %1666 = vmatprep.subr.mxu0 0.0
    %1667 = vmatpush1.msra.mxu0 0.0
    %1668 = vmatprep.subr.mxu0 0.0
    %1669 = vmatpush1.msra.mxu0 0.0
    %1670 = vmatprep.subr.mxu0 0.0
    %1671 = vmatpush1.msra.mxu0 0.0
    %1672 = vmatprep.subr.mxu0 0.0
    %1673 = vmatpush1.msra.mxu0 0.0
    %1674 = vmatprep.subr.mxu0 0.0
    %1675 = vmatpush1.msra.mxu0 0.0
    %1676 = vmatprep.subr.mxu0 0.0
    %1677 = vmatpush1.msra.mxu0 0.0
    %1678 = vmatprep.subr.mxu0 0.0
    %1679 = vmatpush1.msra.mxu0 0.0
    %1680 = vmatprep.subr.mxu0 0.0
    %1681 = vmatpush1.msra.mxu0 0.0
    %1682 = vmatprep.subr.mxu0 0.0
    %1683 = vmatpush1.msra.mxu0 0.0
    %1684 = vmatprep.subr.mxu0 0.0
    %1685 = vmatpush1.msra.mxu0 0.0
    %1686 = vmatprep.subr.mxu0 0.0
    %1687 = vmatpush1.msra.mxu0 0.0
    %1688 = vmatprep.subr.mxu0 0.0
    %1689 = vmatpush1.msra.mxu0 0.0
    %1690 = vmatprep.subr.mxu0 0.0
    %1691 = vmatpush1.msra.mxu0 0.0
    %1692 = vmatprep.subr.mxu0 0.0
    %1693 = vmatpush1.msra.mxu0 0.0
    %1694 = vmatprep.subr.mxu0 0.0
    %1695 = vmatpush1.msra.mxu0 0.0
    %1696 = vmatprep.subr.mxu0 0.0
    %1697 = vmatpush1.msra.mxu0 0.0
    %1698 = vmatprep.subr.mxu0 0.0
    %1699 = vmatpush1.msra.mxu0 0.0
    %1700 = vmatprep.subr.mxu0 0.0
    %1701 = vmatpush1.msra.mxu0 0.0
    %1702 = vmatprep.subr.mxu0 0.0
    %1703 = vmatpush1.msra.mxu0 0.0
    %1704 = vmatprep.subr.mxu0 0.0
    %1705 = vmatpush1.msra.mxu0 0.0
    %1706 = vmatprep.subr.mxu0 0.0
    %1707 = vmatpush1.msra.mxu0 0.0
    %1708 = vmatprep.subr.mxu0 0.0
    %1709 = vmatpush1.msra.mxu0 0.0
    %1710 = vmatprep.subr.mxu0 0.0
    %1711 = vmatpush1.msra.mxu0 0.0
    %1712 = vmatprep.subr.mxu0 0.0
    %1713 = vmatpush1.msra.mxu0 0.0
    %1714 = vmatprep.subr.mxu0 0.0
    %1715 = vmatpush1.msra.mxu0 0.0
    %1716 = vmatprep.subr.mxu0 0.0
    %1717 = vmatpush1.msra.mxu0 0.0
    %1718 = vmatprep.subr.mxu0 0.0
    %1719 = vmatpush1.msra.mxu0 0.0
    %1720 = vmatprep.mubr.f32.mxu0 0.0
    %1721 = vmatmul.mubr.f32.gmra.mrb[0].mxu0 %v1645
    %v1722 = vpop.f32.mrb[0].mxu0
    %v1723 = vadd.f32 %v1643, %v1722
    %v1724 = vpop.f32.mrb[0].mxu0
    %1725 = vmatprep.mubr.f32.mxu0 0.0
    %1726 = vmatmul.mubr.f32.gmra.mrb[0].mxu0 %v1648
    %v1727 = vpop.f32.mrb[0].mxu0
    %v1728 = vadd.f32 %v1643, %v1727
    %v1729 = vpop.f32.mrb[0].mxu0
    %1730 = vmatprep.mubr.f32.mxu0 0.0
    %1731 = vmatmul.mubr.f32.gmra.mrb[0].mxu0 %v1651
    %v1732 = vpop.f32.mrb[0].mxu0
    %v1733 = vadd.f32 %v1643, %v1732
    %v1734 = vpop.f32.mrb[0].mxu0
    %1735 = vmatprep.mubr.f32.mxu0 0.0
    %1736 = vmatmul.mubr.f32.gmra.mrb[0].mxu0 %v1654
    %v1737 = vpop.f32.mrb[0].mxu0
    %v1738 = vadd.f32 %v1643, %v1737
    %v1739 = vpop.f32.mrb[0].mxu0
    %1740 = vdwg.mxu0
    %v1741 = vld [vmem:[%s3 + $0xa0] sm:$0xff]
    %v1742 = vld [vmem:[%s3 + $0xa8] sm:$0xff]
    %v1743 = vld [vmem:[%s3 + $0xb0] sm:$0xff]
    %v1744 = vld [vmem:[%s3 + $0xb8] sm:$0xff]
    %v1745 = vld [vmem:[#allocation5 + $0xe] sm:$0x1]
    %v1746 = vlaneseq
    %v1747 = vshrl.u32 %v1746, 7
    %v1748 = vsub.s32 0, %v1747
    %v1749 = vrot.slane %v1745, %v1748
    %1750 = vmatprep.subr.mxu0 0.0
    %1751 = vmatpush1.msra.mxu0 %v1741
    %1752 = vmatprep.subr.mxu0 0.0
    %1753 = vmatpush1.msra.mxu0 %v1742
    %1754 = vmatprep.subr.mxu0 0.0
    %1755 = vmatpush1.msra.mxu0 %v1743
    %1756 = vmatprep.subr.mxu0 0.0
    %1757 = vmatpush1.msra.mxu0 %v1744
    %1758 = vmatprep.subr.mxu0 0.0
    %1759 = vmatpush1.msra.mxu0 0.0
    %1760 = vmatprep.subr.mxu0 0.0
    %1761 = vmatpush1.msra.mxu0 0.0
    %1762 = vmatprep.subr.mxu0 0.0
    %1763 = vmatpush1.msra.mxu0 0.0
    %1764 = vmatprep.subr.mxu0 0.0
    %1765 = vmatpush1.msra.mxu0 0.0
    %1766 = vmatprep.subr.mxu0 0.0
    %1767 = vmatpush1.msra.mxu0 0.0
    %1768 = vmatprep.subr.mxu0 0.0
    %1769 = vmatpush1.msra.mxu0 0.0
    %1770 = vmatprep.subr.mxu0 0.0
    %1771 = vmatpush1.msra.mxu0 0.0
    %1772 = vmatprep.subr.mxu0 0.0
    %1773 = vmatpush1.msra.mxu0 0.0
    %1774 = vmatprep.subr.mxu0 0.0
    %1775 = vmatpush1.msra.mxu0 0.0
    %1776 = vmatprep.subr.mxu0 0.0
    %1777 = vmatpush1.msra.mxu0 0.0
    %1778 = vmatprep.subr.mxu0 0.0
    %1779 = vmatpush1.msra.mxu0 0.0
    %1780 = vmatprep.subr.mxu0 0.0
    %1781 = vmatpush1.msra.mxu0 0.0
    %1782 = vmatprep.subr.mxu0 0.0
    %1783 = vmatpush1.msra.mxu0 0.0
    %1784 = vmatprep.subr.mxu0 0.0
    %1785 = vmatpush1.msra.mxu0 0.0
    %1786 = vmatprep.subr.mxu0 0.0
    %1787 = vmatpush1.msra.mxu0 0.0
    %1788 = vmatprep.subr.mxu0 0.0
    %1789 = vmatpush1.msra.mxu0 0.0
    %1790 = vmatprep.subr.mxu0 0.0
    %1791 = vmatpush1.msra.mxu0 0.0
    %1792 = vmatprep.subr.mxu0 0.0
    %1793 = vmatpush1.msra.mxu0 0.0
    %1794 = vmatprep.subr.mxu0 0.0
    %1795 = vmatpush1.msra.mxu0 0.0
    %1796 = vmatprep.subr.mxu0 0.0
    %1797 = vmatpush1.msra.mxu0 0.0
    %1798 = vmatprep.subr.mxu0 0.0
    %1799 = vmatpush1.msra.mxu0 0.0
    %1800 = vmatprep.subr.mxu0 0.0
    %1801 = vmatpush1.msra.mxu0 0.0
    %1802 = vmatprep.subr.mxu0 0.0
    %1803 = vmatpush1.msra.mxu0 0.0
    %1804 = vmatprep.subr.mxu0 0.0
    %1805 = vmatpush1.msra.mxu0 0.0
    %1806 = vmatprep.subr.mxu0 0.0
    %1807 = vmatpush1.msra.mxu0 0.0
    %1808 = vmatprep.subr.mxu0 0.0
    %1809 = vmatpush1.msra.mxu0 0.0
    %1810 = vmatprep.subr.mxu0 0.0
    %1811 = vmatpush1.msra.mxu0 0.0
    %1812 = vmatprep.subr.mxu0 0.0
    %1813 = vmatpush1.msra.mxu0 0.0
    %1814 = vmatprep.mubr.f32.mxu0 0.0
    %1815 = vmatmul.mubr.f32.gmra.mrb[0].mxu0 %v1645
    %v1816 = vpop.f32.mrb[0].mxu0
    %v1817 = vadd.f32 %v1749, %v1816
    %v1818 = vpop.f32.mrb[0].mxu0
    %1819 = vmatprep.mubr.f32.mxu0 0.0
    %1820 = vmatmul.mubr.f32.gmra.mrb[0].mxu0 %v1648
    %v1821 = vpop.f32.mrb[0].mxu0
    %v1822 = vadd.f32 %v1749, %v1821
    %v1823 = vpop.f32.mrb[0].mxu0
    %1824 = vmatprep.mubr.f32.mxu0 0.0
    %1825 = vmatmul.mubr.f32.gmra.mrb[0].mxu0 %v1651
    %v1826 = vpop.f32.mrb[0].mxu0
    %v1827 = vadd.f32 %v1749, %v1826
    %v1828 = vpop.f32.mrb[0].mxu0
    %1829 = vmatprep.mubr.f32.mxu0 0.0
    %1830 = vmatmul.mubr.f32.gmra.mrb[0].mxu0 %v1654
    %v1831 = vpop.f32.mrb[0].mxu0
    %v1832 = vadd.f32 %v1749, %v1831
    %v1833 = vpop.f32.mrb[0].mxu0
    %1834 = vdwg.mxu0
    %v1835 = vxor.u32 %v1817, 2147483648
    %v1836 = vxor.u32 %v1822, 2147483648
    %v1837 = vxor.u32 %v1827, 2147483648
    %v1838 = vxor.u32 %v1832, 2147483648
    %v1839 = vmul.f32 %v1835, 1.442695
    %v1840 = vpow.pop %v1839
    %v1841 = vmul.f32 %v1836, 1.442695
    %v1842 = vpow.pop %v1841
    %v1843 = vmul.f32 %v1837, 1.442695
    %v1844 = vpow.pop %v1843
    %v1845 = vmul.f32 %v1838, 1.442695
    %v1846 = vpow.pop %v1845
    %v1847 = vadd.f32 %v1840, 1.0
    %v1848 = vadd.f32 %v1842, 1.0
    %v1849 = vadd.f32 %v1844, 1.0
    %v1850 = vadd.f32 %v1846, 1.0
    %v1851 = vrcp.pop %v1847
    %v1852 = vmul.f32 1.0, %v1851
    %v1853 = vrcp.pop %v1848
    %v1854 = vmul.f32 1.0, %v1853
    %v1855 = vrcp.pop %v1849
    %v1856 = vmul.f32 1.0, %v1855
    %v1857 = vrcp.pop %v1850
    %v1858 = vmul.f32 1.0, %v1857
    %v1859 = vmul.f32 %v1723, %v1852
    %v1860 = vmul.f32 %v1728, %v1854
    %v1861 = vmul.f32 %v1733, %v1856
    %v1862 = vmul.f32 %v1738, %v1858
    %v1863 = vld [vmem:[%s4 + $0xe0] sm:$0xff]
    %v1864 = vld [vmem:[%s4 + $0xe8] sm:$0xff]
    %v1865 = vld [vmem:[%s4 + $0xf0] sm:$0xff]
    %v1866 = vld [vmem:[%s4 + $0xf8] sm:$0xff]
    %v1867 = vmul.f32 %v1859, %v1863
    %v1868 = vmul.f32 %v1860, %v1864
    %v1869 = vmul.f32 %v1861, %v1865
    %v1870 = vmul.f32 %v1862, %v1866
    %v1871 = vrot.slane %v1859, 5
    %v1872 = vrot.slane %v1860, 5
    %v1873 = vrot.slane %v1861, 5
    %v1874 = vrot.slane %v1862, 5
    %vm1875 = vcmp.lt.s32.totalorder %v1054, 3
    %v1876 = vsel %vm1875, %v1873, %v1874
    %v1877 = vsel %vm1875, %v1872, %v1873
    %v1878 = vsel %vm1875, %v1871, %v1872
    %v1879 = vsel %vm1875, %v1874, %v1871
    %v1880 = vld [vmem:[%s4 + $0x80] sm:$0xff]
    %v1881 = vld [vmem:[%s4 + $0x88] sm:$0xff]
    %v1882 = vld [vmem:[%s4 + $0x90] sm:$0xff]
    %v1883 = vld [vmem:[%s4 + $0x98] sm:$0xff]
    %v1884 = vmul.f32 %v1879, %v1880
    %v1885 = vmul.f32 %v1878, %v1881
    %v1886 = vmul.f32 %v1877, %v1882
    %v1887 = vmul.f32 %v1876, %v1883
    %v1888 = vadd.f32 %v1867, %v1884
    %v1889 = vadd.f32 %v1868, %v1885
    %v1890 = vadd.f32 %v1869, %v1886
    %v1891 = vadd.f32 %v1870, %v1887
    %v1892 = vrot.slane %v1859, 6
    %v1893 = vrot.slane %v1860, 6
    %v1894 = vrot.slane %v1861, 6
    %v1895 = vrot.slane %v1862, 6
    %vm1896 = vcmp.lt.s32.totalorder %v1054, 2
    %v1897 = vsel %vm1896, %v1894, %v1895
    %v1898 = vsel %vm1896, %v1893, %v1894
    %v1899 = vsel %vm1896, %v1892, %v1893
    %v1900 = vsel %vm1896, %v1895, %v1892
    %v1901 = vld [vmem:[%s4 + $0xa0] sm:$0xff]
    %v1902 = vld [vmem:[%s4 + $0xa8] sm:$0xff]
    %v1903 = vld [vmem:[%s4 + $0xb0] sm:$0xff]
    %v1904 = vld [vmem:[%s4 + $0xb8] sm:$0xff]
    %v1905 = vmul.f32 %v1900, %v1901
    %v1906 = vmul.f32 %v1899, %v1902
    %v1907 = vmul.f32 %v1898, %v1903
    %v1908 = vmul.f32 %v1897, %v1904
    %v1909 = vadd.f32 %v1888, %v1905
    %v1910 = vadd.f32 %v1889, %v1906
    %v1911 = vadd.f32 %v1890, %v1907
    %v1912 = vadd.f32 %v1891, %v1908
    %v1913 = vrot.slane %v1859, 7
    %v1914 = vrot.slane %v1860, 7
    %v1915 = vrot.slane %v1861, 7
    %v1916 = vrot.slane %v1862, 7
    %vm1917 = vcmp.lt.s32.totalorder %v1054, 1
    %v1918 = vsel %vm1917, %v1915, %v1916
    %v1919 = vsel %vm1917, %v1914, %v1915
    %v1920 = vsel %vm1917, %v1913, %v1914
    %v1921 = vsel %vm1917, %v1916, %v1913
    %v1922 = vld [vmem:[%s4 + $0xc0] sm:$0xff]
    %v1923 = vld [vmem:[%s4 + $0xc8] sm:$0xff]
    %v1924 = vld [vmem:[%s4 + $0xd0] sm:$0xff]
    %v1925 = vld [vmem:[%s4 + $0xd8] sm:$0xff]
    %v1926 = vmul.f32 %v1921, %v1922
    %v1927 = vmul.f32 %v1920, %v1923
    %v1928 = vmul.f32 %v1919, %v1924
    %v1929 = vmul.f32 %v1918, %v1925
    %v1930 = vadd.f32 %v1909, %v1926
    %v1931 = vadd.f32 %v1910, %v1927
    %v1932 = vadd.f32 %v1911, %v1928
    %v1933 = vadd.f32 %v1912, %v1929
    %v1934 = vrot.slane %v1859, 1
    %v1935 = vrot.slane %v1860, 1
    %v1936 = vrot.slane %v1861, 1
    %v1937 = vrot.slane %v1862, 1
    %v1938 = vsel %vm1055, %v1936, %v1937
    %v1939 = vsel %vm1055, %v1935, %v1936
    %v1940 = vsel %vm1055, %v1934, %v1935
    %v1941 = vsel %vm1055, %v1937, %v1934
    %v1942 = vld [vmem:[%s4 + $0x100] sm:$0xff]
    %v1943 = vld [vmem:[%s4 + $0x108] sm:$0xff]
    %v1944 = vld [vmem:[%s4 + $0x110] sm:$0xff]
    %v1945 = vld [vmem:[%s4 + $0x118] sm:$0xff]
    %v1946 = vmul.f32 %v1940, %v1942
    %v1947 = vmul.f32 %v1939, %v1943
    %v1948 = vmul.f32 %v1938, %v1944
    %v1949 = vmul.f32 %v1941, %v1945
    %v1950 = vadd.f32 %v1930, %v1946
    %v1951 = vadd.f32 %v1931, %v1947
    %v1952 = vadd.f32 %v1932, %v1948
    %v1953 = vadd.f32 %v1933, %v1949
    %v1954 = vrot.slane %v1859, 2
    %v1955 = vrot.slane %v1860, 2
    %v1956 = vrot.slane %v1861, 2
    %v1957 = vrot.slane %v1862, 2
    %vm1958 = vcmp.lt.s32.totalorder %v1054, 6
    %v1959 = vsel %vm1958, %v1956, %v1957
    %v1960 = vsel %vm1958, %v1955, %v1956
    %v1961 = vsel %vm1958, %v1954, %v1955
    %v1962 = vsel %vm1958, %v1957, %v1954
    %v1963 = vld [vmem:[%s4 + $0x120] sm:$0xff]
    %v1964 = vld [vmem:[%s4 + $0x128] sm:$0xff]
    %v1965 = vld [vmem:[%s4 + $0x130] sm:$0xff]
    %v1966 = vld [vmem:[%s4 + $0x138] sm:$0xff]
    %v1967 = vmul.f32 %v1961, %v1963
    %v1968 = vmul.f32 %v1960, %v1964
    %v1969 = vmul.f32 %v1959, %v1965
    %v1970 = vmul.f32 %v1962, %v1966
    %v1971 = vadd.f32 %v1950, %v1967
    %v1972 = vadd.f32 %v1951, %v1968
    %v1973 = vadd.f32 %v1952, %v1969
    %v1974 = vadd.f32 %v1953, %v1970
    %v1975 = vrot.slane %v1859, 3
    %v1976 = vrot.slane %v1860, 3
    %v1977 = vrot.slane %v1861, 3
    %v1978 = vrot.slane %v1862, 3
    %vm1979 = vcmp.lt.s32.totalorder %v1054, 5
    %v1980 = vsel %vm1979, %v1977, %v1978
    %v1981 = vsel %vm1979, %v1976, %v1977
    %v1982 = vsel %vm1979, %v1975, %v1976
    %v1983 = vsel %vm1979, %v1978, %v1975
    %v1984 = vld [vmem:[%s4 + $0x140] sm:$0xff]
    %v1985 = vld [vmem:[%s4 + $0x148] sm:$0xff]
    %v1986 = vld [vmem:[%s4 + $0x150] sm:$0xff]
    %v1987 = vld [vmem:[%s4 + $0x158] sm:$0xff]
    %v1988 = vmul.f32 %v1982, %v1984
    %v1989 = vmul.f32 %v1981, %v1985
    %v1990 = vmul.f32 %v1980, %v1986
    %v1991 = vmul.f32 %v1983, %v1987
    %v1992 = vadd.f32 %v1971, %v1988
    %v1993 = vadd.f32 %v1972, %v1989
    %v1994 = vadd.f32 %v1973, %v1990
    %v1995 = vadd.f32 %v1974, %v1991
    %v1996 = vld [vmem:[#allocation5 + $0xf] sm:$0x1]
    %v1997 = vlaneseq
    %v1998 = vshrl.u32 %v1997, 7
    %v1999 = vsub.s32 0, %v1998
    %v2000 = vrot.slane %v1996, %v1999
    %v2001 = vmul.f32 %v1992, %v2000
    %v2002 = vmul.f32 %v1993, %v2000
    %v2003 = vmul.f32 %v1994, %v2000
    %v2004 = vmul.f32 %v1995, %v2000
    %v2005 = vld [vmem:[#allocation5 + $0x10] sm:$0x1]
    %v2006 = vlaneseq
    %v2007 = vshrl.u32 %v2006, 7
    %v2008 = vsub.s32 0, %v2007
    %v2009 = vrot.slane %v2005, %v2008
    %v2010 = vadd.f32 %v2001, %v2009
    %v2011 = vadd.f32 %v2002, %v2009
    %v2012 = vadd.f32 %v2003, %v2009
    %v2013 = vadd.f32 %v2004, %v2009
    %v2014 = vxor.u32 %v2010, 2147483648
    %v2015 = vxor.u32 %v2011, 2147483648
    %v2016 = vxor.u32 %v2012, 2147483648
    %v2017 = vxor.u32 %v2013, 2147483648
    %v2018 = vmul.f32 %v2014, 1.442695
    %v2019 = vpow.pop %v2018
    %v2020 = vmul.f32 %v2015, 1.442695
    %v2021 = vpow.pop %v2020
    %v2022 = vmul.f32 %v2016, 1.442695
    %v2023 = vpow.pop %v2022
    %v2024 = vmul.f32 %v2017, 1.442695
    %v2025 = vpow.pop %v2024
    %v2026 = vadd.f32 %v2019, 1.0
    %v2027 = vadd.f32 %v2021, 1.0
    %v2028 = vadd.f32 %v2023, 1.0
    %v2029 = vadd.f32 %v2025, 1.0
    %v2030 = vrcp.pop %v2026
    %v2031 = vmul.f32 1.0, %v2030
    %v2032 = vrcp.pop %v2027
    %v2033 = vmul.f32 1.0, %v2032
    %v2034 = vrcp.pop %v2028
    %v2035 = vmul.f32 1.0, %v2034
    %v2036 = vrcp.pop %v2029
    %v2037 = vmul.f32 1.0, %v2036
    %v2038 = vmul.f32 %v2010, %v2031
    %v2039 = vmul.f32 %v2011, %v2033
    %v2040 = vmul.f32 %v2012, %v2035
    %v2041 = vmul.f32 %v2013, %v2037
    %v2042 = vld [vmem:[%s3 + $0xc0] sm:$0xff]
    %v2043 = vld [vmem:[%s3 + $0xc8] sm:$0xff]
    %v2044 = vld [vmem:[%s3 + $0xd0] sm:$0xff]
    %v2045 = vld [vmem:[%s3 + $0xd8] sm:$0xff]
    %v2046 = vld [vmem:[#allocation5 + $0x11] sm:$0x1]
    %v2047 = vlaneseq
    %v2048 = vshrl.u32 %v2047, 7
    %v2049 = vsub.s32 0, %v2048
    %v2050 = vrot.slane %v2046, %v2049
    %v2052 = vsel %vm59, %v2038, 0
    %v2055 = vsel %vm59, %v2039, 0
    %v2058 = vsel %vm59, %v2040, 0
    %v2061 = vsel %vm59, %v2041, 0
    %2063 = vmatprep.subr.mxu0 0.0
    %2064 = vmatpush1.msra.mxu0 %v2042
    %2065 = vmatprep.subr.mxu0 0.0
    %2066 = vmatpush1.msra.mxu0 %v2043
    %2067 = vmatprep.subr.mxu0 0.0
    %2068 = vmatpush1.msra.mxu0 %v2044
    %2069 = vmatprep.subr.mxu0 0.0
    %2070 = vmatpush1.msra.mxu0 %v2045
    %2071 = vmatprep.subr.mxu0 0.0
    %2072 = vmatpush1.msra.mxu0 0.0
    %2073 = vmatprep.subr.mxu0 0.0
    %2074 = vmatpush1.msra.mxu0 0.0
    %2075 = vmatprep.subr.mxu0 0.0
    %2076 = vmatpush1.msra.mxu0 0.0
    %2077 = vmatprep.subr.mxu0 0.0
    %2078 = vmatpush1.msra.mxu0 0.0
    %2079 = vmatprep.subr.mxu0 0.0
    %2080 = vmatpush1.msra.mxu0 0.0
    %2081 = vmatprep.subr.mxu0 0.0
    %2082 = vmatpush1.msra.mxu0 0.0
    %2083 = vmatprep.subr.mxu0 0.0
    %2084 = vmatpush1.msra.mxu0 0.0
    %2085 = vmatprep.subr.mxu0 0.0
    %2086 = vmatpush1.msra.mxu0 0.0
    %2087 = vmatprep.subr.mxu0 0.0
    %2088 = vmatpush1.msra.mxu0 0.0
    %2089 = vmatprep.subr.mxu0 0.0
    %2090 = vmatpush1.msra.mxu0 0.0
    %2091 = vmatprep.subr.mxu0 0.0
    %2092 = vmatpush1.msra.mxu0 0.0
    %2093 = vmatprep.subr.mxu0 0.0
    %2094 = vmatpush1.msra.mxu0 0.0
    %2095 = vmatprep.subr.mxu0 0.0
    %2096 = vmatpush1.msra.mxu0 0.0
    %2097 = vmatprep.subr.mxu0 0.0
    %2098 = vmatpush1.msra.mxu0 0.0
    %2099 = vmatprep.subr.mxu0 0.0
    %2100 = vmatpush1.msra.mxu0 0.0
    %2101 = vmatprep.subr.mxu0 0.0
    %2102 = vmatpush1.msra.mxu0 0.0
    %2103 = vmatprep.subr.mxu0 0.0
    %2104 = vmatpush1.msra.mxu0 0.0
    %2105 = vmatprep.subr.mxu0 0.0
    %2106 = vmatpush1.msra.mxu0 0.0
    %2107 = vmatprep.subr.mxu0 0.0
    %2108 = vmatpush1.msra.mxu0 0.0
    %2109 = vmatprep.subr.mxu0 0.0
    %2110 = vmatpush1.msra.mxu0 0.0
    %2111 = vmatprep.subr.mxu0 0.0
    %2112 = vmatpush1.msra.mxu0 0.0
    %2113 = vmatprep.subr.mxu0 0.0
    %2114 = vmatpush1.msra.mxu0 0.0
    %2115 = vmatprep.subr.mxu0 0.0
    %2116 = vmatpush1.msra.mxu0 0.0
    %2117 = vmatprep.subr.mxu0 0.0
    %2118 = vmatpush1.msra.mxu0 0.0
    %2119 = vmatprep.subr.mxu0 0.0
    %2120 = vmatpush1.msra.mxu0 0.0
    %2121 = vmatprep.subr.mxu0 0.0
    %2122 = vmatpush1.msra.mxu0 0.0
    %2123 = vmatprep.subr.mxu0 0.0
    %2124 = vmatpush1.msra.mxu0 0.0
    %2125 = vmatprep.subr.mxu0 0.0
    %2126 = vmatpush1.msra.mxu0 0.0
    %2127 = vmatprep.mubr.f32.mxu0 0.0
    %2128 = vmatmul.mubr.f32.gmra.mrb[0].mxu0 %v2052
    %v2129 = vpop.f32.mrb[0].mxu0
    %v2130 = vadd.f32 %v2050, %v2129
    %v2131 = vpop.f32.mrb[0].mxu0
    %2132 = vmatprep.mubr.f32.mxu0 0.0
    %2133 = vmatmul.mubr.f32.gmra.mrb[0].mxu0 %v2055
    %v2134 = vpop.f32.mrb[0].mxu0
    %v2135 = vadd.f32 %v2050, %v2134
    %v2136 = vpop.f32.mrb[0].mxu0
    %2137 = vmatprep.mubr.f32.mxu0 0.0
    %2138 = vmatmul.mubr.f32.gmra.mrb[0].mxu0 %v2058
    %v2139 = vpop.f32.mrb[0].mxu0
    %v2140 = vadd.f32 %v2050, %v2139
    %v2141 = vpop.f32.mrb[0].mxu0
    %2142 = vmatprep.mubr.f32.mxu0 0.0
    %2143 = vmatmul.mubr.f32.gmra.mrb[0].mxu0 %v2061
    %v2144 = vpop.f32.mrb[0].mxu0
    %v2145 = vadd.f32 %v2050, %v2144
    %v2146 = vpop.f32.mrb[0].mxu0
    %2147 = vdwg.mxu0
    %v2148 = vadd.f32 %v1561, %v2130
    %v2149 = vadd.f32 %v1562, %v2135
    %v2150 = vadd.f32 %v1563, %v2140
    %v2151 = vadd.f32 %v1564, %v2145
    %v2152 = vsel %vm59, %v2148, 0.0
    %2153 = vadd.xlane.f32.xlu0 %v2152
    %v2154 = vpop.xlane.xlu0 %2153
    %v2155 = vsel %vm59, %v2149, 0.0
    %2156 = vadd.xlane.f32.xlu0 %v2155
    %v2157 = vpop.xlane.xlu0 %2156
    %v2158 = vsel %vm59, %v2150, 0.0
    %2159 = vadd.xlane.f32.xlu0 %v2158
    %v2160 = vpop.xlane.xlu0 %2159
    %v2161 = vsel %vm59, %v2151, 0.0
    %2162 = vadd.xlane.f32.xlu0 %v2161
    %v2163 = vpop.xlane.xlu0 %2162
    %v2164 = vmul.f32 %v2154, %v72
    %v2165 = vmul.f32 %v2157, %v72
    %v2166 = vmul.f32 %v2160, %v72
    %v2167 = vmul.f32 %v2163, %v72
    %v2168 = vsub.f32 %v2148, %v2164
    %v2169 = vsub.f32 %v2149, %v2165
    %v2170 = vsub.f32 %v2150, %v2166
    %v2171 = vsub.f32 %v2151, %v2167
    %v2172 = vmul.f32 %v2168, %v2168
    %v2173 = vmul.f32 %v2169, %v2169
    %v2174 = vmul.f32 %v2170, %v2170
    %v2175 = vmul.f32 %v2171, %v2171
    %v2176 = vsel %vm59, %v2172, 0.0
    %2177 = vadd.xlane.f32.xlu0 %v2176
    %v2178 = vpop.xlane.xlu0 %2177
    %v2179 = vsel %vm59, %v2173, 0.0
    %2180 = vadd.xlane.f32.xlu0 %v2179
    %v2181 = vpop.xlane.xlu0 %2180
    %v2182 = vsel %vm59, %v2174, 0.0
    %2183 = vadd.xlane.f32.xlu0 %v2182
    %v2184 = vpop.xlane.xlu0 %2183
    %v2185 = vsel %vm59, %v2175, 0.0
    %2186 = vadd.xlane.f32.xlu0 %v2185
    %v2187 = vpop.xlane.xlu0 %2186
    %v2188 = vmul.f32 %v2178, %v72
    %v2189 = vmul.f32 %v2181, %v72
    %v2190 = vmul.f32 %v2184, %v72
    %v2191 = vmul.f32 %v2187, %v72
    %v2192 = vadd.f32 %v2188, 1e-05
    %v2193 = vadd.f32 %v2189, 1e-05
    %v2194 = vadd.f32 %v2190, 1e-05
    %v2195 = vadd.f32 %v2191, 1e-05
    %v2196 = vrsqrt.pop %v2192
    %v2197 = vrsqrt.pop %v2193
    %v2198 = vrsqrt.pop %v2194
    %v2199 = vrsqrt.pop %v2195
    %v2200 = vmul.f32 %v2168, %v2196
    %v2201 = vmul.f32 %v2169, %v2197
    %v2202 = vmul.f32 %v2170, %v2198
    %v2203 = vmul.f32 %v2171, %v2199
    %v2204 = vld [vmem:[#allocation5 + $0x12] sm:$0x1]
    %v2205 = vlaneseq
    %v2206 = vshrl.u32 %v2205, 7
    %v2207 = vsub.s32 0, %v2206
    %v2208 = vrot.slane %v2204, %v2207
    %v2209 = vmul.f32 %v2200, %v2208
    %v2210 = vmul.f32 %v2201, %v2208
    %v2211 = vmul.f32 %v2202, %v2208
    %v2212 = vmul.f32 %v2203, %v2208
    %v2213 = vld [vmem:[#allocation5 + $0x13] sm:$0x1]
    %v2214 = vlaneseq
    %v2215 = vshrl.u32 %v2214, 7
    %v2216 = vsub.s32 0, %v2215
    %v2217 = vrot.slane %v2213, %v2216
    %v2218 = vadd.f32 %v2209, %v2217
    %v2219 = vadd.f32 %v2210, %v2217
    %v2220 = vadd.f32 %v2211, %v2217
    %v2221 = vadd.f32 %v2212, %v2217
    %v2222 = vld [vmem:[%s1 + $0x20] sm:$0xff]
    %v2223 = vld [vmem:[%s1 + $0x28] sm:$0xff]
    %v2224 = vld [vmem:[%s1 + $0x30] sm:$0xff]
    %v2225 = vld [vmem:[%s1 + $0x38] sm:$0xff]
    %v2226 = vld [vmem:[#allocation5 + $0x14] sm:$0x1]
    %v2227 = vlaneseq
    %v2228 = vshrl.u32 %v2227, 7
    %v2229 = vsub.s32 0, %v2228
    %v2230 = vrot.slane %v2226, %v2229
    %v2232 = vsel %vm59, %v2218, 0
    %v2235 = vsel %vm59, %v2219, 0
    %v2238 = vsel %vm59, %v2220, 0
    %v2241 = vsel %vm59, %v2221, 0
    %2243 = vmatprep.subr.mxu0 0.0
    %2244 = vmatpush1.msra.mxu0 %v2222
    %2245 = vmatprep.subr.mxu0 0.0
    %2246 = vmatpush1.msra.mxu0 %v2223
    %2247 = vmatprep.subr.mxu0 0.0
    %2248 = vmatpush1.msra.mxu0 %v2224
    %2249 = vmatprep.subr.mxu0 0.0
    %2250 = vmatpush1.msra.mxu0 %v2225
    %2251 = vmatprep.subr.mxu0 0.0
    %2252 = vmatpush1.msra.mxu0 0.0
    %2253 = vmatprep.subr.mxu0 0.0
    %2254 = vmatpush1.msra.mxu0 0.0
    %2255 = vmatprep.subr.mxu0 0.0
    %2256 = vmatpush1.msra.mxu0 0.0
    %2257 = vmatprep.subr.mxu0 0.0
    %2258 = vmatpush1.msra.mxu0 0.0
    %2259 = vmatprep.subr.mxu0 0.0
    %2260 = vmatpush1.msra.mxu0 0.0
    %2261 = vmatprep.subr.mxu0 0.0
    %2262 = vmatpush1.msra.mxu0 0.0
    %2263 = vmatprep.subr.mxu0 0.0
    %2264 = vmatpush1.msra.mxu0 0.0
    %2265 = vmatprep.subr.mxu0 0.0
    %2266 = vmatpush1.msra.mxu0 0.0
    %2267 = vmatprep.subr.mxu0 0.0
    %2268 = vmatpush1.msra.mxu0 0.0
    %2269 = vmatprep.subr.mxu0 0.0
    %2270 = vmatpush1.msra.mxu0 0.0
    %2271 = vmatprep.subr.mxu0 0.0
    %2272 = vmatpush1.msra.mxu0 0.0
    %2273 = vmatprep.subr.mxu0 0.0
    %2274 = vmatpush1.msra.mxu0 0.0
    %2275 = vmatprep.subr.mxu0 0.0
    %2276 = vmatpush1.msra.mxu0 0.0
    %2277 = vmatprep.subr.mxu0 0.0
    %2278 = vmatpush1.msra.mxu0 0.0
    %2279 = vmatprep.subr.mxu0 0.0
    %2280 = vmatpush1.msra.mxu0 0.0
    %2281 = vmatprep.subr.mxu0 0.0
    %2282 = vmatpush1.msra.mxu0 0.0
    %2283 = vmatprep.subr.mxu0 0.0
    %2284 = vmatpush1.msra.mxu0 0.0
    %2285 = vmatprep.subr.mxu0 0.0
    %2286 = vmatpush1.msra.mxu0 0.0
    %2287 = vmatprep.subr.mxu0 0.0
    %2288 = vmatpush1.msra.mxu0 0.0
    %2289 = vmatprep.subr.mxu0 0.0
    %2290 = vmatpush1.msra.mxu0 0.0
    %2291 = vmatprep.subr.mxu0 0.0
    %2292 = vmatpush1.msra.mxu0 0.0
    %2293 = vmatprep.subr.mxu0 0.0
    %2294 = vmatpush1.msra.mxu0 0.0
    %2295 = vmatprep.subr.mxu0 0.0
    %2296 = vmatpush1.msra.mxu0 0.0
    %2297 = vmatprep.subr.mxu0 0.0
    %2298 = vmatpush1.msra.mxu0 0.0
    %2299 = vmatprep.subr.mxu0 0.0
    %2300 = vmatpush1.msra.mxu0 0.0
    %2301 = vmatprep.subr.mxu0 0.0
    %2302 = vmatpush1.msra.mxu0 0.0
    %2303 = vmatprep.subr.mxu0 0.0
    %2304 = vmatpush1.msra.mxu0 0.0
    %2305 = vmatprep.subr.mxu0 0.0
    %2306 = vmatpush1.msra.mxu0 0.0
    %2307 = vmatprep.mubr.f32.mxu0 0.0
    %2308 = vmatmul.mubr.f32.gmra.mrb[0].mxu0 %v2232
    %v2309 = vpop.f32.mrb[0].mxu0
    %v2310 = vadd.f32 %v2230, %v2309
    %v2311 = vpop.f32.mrb[0].mxu0
    %2312 = vmatprep.mubr.f32.mxu0 0.0
    %2313 = vmatmul.mubr.f32.gmra.mrb[0].mxu0 %v2235
    %v2314 = vpop.f32.mrb[0].mxu0
    %v2315 = vadd.f32 %v2230, %v2314
    %v2316 = vpop.f32.mrb[0].mxu0
    %2317 = vmatprep.mubr.f32.mxu0 0.0
    %2318 = vmatmul.mubr.f32.gmra.mrb[0].mxu0 %v2238
    %v2319 = vpop.f32.mrb[0].mxu0
    %v2320 = vadd.f32 %v2230, %v2319
    %v2321 = vpop.f32.mrb[0].mxu0
    %2322 = vmatprep.mubr.f32.mxu0 0.0
    %2323 = vmatmul.mubr.f32.gmra.mrb[0].mxu0 %v2241
    %v2324 = vpop.f32.mrb[0].mxu0
    %v2325 = vadd.f32 %v2230, %v2324
    %v2326 = vpop.f32.mrb[0].mxu0
    %2327 = vdwg.mxu0
    %v2328 = vxor.u32 %v2310, 2147483648
    %v2329 = vxor.u32 %v2315, 2147483648
    %v2330 = vxor.u32 %v2320, 2147483648
    %v2331 = vxor.u32 %v2325, 2147483648
    %v2332 = vmul.f32 %v2328, 1.442695
    %v2333 = vpow.pop %v2332
    %v2334 = vmul.f32 %v2329, 1.442695
    %v2335 = vpow.pop %v2334
    %v2336 = vmul.f32 %v2330, 1.442695
    %v2337 = vpow.pop %v2336
    %v2338 = vmul.f32 %v2331, 1.442695
    %v2339 = vpow.pop %v2338
    %v2340 = vadd.f32 %v2333, 1.0
    %v2341 = vadd.f32 %v2335, 1.0
    %v2342 = vadd.f32 %v2337, 1.0
    %v2343 = vadd.f32 %v2339, 1.0
    %v2344 = vrcp.pop %v2340
    %v2345 = vmul.f32 1.0, %v2344
    %v2346 = vrcp.pop %v2341
    %v2347 = vmul.f32 1.0, %v2346
    %v2348 = vrcp.pop %v2342
    %v2349 = vmul.f32 1.0, %v2348
    %v2350 = vrcp.pop %v2343
    %v2351 = vmul.f32 1.0, %v2350
    %v2352 = vmul.f32 %v2310, %v2345
    %v2353 = vmul.f32 %v2315, %v2347
    %v2354 = vmul.f32 %v2320, %v2349
    %v2355 = vmul.f32 %v2325, %v2351
    %v2356 = vld [vmem:[%s2 + $0x80] sm:$0xff]
    %v2357 = vld [vmem:[%s2 + $0x88] sm:$0xff]
    %v2358 = vld [vmem:[%s2 + $0x90] sm:$0xff]
    %v2359 = vld [vmem:[%s2 + $0x98] sm:$0xff]
    %v2360 = vld [vmem:[%s2 + $0xa0] sm:$0xff]
    %v2361 = vld [vmem:[%s2 + $0xa8] sm:$0xff]
    %v2362 = vld [vmem:[%s2 + $0xb0] sm:$0xff]
    %v2363 = vld [vmem:[%s2 + $0xb8] sm:$0xff]
    %v2364 = vld [vmem:[%s2 + $0xc0] sm:$0xff]
    %v2365 = vld [vmem:[%s2 + $0xc8] sm:$0xff]
    %v2366 = vld [vmem:[%s2 + $0xd0] sm:$0xff]
    %v2367 = vld [vmem:[%s2 + $0xd8] sm:$0xff]
    %v2368 = vld [vmem:[%s2 + $0xe0] sm:$0xff]
    %v2369 = vld [vmem:[%s2 + $0xe8] sm:$0xff]
    %v2370 = vld [vmem:[%s2 + $0xf0] sm:$0xff]
    %v2371 = vld [vmem:[%s2 + $0xf8] sm:$0xff]
    %v2372 = vld [vmem:[#allocation5 + $0x15] sm:$0x1]
    %v2373 = vlaneseq
    %v2374 = vshrl.u32 %v2373, 7
    %v2375 = vsub.s32 0, %v2374
    %v2376 = vrot.slane %v2372, %v2375
    %2377 = vmatprep.subr.mxu0 0.0
    %2378 = vmatpush1.msra.mxu0 %v2356
    %2379 = vmatprep.subr.mxu0 0.0
    %2380 = vmatpush1.msra.mxu0 %v2357
    %2381 = vmatprep.subr.mxu0 0.0
    %2382 = vmatpush1.msra.mxu0 %v2358
    %2383 = vmatprep.subr.mxu0 0.0
    %2384 = vmatpush1.msra.mxu0 %v2359
    %2385 = vmatprep.subr.mxu0 0.0
    %2386 = vmatpush1.msra.mxu0 %v2360
    %2387 = vmatprep.subr.mxu0 0.0
    %2388 = vmatpush1.msra.mxu0 %v2361
    %2389 = vmatprep.subr.mxu0 0.0
    %2390 = vmatpush1.msra.mxu0 %v2362
    %2391 = vmatprep.subr.mxu0 0.0
    %2392 = vmatpush1.msra.mxu0 %v2363
    %2393 = vmatprep.subr.mxu0 0.0
    %2394 = vmatpush1.msra.mxu0 %v2364
    %2395 = vmatprep.subr.mxu0 0.0
    %2396 = vmatpush1.msra.mxu0 %v2365
    %2397 = vmatprep.subr.mxu0 0.0
    %2398 = vmatpush1.msra.mxu0 %v2366
    %2399 = vmatprep.subr.mxu0 0.0
    %2400 = vmatpush1.msra.mxu0 %v2367
    %2401 = vmatprep.subr.mxu0 0.0
    %2402 = vmatpush1.msra.mxu0 %v2368
    %2403 = vmatprep.subr.mxu0 0.0
    %2404 = vmatpush1.msra.mxu0 %v2369
    %2405 = vmatprep.subr.mxu0 0.0
    %2406 = vmatpush1.msra.mxu0 %v2370
    %2407 = vmatprep.subr.mxu0 0.0
    %2408 = vmatpush1.msra.mxu0 %v2371
    %2409 = vmatprep.subr.mxu0 0.0
    %2410 = vmatpush1.msra.mxu0 0.0
    %2411 = vmatprep.subr.mxu0 0.0
    %2412 = vmatpush1.msra.mxu0 0.0
    %2413 = vmatprep.subr.mxu0 0.0
    %2414 = vmatpush1.msra.mxu0 0.0
    %2415 = vmatprep.subr.mxu0 0.0
    %2416 = vmatpush1.msra.mxu0 0.0
    %2417 = vmatprep.subr.mxu0 0.0
    %2418 = vmatpush1.msra.mxu0 0.0
    %2419 = vmatprep.subr.mxu0 0.0
    %2420 = vmatpush1.msra.mxu0 0.0
    %2421 = vmatprep.subr.mxu0 0.0
    %2422 = vmatpush1.msra.mxu0 0.0
    %2423 = vmatprep.subr.mxu0 0.0
    %2424 = vmatpush1.msra.mxu0 0.0
    %2425 = vmatprep.subr.mxu0 0.0
    %2426 = vmatpush1.msra.mxu0 0.0
    %2427 = vmatprep.subr.mxu0 0.0
    %2428 = vmatpush1.msra.mxu0 0.0
    %2429 = vmatprep.subr.mxu0 0.0
    %2430 = vmatpush1.msra.mxu0 0.0
    %2431 = vmatprep.subr.mxu0 0.0
    %2432 = vmatpush1.msra.mxu0 0.0
    %2433 = vmatprep.subr.mxu0 0.0
    %2434 = vmatpush1.msra.mxu0 0.0
    %2435 = vmatprep.subr.mxu0 0.0
    %2436 = vmatpush1.msra.mxu0 0.0
    %2437 = vmatprep.subr.mxu0 0.0
    %2438 = vmatpush1.msra.mxu0 0.0
    %2439 = vmatprep.subr.mxu0 0.0
    %2440 = vmatpush1.msra.mxu0 0.0
    %2441 = vmatprep.mubr.f32.mxu0 0.0
    %2442 = vmatmul.mubr.f32.gmra.mrb[0].mxu0 %v2352
    %v2443 = vpop.f32.mrb[0].mxu0
    %v2444 = vadd.f32 %v2376, %v2443
    %v2445 = vpop.f32.mrb[0].mxu0
    %2446 = vmatprep.mubr.f32.mxu0 0.0
    %2447 = vmatmul.mubr.f32.gmra.mrb[0].mxu0 %v2353
    %v2448 = vpop.f32.mrb[0].mxu0
    %v2449 = vadd.f32 %v2376, %v2448
    %v2450 = vpop.f32.mrb[0].mxu0
    %2451 = vmatprep.mubr.f32.mxu0 0.0
    %2452 = vmatmul.mubr.f32.gmra.mrb[0].mxu0 %v2354
    %v2453 = vpop.f32.mrb[0].mxu0
    %v2454 = vadd.f32 %v2376, %v2453
    %v2455 = vpop.f32.mrb[0].mxu0
    %2456 = vmatprep.mubr.f32.mxu0 0.0
    %2457 = vmatmul.mubr.f32.gmra.mrb[0].mxu0 %v2355
    %v2458 = vpop.f32.mrb[0].mxu0
    %v2459 = vadd.f32 %v2376, %v2458
    %v2460 = vpop.f32.mrb[0].mxu0
    %2461 = vdwg.mxu0
    %v2462 = vmul.f32 %v2444, 0.5
    %v2463 = vmul.f32 %v2449, 0.5
    %v2464 = vmul.f32 %v2454, 0.5
    %v2465 = vmul.f32 %v2459, 0.5
    %v2466 = vadd.f32 %v2148, %v2462
    %v2467 = vadd.f32 %v2149, %v2463
    %v2468 = vadd.f32 %v2150, %v2464
    %v2469 = vadd.f32 %v2151, %v2465
    %v2470 = vsel %vm59, %v2466, 0.0
    %2471 = vadd.xlane.f32.xlu0 %v2470
    %v2472 = vpop.xlane.xlu0 %2471
    %v2473 = vsel %vm59, %v2467, 0.0
    %2474 = vadd.xlane.f32.xlu0 %v2473
    %v2475 = vpop.xlane.xlu0 %2474
    %v2476 = vsel %vm59, %v2468, 0.0
    %2477 = vadd.xlane.f32.xlu0 %v2476
    %v2478 = vpop.xlane.xlu0 %2477
    %v2479 = vsel %vm59, %v2469, 0.0
    %2480 = vadd.xlane.f32.xlu0 %v2479
    %v2481 = vpop.xlane.xlu0 %2480
    %v2482 = vmul.f32 %v2472, %v72
    %v2483 = vmul.f32 %v2475, %v72
    %v2484 = vmul.f32 %v2478, %v72
    %v2485 = vmul.f32 %v2481, %v72
    %v2486 = vsub.f32 %v2466, %v2482
    %v2487 = vsub.f32 %v2467, %v2483
    %v2488 = vsub.f32 %v2468, %v2484
    %v2489 = vsub.f32 %v2469, %v2485
    %v2490 = vmul.f32 %v2486, %v2486
    %v2491 = vmul.f32 %v2487, %v2487
    %v2492 = vmul.f32 %v2488, %v2488
    %v2493 = vmul.f32 %v2489, %v2489
    %v2494 = vsel %vm59, %v2490, 0.0
    %2495 = vadd.xlane.f32.xlu0 %v2494
    %v2496 = vpop.xlane.xlu0 %2495
    %v2497 = vsel %vm59, %v2491, 0.0
    %2498 = vadd.xlane.f32.xlu0 %v2497
    %v2499 = vpop.xlane.xlu0 %2498
    %v2500 = vsel %vm59, %v2492, 0.0
    %2501 = vadd.xlane.f32.xlu0 %v2500
    %v2502 = vpop.xlane.xlu0 %2501
    %v2503 = vsel %vm59, %v2493, 0.0
    %2504 = vadd.xlane.f32.xlu0 %v2503
    %v2505 = vpop.xlane.xlu0 %2504
    %v2506 = vmul.f32 %v2496, %v72
    %v2507 = vmul.f32 %v2499, %v72
    %v2508 = vmul.f32 %v2502, %v72
    %v2509 = vmul.f32 %v2505, %v72
    %v2510 = vadd.f32 %v2506, 1e-05
    %v2511 = vadd.f32 %v2507, 1e-05
    %v2512 = vadd.f32 %v2508, 1e-05
    %v2513 = vadd.f32 %v2509, 1e-05
    %v2514 = vrsqrt.pop %v2510
    %v2515 = vrsqrt.pop %v2511
    %v2516 = vrsqrt.pop %v2512
    %v2517 = vrsqrt.pop %v2513
    %v2518 = vmul.f32 %v2486, %v2514
    %v2519 = vmul.f32 %v2487, %v2515
    %v2520 = vmul.f32 %v2488, %v2516
    %v2521 = vmul.f32 %v2489, %v2517
    %v2522 = vld [vmem:[#allocation5 + $0x16] sm:$0x1]
    %v2523 = vlaneseq
    %v2524 = vshrl.u32 %v2523, 7
    %v2525 = vsub.s32 0, %v2524
    %v2526 = vrot.slane %v2522, %v2525
    %v2527 = vmul.f32 %v2518, %v2526
    %v2528 = vmul.f32 %v2519, %v2526
    %v2529 = vmul.f32 %v2520, %v2526
    %v2530 = vmul.f32 %v2521, %v2526
    %v2531 = vld [vmem:[#allocation5 + $0x17] sm:$0x1]
    %v2532 = vlaneseq
    %v2533 = vshrl.u32 %v2532, 7
    %v2534 = vsub.s32 0, %v2533
    %v2535 = vrot.slane %v2531, %v2534
    %v2536 = vadd.f32 %v2527, %v2535
    %v2537 = vadd.f32 %v2528, %v2535
    %v2538 = vadd.f32 %v2529, %v2535
    %v2539 = vadd.f32 %v2530, %v2535
    %2540 = vst.msk [vmem:[#allocation7] sm:$0xff] %vm59, %v2536
    %2541 = vst.msk [vmem:[#allocation7 + $0x8] sm:$0xff] %vm59, %v2537
    %2542 = vst.msk [vmem:[#allocation7 + $0x10] sm:$0xff] %vm59, %v2538
    %2543 = vst.msk [vmem:[#allocation7 + $0x18] sm:$0xff] %vm59, %v2539
    // Predicated region
    $region38: #{tpu_custom_call.1} parent=1 // pred_check
      _
    $region39: #{tpu_custom_call.1} parent=1 // pred_check_branch
      %2545 = sbr.rel (0) target = $region41
    $region40: #{tpu_custom_call.1} parent=1 // pred_region
      %s2547 = ssub.s32 512, 512
      %2548 = vsyncadd [#allocation4], %s2547
      %s2549 = sshll.u32 [#allocation7], 4
      %s2550 = int_to_ptr.vmem [resolvable:$true] %s2549
      %2555 = dma.vmem_to_hbm [thread:$0]  %s2550, 512, %s7, [#allocation4], 128, 128, 8
    $region41: #{tpu_custom_call.1} parent=1 // pred_fallthru
      _
    // Predicated region
    $region42: #{tpu_custom_call.1} parent=1 // pred_check
      _
    $region43: #{tpu_custom_call.1} parent=1 // pred_check_branch
      %2557 = sbr.rel (0) target = $region45
    $region44: #{tpu_custom_call.1} parent=1 // pred_region
      %2558 = dma.done [#allocation4], 512
    $region45: #{tpu_custom_call.1} parent=1 // pred_fallthru
      _
    %2559 = vsyncpa [#allocation3], 1
    %2560 = vsyncpa [#allocation6], 1
    %2561 = vsyncpa [#allocation4], 1

</llo_original>
